<compile_context>
chip_gen: v7x
topology: tpu7x:2x2x1
jax: 0.10.0
libtpu: 0.0.40
codegen_flags: <defaults>
</compile_context>

<pallas_src>
import functools

import jax
import jax.numpy as jnp
from jax import lax
from jax.experimental import pallas as pl
from jax.experimental.pallas import tpu as pltpu


# ----------------------------------------------------------------------------
# Fused whole-model Pallas kernel
# ----------------------------------------------------------------------------
def _model_kernel(x_ref, mask_ref,
                  e_w1_ref, e_b1_ref, e_w2_ref, e_b2_ref, e_ws_ref, e_bs_ref,
                  wqkv_ref, bqkv_ref, wo_ref, bo_ref,
                  fw1_ref, fb1_ref, fw2_ref, fb2_ref,
                  d_w1_ref, d_b1_ref, d_w2_ref, d_b2_ref,
                  o_ref, *, num_heads, num_layers, hidden_dim):
    f32 = jnp.float32
    x = x_ref[...]                       # [N, Din]
    add_mask = mask_ref[...]             # [N, N] additive mask (0 / -1e9)

    # ---- embed MLP: Linear -> ReLU -> Linear, plus linear skip projection ----
    # TODO(synk): exact gnngls MLP internals (depth / norm) reconstructed.
    h = jnp.dot(x, e_w1_ref[...], preferred_element_type=f32) + e_b1_ref[...]
    h = jnp.maximum(h, 0.0)
    h = jnp.dot(h, e_w2_ref[...], preferred_element_type=f32) + e_b2_ref[...]
    h = h + jnp.dot(x, e_ws_ref[...], preferred_element_type=f32) + e_bs_ref[...]

    D = hidden_dim
    Dh = D // num_heads
    scale = 1.0 / (Dh ** 0.5)

    # ---- message-passing layers (graph-masked MHA + FF), residual fused ----
    # TODO(synk): exact AttentionLayer internals (norms / inner residuals) reconstructed.
    for l in range(num_layers):
        # fused QKV projection: one [N, D] @ [D, 3D] MXU push
        qkv = jnp.dot(h, wqkv_ref[l], preferred_element_type=f32) + bqkv_ref[l]
        q = qkv[:, 0:D] * scale                 # fold 1/sqrt(Dh) into the small tensor
        k = qkv[:, D:2 * D]
        v = qkv[:, 2 * D:3 * D]

        # all heads in this single grid step; static lane slices, stays in VMEM
        head_outs = []
        for hd in range(num_heads):
            lo, hi = hd * Dh, (hd + 1) * Dh
            qh = q[:, lo:hi]                    # [N, Dh]
            kh = k[:, lo:hi]
            vh = v[:, lo:hi]
            # q @ k^T without an explicit transpose (contract last dims)
            s = lax.dot_general(qh, kh, (((1,), (1,)), ((), ())),
                                preferred_element_type=f32)        # [N, N]
            s = s + add_mask                    # graph neighborhood mask
            s = s - jnp.max(s, axis=-1, keepdims=True)
            p = jnp.exp(s)
            p = p * pl.reciprocal(jnp.sum(p, axis=-1, keepdims=True), approx=True)
            head_outs.append(jnp.dot(p, vh, preferred_element_type=f32))  # [N, Dh]
        a = jnp.concatenate(head_outs, axis=-1)  # [N, D] lane-dense

        a = jnp.dot(a, wo_ref[l], preferred_element_type=f32) + bo_ref[l]

        # feed-forward block (D -> 2D -> D), residual `+ h` fused into the last add
        f = jnp.dot(a, fw1_ref[l], preferred_element_type=f32) + fb1_ref[l]
        f = jnp.maximum(f, 0.0)
        h = jnp.dot(f, fw2_ref[l], preferred_element_type=f32) + fb2_ref[l] + h

    # ---- decision MLP: Linear -> ReLU -> Linear ----
    y = jnp.dot(h, d_w1_ref[...], preferred_element_type=f32) + d_b1_ref[...]
    y = jnp.maximum(y, 0.0)
    y = jnp.dot(y, d_w2_ref[...], preferred_element_type=f32) + d_b2_ref[...]
    o_ref[...] = y.astype(o_ref.dtype)


def edge_property_prediction_model1(params, add_mask, x, *, num_heads):
    """Fused forward pass. x: [N, Din], add_mask: [N, N] additive -> [N, Dout]."""
    N, _ = x.shape
    D = params["e_w1"].shape[1]
    Dout = params["d_w2"].shape[1]
    L = params["wqkv"].shape[0]

    args = (x, add_mask,
            params["e_w1"], params["e_b1"], params["e_w2"], params["e_b2"],
            params["e_ws"], params["e_bs"],
            params["wqkv"], params["bqkv"], params["wo"], params["bo"],
            params["fw1"], params["fb1"], params["fw2"], params["fb2"],
            params["d_w1"], params["d_b1"], params["d_w2"], params["d_b2"])

    def full_spec(shape):
        return pl.BlockSpec(shape, lambda i, _n=len(shape): (0,) * _n)

    return pl.pallas_call(
        functools.partial(_model_kernel, num_heads=num_heads,
                          num_layers=L, hidden_dim=D),
        out_shape=jax.ShapeDtypeStruct((N, Dout), jnp.float32),
        grid=(1,),
        in_specs=[full_spec(a.shape) for a in args],
        out_specs=full_spec((N, Dout)),
        compiler_params=pltpu.CompilerParams(
            dimension_semantics=("arbitrary",)),
    )(*args)


# ----------------------------------------------------------------------------
# Pure-JAX reference (same math) for a correctness cross-check
# ----------------------------------------------------------------------------
def reference_forward(params, add_mask, x, num_heads):
    D = params["e_w1"].shape[1]
    Dh = D // num_heads
    h = jnp.maximum(x @ params["e_w1"] + params["e_b1"], 0.0)
    h = h @ params["e_w2"] + params["e_b2"]
    h = h + x @ params["e_ws"] + params["e_bs"]
    for l in range(params["wqkv"].shape[0]):
        qkv = h @ params["wqkv"][l] + params["bqkv"][l]
        q = qkv[:, :D] / jnp.sqrt(float(Dh))
        k = qkv[:, D:2 * D]
        v = qkv[:, 2 * D:]
        outs = []
        for hd in range(num_heads):
            sl = slice(hd * Dh, (hd + 1) * Dh)
            s = q[:, sl] @ k[:, sl].T + add_mask
            outs.append(jax.nn.softmax(s, axis=-1) @ v[:, sl])
        a = jnp.concatenate(outs, -1) @ params["wo"][l] + params["bo"][l]
        f = jnp.maximum(a @ params["fw1"][l] + params["fb1"][l], 0.0)
        h = f @ params["fw2"][l] + params["fb2"][l] + h
    y = jnp.maximum(h @ params["d_w1"] + params["d_b1"], 0.0)
    return y @ params["d_w2"] + params["d_b2"]


# ----------------------------------------------------------------------------
# Deterministic parameter construction (QKV pre-fused, per-layer weights stacked)
# ----------------------------------------------------------------------------
def _init_linear(key, din, dout):
    kw, kb = jax.random.split(key)
    w = jax.random.normal(kw, (din, dout), jnp.float32) / jnp.sqrt(din)
    b = jax.random.normal(kb, (dout,), jnp.float32) * 0.01
    return w, b.reshape(1, dout)


def make_params(key, input_dim, hidden_dim, output_dim, num_gnn_layers, num_heads):
    keys = iter(jax.random.split(key, 8 + 8 * num_gnn_layers))
    p = {}
    # embed MLP (input -> hidden -> hidden, skip)
    p["e_w1"], p["e_b1"] = _init_linear(next(keys), input_dim, hidden_dim)
    p["e_w2"], p["e_b2"] = _init_linear(next(keys), hidden_dim, hidden_dim)
    p["e_ws"], p["e_bs"] = _init_linear(next(keys), input_dim, hidden_dim)
    # attention layers (QKV fused, stacked along a leading layer axis)
    ff_dim = hidden_dim * 2
    wqkv, bqkv, wo, bo, fw1, fb1, fw2, fb2 = ([] for _ in range(8))
    for _ in range(num_gnn_layers):
        wq, bq = _init_linear(next(keys), hidden_dim, hidden_dim)
        wk, bk = _init_linear(next(keys), hidden_dim, hidden_dim)
        wv, bv = _init_linear(next(keys), hidden_dim, hidden_dim)
        w_o, b_o = _init_linear(next(keys), hidden_dim, hidden_dim)
        w1, b1 = _init_linear(next(keys), hidden_dim, ff_dim)
        w2, b2 = _init_linear(next(keys), ff_dim, hidden_dim)
        wqkv.append(jnp.concatenate([wq, wk, wv], axis=1))
        bqkv.append(jnp.concatenate([bq, bk, bv], axis=1))
        wo.append(w_o); bo.append(b_o)
        fw1.append(w1); fb1.append(b1)
        fw2.append(w2); fb2.append(b2)
    p["wqkv"] = jnp.stack(wqkv); p["bqkv"] = jnp.stack(bqkv)
    p["wo"] = jnp.stack(wo);     p["bo"] = jnp.stack(bo)
    p["fw1"] = jnp.stack(fw1);   p["fb1"] = jnp.stack(fb1)
    p["fw2"] = jnp.stack(fw2);   p["fb2"] = jnp.stack(fb2)
    # decision MLP (hidden -> hidden -> output)
    p["d_w1"], p["d_b1"] = _init_linear(next(keys), hidden_dim, hidden_dim)
    p["d_w2"], p["d_b2"] = _init_linear(next(keys), hidden_dim, output_dim)
    return p


# ----------------------------------------------------------------------------
if __name__ == "__main__":
    # small, module-consistent shapes
    N = 16            # number of line-graph nodes (edges of the TSP graph)
    input_dim = 8     # edge feature dim
    hidden_dim = 32
    output_dim = 1
    num_gnn_layers = 2
    num_heads = 4     # head_dim = 8

    key = jax.random.PRNGKey(0)
    k_params, k_x = jax.random.split(key)

    params = make_params(k_params, input_dim, hidden_dim, output_dim,
                         num_gnn_layers, num_heads)

    # deterministic ring graph with self-loops -> additive attention mask
    # (self-loops guarantee every row has >= 1 valid entry, so the -1e9 fill is safe)
    idx = jnp.arange(N)
    adj = (jnp.zeros((N, N), jnp.float32)
           .at[idx, idx].set(1.0)
           .at[idx, (idx + 1) % N].set(1.0)
           .at[idx, (idx - 1) % N].set(1.0))
    add_mask = jnp.where(adj > 0.0, 0.0, -1e9).astype(jnp.float32)

    x = jax.random.normal(k_x, (N, input_dim), jnp.float32)

    fwd = jax.jit(functools.partial(edge_property_prediction_model1,
                                    num_heads=num_heads))
    out = jax.block_until_ready(fwd(params, add_mask, x))

    assert out.shape == (N, output_dim)
    assert bool(jnp.all(jnp.isfinite(out)))

    ref = reference_forward(params, add_mask, x, num_heads)
    assert bool(jnp.allclose(out, ref, atol=5e-2, rtol=5e-2)), \
        f"max abs diff {float(jnp.max(jnp.abs(out - ref)))}"

    print("KERNEL_OK")
</pallas_src>

<mosaic_0001>
module attributes {stable_mosaic.version = 11 : i64} {
  func.func @_model_kernel(%arg0: i32, %arg1: memref<16x8xf32, #tpu.memory_space<vmem>>, %arg2: memref<16x16xf32, #tpu.memory_space<vmem>>, %arg3: memref<8x32xf32, #tpu.memory_space<vmem>>, %arg4: memref<1x32xf32, #tpu.memory_space<vmem>>, %arg5: memref<32x32xf32, #tpu.memory_space<vmem>>, %arg6: memref<1x32xf32, #tpu.memory_space<vmem>>, %arg7: memref<8x32xf32, #tpu.memory_space<vmem>>, %arg8: memref<1x32xf32, #tpu.memory_space<vmem>>, %arg9: memref<2x32x96xf32, #tpu.memory_space<vmem>>, %arg10: memref<2x1x96xf32, #tpu.memory_space<vmem>>, %arg11: memref<2x32x32xf32, #tpu.memory_space<vmem>>, %arg12: memref<2x1x32xf32, #tpu.memory_space<vmem>>, %arg13: memref<2x32x64xf32, #tpu.memory_space<vmem>>, %arg14: memref<2x1x64xf32, #tpu.memory_space<vmem>>, %arg15: memref<2x64x32xf32, #tpu.memory_space<vmem>>, %arg16: memref<2x1x32xf32, #tpu.memory_space<vmem>>, %arg17: memref<32x32xf32, #tpu.memory_space<vmem>>, %arg18: memref<1x32xf32, #tpu.memory_space<vmem>>, %arg19: memref<32x1xf32, #tpu.memory_space<vmem>>, %arg20: memref<1x1xf32, #tpu.memory_space<vmem>>, %arg21: memref<16x1xf32, #tpu.memory_space<vmem>>) attributes {dimension_semantics = [#tpu.dimension_semantics<arbitrary>], iteration_bounds = array<i64: 1>, scalar_prefetch = 0 : i64, scratch_operands = 0 : i64, tpu.core_type = #tpu.core_type<tc>, window_params = [{pipeline_mode = #tpu.pipeline_mode<synchronous>, transform_indices = @transform_0, window_bounds = array<i64: 16, 8>}, {pipeline_mode = #tpu.pipeline_mode<synchronous>, transform_indices = @transform_1, window_bounds = array<i64: 16, 16>}, {pipeline_mode = #tpu.pipeline_mode<synchronous>, transform_indices = @transform_2, window_bounds = array<i64: 8, 32>}, {pipeline_mode = #tpu.pipeline_mode<synchronous>, transform_indices = @transform_3, window_bounds = array<i64: 1, 32>}, {pipeline_mode = #tpu.pipeline_mode<synchronous>, transform_indices = @transform_4, window_bounds = array<i64: 32, 32>}, {pipeline_mode = #tpu.pipeline_mode<synchronous>, transform_indices = @transform_5, window_bounds = array<i64: 1, 32>}, {pipeline_mode = #tpu.pipeline_mode<synchronous>, transform_indices = @transform_6, window_bounds = array<i64: 8, 32>}, {pipeline_mode = #tpu.pipeline_mode<synchronous>, transform_indices = @transform_7, window_bounds = array<i64: 1, 32>}, {pipeline_mode = #tpu.pipeline_mode<synchronous>, transform_indices = @transform_8, window_bounds = array<i64: 2, 32, 96>}, {pipeline_mode = #tpu.pipeline_mode<synchronous>, transform_indices = @transform_9, window_bounds = array<i64: 2, 1, 96>}, {pipeline_mode = #tpu.pipeline_mode<synchronous>, transform_indices = @transform_10, window_bounds = array<i64: 2, 32, 32>}, {pipeline_mode = #tpu.pipeline_mode<synchronous>, transform_indices = @transform_11, window_bounds = array<i64: 2, 1, 32>}, {pipeline_mode = #tpu.pipeline_mode<synchronous>, transform_indices = @transform_12, window_bounds = array<i64: 2, 32, 64>}, {pipeline_mode = #tpu.pipeline_mode<synchronous>, transform_indices = @transform_13, window_bounds = array<i64: 2, 1, 64>}, {pipeline_mode = #tpu.pipeline_mode<synchronous>, transform_indices = @transform_14, window_bounds = array<i64: 2, 64, 32>}, {pipeline_mode = #tpu.pipeline_mode<synchronous>, transform_indices = @transform_15, window_bounds = array<i64: 2, 1, 32>}, {pipeline_mode = #tpu.pipeline_mode<synchronous>, transform_indices = @transform_16, window_bounds = array<i64: 32, 32>}, {pipeline_mode = #tpu.pipeline_mode<synchronous>, transform_indices = @transform_17, window_bounds = array<i64: 1, 32>}, {pipeline_mode = #tpu.pipeline_mode<synchronous>, transform_indices = @transform_18, window_bounds = array<i64: 32, 1>}, {pipeline_mode = #tpu.pipeline_mode<synchronous>, transform_indices = @transform_19, window_bounds = array<i64: 1, 1>}, {pipeline_mode = #tpu.pipeline_mode<synchronous>, transform_indices = @transform_20, window_bounds = array<i64: 16, 1>}]} {
    %c0 = arith.constant 0 : index
    %c0_0 = arith.constant 0 : index
    %0 = vector.load %arg1[%c0, %c0_0] : memref<16x8xf32, #tpu.memory_space<vmem>>, vector<16x8xf32>
    %c0_1 = arith.constant 0 : index
    %c0_2 = arith.constant 0 : index
    %1 = vector.load %arg2[%c0_1, %c0_2] : memref<16x16xf32, #tpu.memory_space<vmem>>, vector<16x16xf32>
    %c0_3 = arith.constant 0 : index
    %c0_4 = arith.constant 0 : index
    %2 = vector.load %arg3[%c0_3, %c0_4] : memref<8x32xf32, #tpu.memory_space<vmem>>, vector<8x32xf32>
    %cst = arith.constant dense<0.000000e+00> : vector<16x32xf32>
    %3 = tpu.matmul %0, %2, %cst {dimension_numbers = #tpu.dot_dimension_numbers<[1], [0], [0], [1], [0, 0, 1, 1], [], []>} : vector<16x8xf32>, vector<8x32xf32>, vector<16x32xf32> -> vector<16x32xf32>
    %c0_5 = arith.constant 0 : index
    %c0_6 = arith.constant 0 : index
    %4 = vector.load %arg4[%c0_5, %c0_6] : memref<1x32xf32, #tpu.memory_space<vmem>>, vector<1x32xf32>
    %5 = vector.broadcast %4 : vector<1x32xf32> to vector<16x32xf32>
    %6 = arith.addf %3, %5 : vector<16x32xf32>
    %cst_7 = arith.constant 0.000000e+00 : f32
    %7 = vector.broadcast %cst_7 : f32 to vector<16x32xf32>
    %8 = arith.maximumf %6, %7 : vector<16x32xf32>
    %c0_8 = arith.constant 0 : index
    %c0_9 = arith.constant 0 : index
    %9 = vector.load %arg5[%c0_8, %c0_9] : memref<32x32xf32, #tpu.memory_space<vmem>>, vector<32x32xf32>
    %cst_10 = arith.constant dense<0.000000e+00> : vector<16x32xf32>
    %10 = tpu.matmul %8, %9, %cst_10 {dimension_numbers = #tpu.dot_dimension_numbers<[1], [0], [0], [1], [0, 0, 1, 1], [], []>} : vector<16x32xf32>, vector<32x32xf32>, vector<16x32xf32> -> vector<16x32xf32>
    %c0_11 = arith.constant 0 : index
    %c0_12 = arith.constant 0 : index
    %11 = vector.load %arg6[%c0_11, %c0_12] : memref<1x32xf32, #tpu.memory_space<vmem>>, vector<1x32xf32>
    %12 = vector.broadcast %11 : vector<1x32xf32> to vector<16x32xf32>
    %13 = arith.addf %10, %12 : vector<16x32xf32>
    %c0_13 = arith.constant 0 : index
    %c0_14 = arith.constant 0 : index
    %14 = vector.load %arg7[%c0_13, %c0_14] : memref<8x32xf32, #tpu.memory_space<vmem>>, vector<8x32xf32>
    %cst_15 = arith.constant dense<0.000000e+00> : vector<16x32xf32>
    %15 = tpu.matmul %0, %14, %cst_15 {dimension_numbers = #tpu.dot_dimension_numbers<[1], [0], [0], [1], [0, 0, 1, 1], [], []>} : vector<16x8xf32>, vector<8x32xf32>, vector<16x32xf32> -> vector<16x32xf32>
    %16 = arith.addf %13, %15 : vector<16x32xf32>
    %c0_16 = arith.constant 0 : index
    %c0_17 = arith.constant 0 : index
    %17 = vector.load %arg8[%c0_16, %c0_17] : memref<1x32xf32, #tpu.memory_space<vmem>>, vector<1x32xf32>
    %18 = vector.broadcast %17 : vector<1x32xf32> to vector<16x32xf32>
    %19 = arith.addf %16, %18 : vector<16x32xf32>
    %c0_18 = arith.constant 0 : index
    %c0_19 = arith.constant 0 : index
    %c0_20 = arith.constant 0 : index
    %20 = vector.load %arg9[%c0_18, %c0_19, %c0_20] : memref<2x32x96xf32, #tpu.memory_space<vmem>>, vector<1x32x96xf32>
    %21 = vector.shape_cast %20 : vector<1x32x96xf32> to vector<32x96xf32>
    %cst_21 = arith.constant dense<0.000000e+00> : vector<16x96xf32>
    %22 = tpu.matmul %19, %21, %cst_21 {dimension_numbers = #tpu.dot_dimension_numbers<[1], [0], [0], [1], [0, 0, 1, 1], [], []>} : vector<16x32xf32>, vector<32x96xf32>, vector<16x96xf32> -> vector<16x96xf32>
    %c0_22 = arith.constant 0 : index
    %c0_23 = arith.constant 0 : index
    %c0_24 = arith.constant 0 : index
    %23 = vector.load %arg10[%c0_22, %c0_23, %c0_24] : memref<2x1x96xf32, #tpu.memory_space<vmem>>, vector<1x1x96xf32>
    %24 = vector.shape_cast %23 : vector<1x1x96xf32> to vector<1x96xf32>
    %25 = vector.broadcast %24 : vector<1x96xf32> to vector<16x96xf32>
    %26 = arith.addf %22, %25 : vector<16x96xf32>
    %27 = vector.extract_strided_slice %26 {offsets = [0, 0], sizes = [16, 32], strides = [1, 1]} : vector<16x96xf32> to vector<16x32xf32>
    %cst_25 = arith.constant 0.353553385 : f32
    %28 = vector.broadcast %cst_25 : f32 to vector<16x32xf32>
    %29 = arith.mulf %27, %28 : vector<16x32xf32>
    %30 = vector.extract_strided_slice %26 {offsets = [0, 32], sizes = [16, 32], strides = [1, 1]} : vector<16x96xf32> to vector<16x32xf32>
    %31 = vector.extract_strided_slice %26 {offsets = [0, 64], sizes = [16, 32], strides = [1, 1]} : vector<16x96xf32> to vector<16x32xf32>
    %32 = vector.extract_strided_slice %29 {offsets = [0, 0], sizes = [16, 8], strides = [1, 1]} : vector<16x32xf32> to vector<16x8xf32>
    %33 = vector.extract_strided_slice %30 {offsets = [0, 0], sizes = [16, 8], strides = [1, 1]} : vector<16x32xf32> to vector<16x8xf32>
    %34 = vector.extract_strided_slice %31 {offsets = [0, 0], sizes = [16, 8], strides = [1, 1]} : vector<16x32xf32> to vector<16x8xf32>
    %cst_26 = arith.constant dense<0.000000e+00> : vector<16x16xf32>
    %35 = tpu.matmul %32, %33, %cst_26 {dimension_numbers = #tpu.dot_dimension_numbers<[1], [1], [0], [0], [0, 0, 1, 0], [], []>} : vector<16x8xf32>, vector<16x8xf32>, vector<16x16xf32> -> vector<16x16xf32>
    %36 = arith.addf %35, %1 : vector<16x16xf32>
    %cst_27 = arith.constant dense<0xFF800000> : vector<16xf32>
    %37 = vector.multi_reduction <maximumf>, %36, %cst_27 [1] : vector<16x16xf32> to vector<16xf32>
    %38 = vector.shape_cast %37 : vector<16xf32> to vector<16x1xf32>
    %39 = vector.broadcast %38 : vector<16x1xf32> to vector<16x16xf32>
    %40 = arith.subf %36, %39 : vector<16x16xf32>
    %41 = math.exp %40 : vector<16x16xf32>
    %cst_28 = arith.constant dense<0.000000e+00> : vector<16xf32>
    %42 = vector.multi_reduction <add>, %41, %cst_28 [1] : vector<16x16xf32> to vector<16xf32>
    %43 = vector.shape_cast %42 : vector<16xf32> to vector<16x1xf32>
    %44 = tpu.reciprocal %43 {approx = true} : vector<16x1xf32> -> vector<16x1xf32>
    %45 = vector.broadcast %44 : vector<16x1xf32> to vector<16x16xf32>
    %46 = arith.mulf %41, %45 : vector<16x16xf32>
    %cst_29 = arith.constant dense<0.000000e+00> : vector<16x8xf32>
    %47 = tpu.matmul %46, %34, %cst_29 {dimension_numbers = #tpu.dot_dimension_numbers<[1], [0], [0], [1], [0, 0, 1, 1], [], []>} : vector<16x16xf32>, vector<16x8xf32>, vector<16x8xf32> -> vector<16x8xf32>
    %48 = vector.extract_strided_slice %29 {offsets = [0, 8], sizes = [16, 8], strides = [1, 1]} : vector<16x32xf32> to vector<16x8xf32>
    %49 = vector.extract_strided_slice %30 {offsets = [0, 8], sizes = [16, 8], strides = [1, 1]} : vector<16x32xf32> to vector<16x8xf32>
    %50 = vector.extract_strided_slice %31 {offsets = [0, 8], sizes = [16, 8], strides = [1, 1]} : vector<16x32xf32> to vector<16x8xf32>
    %cst_30 = arith.constant dense<0.000000e+00> : vector<16x16xf32>
    %51 = tpu.matmul %48, %49, %cst_30 {dimension_numbers = #tpu.dot_dimension_numbers<[1], [1], [0], [0], [0, 0, 1, 0], [], []>} : vector<16x8xf32>, vector<16x8xf32>, vector<16x16xf32> -> vector<16x16xf32>
    %52 = arith.addf %51, %1 : vector<16x16xf32>
    %cst_31 = arith.constant dense<0xFF800000> : vector<16xf32>
    %53 = vector.multi_reduction <maximumf>, %52, %cst_31 [1] : vector<16x16xf32> to vector<16xf32>
    %54 = vector.shape_cast %53 : vector<16xf32> to vector<16x1xf32>
    %55 = vector.broadcast %54 : vector<16x1xf32> to vector<16x16xf32>
    %56 = arith.subf %52, %55 : vector<16x16xf32>
    %57 = math.exp %56 : vector<16x16xf32>
    %cst_32 = arith.constant dense<0.000000e+00> : vector<16xf32>
    %58 = vector.multi_reduction <add>, %57, %cst_32 [1] : vector<16x16xf32> to vector<16xf32>
    %59 = vector.shape_cast %58 : vector<16xf32> to vector<16x1xf32>
    %60 = tpu.reciprocal %59 {approx = true} : vector<16x1xf32> -> vector<16x1xf32>
    %61 = vector.broadcast %60 : vector<16x1xf32> to vector<16x16xf32>
    %62 = arith.mulf %57, %61 : vector<16x16xf32>
    %cst_33 = arith.constant dense<0.000000e+00> : vector<16x8xf32>
    %63 = tpu.matmul %62, %50, %cst_33 {dimension_numbers = #tpu.dot_dimension_numbers<[1], [0], [0], [1], [0, 0, 1, 1], [], []>} : vector<16x16xf32>, vector<16x8xf32>, vector<16x8xf32> -> vector<16x8xf32>
    %64 = vector.extract_strided_slice %29 {offsets = [0, 16], sizes = [16, 8], strides = [1, 1]} : vector<16x32xf32> to vector<16x8xf32>
    %65 = vector.extract_strided_slice %30 {offsets = [0, 16], sizes = [16, 8], strides = [1, 1]} : vector<16x32xf32> to vector<16x8xf32>
    %66 = vector.extract_strided_slice %31 {offsets = [0, 16], sizes = [16, 8], strides = [1, 1]} : vector<16x32xf32> to vector<16x8xf32>
    %cst_34 = arith.constant dense<0.000000e+00> : vector<16x16xf32>
    %67 = tpu.matmul %64, %65, %cst_34 {dimension_numbers = #tpu.dot_dimension_numbers<[1], [1], [0], [0], [0, 0, 1, 0], [], []>} : vector<16x8xf32>, vector<16x8xf32>, vector<16x16xf32> -> vector<16x16xf32>
    %68 = arith.addf %67, %1 : vector<16x16xf32>
    %cst_35 = arith.constant dense<0xFF800000> : vector<16xf32>
    %69 = vector.multi_reduction <maximumf>, %68, %cst_35 [1] : vector<16x16xf32> to vector<16xf32>
    %70 = vector.shape_cast %69 : vector<16xf32> to vector<16x1xf32>
    %71 = vector.broadcast %70 : vector<16x1xf32> to vector<16x16xf32>
    %72 = arith.subf %68, %71 : vector<16x16xf32>
    %73 = math.exp %72 : vector<16x16xf32>
    %cst_36 = arith.constant dense<0.000000e+00> : vector<16xf32>
    %74 = vector.multi_reduction <add>, %73, %cst_36 [1] : vector<16x16xf32> to vector<16xf32>
    %75 = vector.shape_cast %74 : vector<16xf32> to vector<16x1xf32>
    %76 = tpu.reciprocal %75 {approx = true} : vector<16x1xf32> -> vector<16x1xf32>
    %77 = vector.broadcast %76 : vector<16x1xf32> to vector<16x16xf32>
    %78 = arith.mulf %73, %77 : vector<16x16xf32>
    %cst_37 = arith.constant dense<0.000000e+00> : vector<16x8xf32>
    %79 = tpu.matmul %78, %66, %cst_37 {dimension_numbers = #tpu.dot_dimension_numbers<[1], [0], [0], [1], [0, 0, 1, 1], [], []>} : vector<16x16xf32>, vector<16x8xf32>, vector<16x8xf32> -> vector<16x8xf32>
    %80 = vector.extract_strided_slice %29 {offsets = [0, 24], sizes = [16, 8], strides = [1, 1]} : vector<16x32xf32> to vector<16x8xf32>
    %81 = vector.extract_strided_slice %30 {offsets = [0, 24], sizes = [16, 8], strides = [1, 1]} : vector<16x32xf32> to vector<16x8xf32>
    %82 = vector.extract_strided_slice %31 {offsets = [0, 24], sizes = [16, 8], strides = [1, 1]} : vector<16x32xf32> to vector<16x8xf32>
    %cst_38 = arith.constant dense<0.000000e+00> : vector<16x16xf32>
    %83 = tpu.matmul %80, %81, %cst_38 {dimension_numbers = #tpu.dot_dimension_numbers<[1], [1], [0], [0], [0, 0, 1, 0], [], []>} : vector<16x8xf32>, vector<16x8xf32>, vector<16x16xf32> -> vector<16x16xf32>
    %84 = arith.addf %83, %1 : vector<16x16xf32>
    %cst_39 = arith.constant dense<0xFF800000> : vector<16xf32>
    %85 = vector.multi_reduction <maximumf>, %84, %cst_39 [1] : vector<16x16xf32> to vector<16xf32>
    %86 = vector.shape_cast %85 : vector<16xf32> to vector<16x1xf32>
    %87 = vector.broadcast %86 : vector<16x1xf32> to vector<16x16xf32>
    %88 = arith.subf %84, %87 : vector<16x16xf32>
    %89 = math.exp %88 : vector<16x16xf32>
    %cst_40 = arith.constant dense<0.000000e+00> : vector<16xf32>
    %90 = vector.multi_reduction <add>, %89, %cst_40 [1] : vector<16x16xf32> to vector<16xf32>
    %91 = vector.shape_cast %90 : vector<16xf32> to vector<16x1xf32>
    %92 = tpu.reciprocal %91 {approx = true} : vector<16x1xf32> -> vector<16x1xf32>
    %93 = vector.broadcast %92 : vector<16x1xf32> to vector<16x16xf32>
    %94 = arith.mulf %89, %93 : vector<16x16xf32>
    %cst_41 = arith.constant dense<0.000000e+00> : vector<16x8xf32>
    %95 = tpu.matmul %94, %82, %cst_41 {dimension_numbers = #tpu.dot_dimension_numbers<[1], [0], [0], [1], [0, 0, 1, 1], [], []>} : vector<16x16xf32>, vector<16x8xf32>, vector<16x8xf32> -> vector<16x8xf32>
    %96 = tpu.concatenate %47, %63, %79, %95 in 1 : vector<16x8xf32>, vector<16x8xf32>, vector<16x8xf32>, vector<16x8xf32> -> vector<16x32xf32>
    %c0_42 = arith.constant 0 : index
    %c0_43 = arith.constant 0 : index
    %c0_44 = arith.constant 0 : index
    %97 = vector.load %arg11[%c0_42, %c0_43, %c0_44] : memref<2x32x32xf32, #tpu.memory_space<vmem>>, vector<1x32x32xf32>
    %98 = vector.shape_cast %97 : vector<1x32x32xf32> to vector<32x32xf32>
    %cst_45 = arith.constant dense<0.000000e+00> : vector<16x32xf32>
    %99 = tpu.matmul %96, %98, %cst_45 {dimension_numbers = #tpu.dot_dimension_numbers<[1], [0], [0], [1], [0, 0, 1, 1], [], []>} : vector<16x32xf32>, vector<32x32xf32>, vector<16x32xf32> -> vector<16x32xf32>
    %c0_46 = arith.constant 0 : index
    %c0_47 = arith.constant 0 : index
    %c0_48 = arith.constant 0 : index
    %100 = vector.load %arg12[%c0_46, %c0_47, %c0_48] : memref<2x1x32xf32, #tpu.memory_space<vmem>>, vector<1x1x32xf32>
    %101 = vector.shape_cast %100 : vector<1x1x32xf32> to vector<1x32xf32>
    %102 = vector.broadcast %101 : vector<1x32xf32> to vector<16x32xf32>
    %103 = arith.addf %99, %102 : vector<16x32xf32>
    %c0_49 = arith.constant 0 : index
    %c0_50 = arith.constant 0 : index
    %c0_51 = arith.constant 0 : index
    %104 = vector.load %arg13[%c0_49, %c0_50, %c0_51] : memref<2x32x64xf32, #tpu.memory_space<vmem>>, vector<1x32x64xf32>
    %105 = vector.shape_cast %104 : vector<1x32x64xf32> to vector<32x64xf32>
    %cst_52 = arith.constant dense<0.000000e+00> : vector<16x64xf32>
    %106 = tpu.matmul %103, %105, %cst_52 {dimension_numbers = #tpu.dot_dimension_numbers<[1], [0], [0], [1], [0, 0, 1, 1], [], []>} : vector<16x32xf32>, vector<32x64xf32>, vector<16x64xf32> -> vector<16x64xf32>
    %c0_53 = arith.constant 0 : index
    %c0_54 = arith.constant 0 : index
    %c0_55 = arith.constant 0 : index
    %107 = vector.load %arg14[%c0_53, %c0_54, %c0_55] : memref<2x1x64xf32, #tpu.memory_space<vmem>>, vector<1x1x64xf32>
    %108 = vector.shape_cast %107 : vector<1x1x64xf32> to vector<1x64xf32>
    %109 = vector.broadcast %108 : vector<1x64xf32> to vector<16x64xf32>
    %110 = arith.addf %106, %109 : vector<16x64xf32>
    %cst_56 = arith.constant 0.000000e+00 : f32
    %111 = vector.broadcast %cst_56 : f32 to vector<16x64xf32>
    %112 = arith.maximumf %110, %111 : vector<16x64xf32>
    %c0_57 = arith.constant 0 : index
    %c0_58 = arith.constant 0 : index
    %c0_59 = arith.constant 0 : index
    %113 = vector.load %arg15[%c0_57, %c0_58, %c0_59] : memref<2x64x32xf32, #tpu.memory_space<vmem>>, vector<1x64x32xf32>
    %114 = vector.shape_cast %113 : vector<1x64x32xf32> to vector<64x32xf32>
    %cst_60 = arith.constant dense<0.000000e+00> : vector<16x32xf32>
    %115 = tpu.matmul %112, %114, %cst_60 {dimension_numbers = #tpu.dot_dimension_numbers<[1], [0], [0], [1], [0, 0, 1, 1], [], []>} : vector<16x64xf32>, vector<64x32xf32>, vector<16x32xf32> -> vector<16x32xf32>
    %c0_61 = arith.constant 0 : index
    %c0_62 = arith.constant 0 : index
    %c0_63 = arith.constant 0 : index
    %116 = vector.load %arg16[%c0_61, %c0_62, %c0_63] : memref<2x1x32xf32, #tpu.memory_space<vmem>>, vector<1x1x32xf32>
    %117 = vector.shape_cast %116 : vector<1x1x32xf32> to vector<1x32xf32>
    %118 = vector.broadcast %117 : vector<1x32xf32> to vector<16x32xf32>
    %119 = arith.addf %115, %118 : vector<16x32xf32>
    %120 = arith.addf %119, %19 : vector<16x32xf32>
    %c1 = arith.constant 1 : index
    %c0_64 = arith.constant 0 : index
    %c0_65 = arith.constant 0 : index
    %121 = vector.load %arg9[%c1, %c0_64, %c0_65] : memref<2x32x96xf32, #tpu.memory_space<vmem>>, vector<1x32x96xf32>
    %122 = vector.shape_cast %121 : vector<1x32x96xf32> to vector<32x96xf32>
    %cst_66 = arith.constant dense<0.000000e+00> : vector<16x96xf32>
    %123 = tpu.matmul %120, %122, %cst_66 {dimension_numbers = #tpu.dot_dimension_numbers<[1], [0], [0], [1], [0, 0, 1, 1], [], []>} : vector<16x32xf32>, vector<32x96xf32>, vector<16x96xf32> -> vector<16x96xf32>
    %c1_67 = arith.constant 1 : index
    %c0_68 = arith.constant 0 : index
    %c0_69 = arith.constant 0 : index
    %124 = vector.load %arg10[%c1_67, %c0_68, %c0_69] : memref<2x1x96xf32, #tpu.memory_space<vmem>>, vector<1x1x96xf32>
    %125 = vector.shape_cast %124 : vector<1x1x96xf32> to vector<1x96xf32>
    %126 = vector.broadcast %125 : vector<1x96xf32> to vector<16x96xf32>
    %127 = arith.addf %123, %126 : vector<16x96xf32>
    %128 = vector.extract_strided_slice %127 {offsets = [0, 0], sizes = [16, 32], strides = [1, 1]} : vector<16x96xf32> to vector<16x32xf32>
    %cst_70 = arith.constant 0.353553385 : f32
    %129 = vector.broadcast %cst_70 : f32 to vector<16x32xf32>
    %130 = arith.mulf %128, %129 : vector<16x32xf32>
    %131 = vector.extract_strided_slice %127 {offsets = [0, 32], sizes = [16, 32], strides = [1, 1]} : vector<16x96xf32> to vector<16x32xf32>
    %132 = vector.extract_strided_slice %127 {offsets = [0, 64], sizes = [16, 32], strides = [1, 1]} : vector<16x96xf32> to vector<16x32xf32>
    %133 = vector.extract_strided_slice %130 {offsets = [0, 0], sizes = [16, 8], strides = [1, 1]} : vector<16x32xf32> to vector<16x8xf32>
    %134 = vector.extract_strided_slice %131 {offsets = [0, 0], sizes = [16, 8], strides = [1, 1]} : vector<16x32xf32> to vector<16x8xf32>
    %135 = vector.extract_strided_slice %132 {offsets = [0, 0], sizes = [16, 8], strides = [1, 1]} : vector<16x32xf32> to vector<16x8xf32>
    %cst_71 = arith.constant dense<0.000000e+00> : vector<16x16xf32>
    %136 = tpu.matmul %133, %134, %cst_71 {dimension_numbers = #tpu.dot_dimension_numbers<[1], [1], [0], [0], [0, 0, 1, 0], [], []>} : vector<16x8xf32>, vector<16x8xf32>, vector<16x16xf32> -> vector<16x16xf32>
    %137 = arith.addf %136, %1 : vector<16x16xf32>
    %cst_72 = arith.constant dense<0xFF800000> : vector<16xf32>
    %138 = vector.multi_reduction <maximumf>, %137, %cst_72 [1] : vector<16x16xf32> to vector<16xf32>
    %139 = vector.shape_cast %138 : vector<16xf32> to vector<16x1xf32>
    %140 = vector.broadcast %139 : vector<16x1xf32> to vector<16x16xf32>
    %141 = arith.subf %137, %140 : vector<16x16xf32>
    %142 = math.exp %141 : vector<16x16xf32>
    %cst_73 = arith.constant dense<0.000000e+00> : vector<16xf32>
    %143 = vector.multi_reduction <add>, %142, %cst_73 [1] : vector<16x16xf32> to vector<16xf32>
    %144 = vector.shape_cast %143 : vector<16xf32> to vector<16x1xf32>
    %145 = tpu.reciprocal %144 {approx = true} : vector<16x1xf32> -> vector<16x1xf32>
    %146 = vector.broadcast %145 : vector<16x1xf32> to vector<16x16xf32>
    %147 = arith.mulf %142, %146 : vector<16x16xf32>
    %cst_74 = arith.constant dense<0.000000e+00> : vector<16x8xf32>
    %148 = tpu.matmul %147, %135, %cst_74 {dimension_numbers = #tpu.dot_dimension_numbers<[1], [0], [0], [1], [0, 0, 1, 1], [], []>} : vector<16x16xf32>, vector<16x8xf32>, vector<16x8xf32> -> vector<16x8xf32>
    %149 = vector.extract_strided_slice %130 {offsets = [0, 8], sizes = [16, 8], strides = [1, 1]} : vector<16x32xf32> to vector<16x8xf32>
    %150 = vector.extract_strided_slice %131 {offsets = [0, 8], sizes = [16, 8], strides = [1, 1]} : vector<16x32xf32> to vector<16x8xf32>
    %151 = vector.extract_strided_slice %132 {offsets = [0, 8], sizes = [16, 8], strides = [1, 1]} : vector<16x32xf32> to vector<16x8xf32>
    %cst_75 = arith.constant dense<0.000000e+00> : vector<16x16xf32>
    %152 = tpu.matmul %149, %150, %cst_75 {dimension_numbers = #tpu.dot_dimension_numbers<[1], [1], [0], [0], [0, 0, 1, 0], [], []>} : vector<16x8xf32>, vector<16x8xf32>, vector<16x16xf32> -> vector<16x16xf32>
    %153 = arith.addf %152, %1 : vector<16x16xf32>
    %cst_76 = arith.constant dense<0xFF800000> : vector<16xf32>
    %154 = vector.multi_reduction <maximumf>, %153, %cst_76 [1] : vector<16x16xf32> to vector<16xf32>
    %155 = vector.shape_cast %154 : vector<16xf32> to vector<16x1xf32>
    %156 = vector.broadcast %155 : vector<16x1xf32> to vector<16x16xf32>
    %157 = arith.subf %153, %156 : vector<16x16xf32>
    %158 = math.exp %157 : vector<16x16xf32>
    %cst_77 = arith.constant dense<0.000000e+00> : vector<16xf32>
    %159 = vector.multi_reduction <add>, %158, %cst_77 [1] : vector<16x16xf32> to vector<16xf32>
    %160 = vector.shape_cast %159 : vector<16xf32> to vector<16x1xf32>
    %161 = tpu.reciprocal %160 {approx = true} : vector<16x1xf32> -> vector<16x1xf32>
    %162 = vector.broadcast %161 : vector<16x1xf32> to vector<16x16xf32>
    %163 = arith.mulf %158, %162 : vector<16x16xf32>
    %cst_78 = arith.constant dense<0.000000e+00> : vector<16x8xf32>
    %164 = tpu.matmul %163, %151, %cst_78 {dimension_numbers = #tpu.dot_dimension_numbers<[1], [0], [0], [1], [0, 0, 1, 1], [], []>} : vector<16x16xf32>, vector<16x8xf32>, vector<16x8xf32> -> vector<16x8xf32>
    %165 = vector.extract_strided_slice %130 {offsets = [0, 16], sizes = [16, 8], strides = [1, 1]} : vector<16x32xf32> to vector<16x8xf32>
    %166 = vector.extract_strided_slice %131 {offsets = [0, 16], sizes = [16, 8], strides = [1, 1]} : vector<16x32xf32> to vector<16x8xf32>
    %167 = vector.extract_strided_slice %132 {offsets = [0, 16], sizes = [16, 8], strides = [1, 1]} : vector<16x32xf32> to vector<16x8xf32>
    %cst_79 = arith.constant dense<0.000000e+00> : vector<16x16xf32>
    %168 = tpu.matmul %165, %166, %cst_79 {dimension_numbers = #tpu.dot_dimension_numbers<[1], [1], [0], [0], [0, 0, 1, 0], [], []>} : vector<16x8xf32>, vector<16x8xf32>, vector<16x16xf32> -> vector<16x16xf32>
    %169 = arith.addf %168, %1 : vector<16x16xf32>
    %cst_80 = arith.constant dense<0xFF800000> : vector<16xf32>
    %170 = vector.multi_reduction <maximumf>, %169, %cst_80 [1] : vector<16x16xf32> to vector<16xf32>
    %171 = vector.shape_cast %170 : vector<16xf32> to vector<16x1xf32>
    %172 = vector.broadcast %171 : vector<16x1xf32> to vector<16x16xf32>
    %173 = arith.subf %169, %172 : vector<16x16xf32>
    %174 = math.exp %173 : vector<16x16xf32>
    %cst_81 = arith.constant dense<0.000000e+00> : vector<16xf32>
    %175 = vector.multi_reduction <add>, %174, %cst_81 [1] : vector<16x16xf32> to vector<16xf32>
    %176 = vector.shape_cast %175 : vector<16xf32> to vector<16x1xf32>
    %177 = tpu.reciprocal %176 {approx = true} : vector<16x1xf32> -> vector<16x1xf32>
    %178 = vector.broadcast %177 : vector<16x1xf32> to vector<16x16xf32>
    %179 = arith.mulf %174, %178 : vector<16x16xf32>
    %cst_82 = arith.constant dense<0.000000e+00> : vector<16x8xf32>
    %180 = tpu.matmul %179, %167, %cst_82 {dimension_numbers = #tpu.dot_dimension_numbers<[1], [0], [0], [1], [0, 0, 1, 1], [], []>} : vector<16x16xf32>, vector<16x8xf32>, vector<16x8xf32> -> vector<16x8xf32>
    %181 = vector.extract_strided_slice %130 {offsets = [0, 24], sizes = [16, 8], strides = [1, 1]} : vector<16x32xf32> to vector<16x8xf32>
    %182 = vector.extract_strided_slice %131 {offsets = [0, 24], sizes = [16, 8], strides = [1, 1]} : vector<16x32xf32> to vector<16x8xf32>
    %183 = vector.extract_strided_slice %132 {offsets = [0, 24], sizes = [16, 8], strides = [1, 1]} : vector<16x32xf32> to vector<16x8xf32>
    %cst_83 = arith.constant dense<0.000000e+00> : vector<16x16xf32>
    %184 = tpu.matmul %181, %182, %cst_83 {dimension_numbers = #tpu.dot_dimension_numbers<[1], [1], [0], [0], [0, 0, 1, 0], [], []>} : vector<16x8xf32>, vector<16x8xf32>, vector<16x16xf32> -> vector<16x16xf32>
    %185 = arith.addf %184, %1 : vector<16x16xf32>
    %cst_84 = arith.constant dense<0xFF800000> : vector<16xf32>
    %186 = vector.multi_reduction <maximumf>, %185, %cst_84 [1] : vector<16x16xf32> to vector<16xf32>
    %187 = vector.shape_cast %186 : vector<16xf32> to vector<16x1xf32>
    %188 = vector.broadcast %187 : vector<16x1xf32> to vector<16x16xf32>
    %189 = arith.subf %185, %188 : vector<16x16xf32>
    %190 = math.exp %189 : vector<16x16xf32>
    %cst_85 = arith.constant dense<0.000000e+00> : vector<16xf32>
    %191 = vector.multi_reduction <add>, %190, %cst_85 [1] : vector<16x16xf32> to vector<16xf32>
    %192 = vector.shape_cast %191 : vector<16xf32> to vector<16x1xf32>
    %193 = tpu.reciprocal %192 {approx = true} : vector<16x1xf32> -> vector<16x1xf32>
    %194 = vector.broadcast %193 : vector<16x1xf32> to vector<16x16xf32>
    %195 = arith.mulf %190, %194 : vector<16x16xf32>
    %cst_86 = arith.constant dense<0.000000e+00> : vector<16x8xf32>
    %196 = tpu.matmul %195, %183, %cst_86 {dimension_numbers = #tpu.dot_dimension_numbers<[1], [0], [0], [1], [0, 0, 1, 1], [], []>} : vector<16x16xf32>, vector<16x8xf32>, vector<16x8xf32> -> vector<16x8xf32>
    %197 = tpu.concatenate %148, %164, %180, %196 in 1 : vector<16x8xf32>, vector<16x8xf32>, vector<16x8xf32>, vector<16x8xf32> -> vector<16x32xf32>
    %c1_87 = arith.constant 1 : index
    %c0_88 = arith.constant 0 : index
    %c0_89 = arith.constant 0 : index
    %198 = vector.load %arg11[%c1_87, %c0_88, %c0_89] : memref<2x32x32xf32, #tpu.memory_space<vmem>>, vector<1x32x32xf32>
    %199 = vector.shape_cast %198 : vector<1x32x32xf32> to vector<32x32xf32>
    %cst_90 = arith.constant dense<0.000000e+00> : vector<16x32xf32>
    %200 = tpu.matmul %197, %199, %cst_90 {dimension_numbers = #tpu.dot_dimension_numbers<[1], [0], [0], [1], [0, 0, 1, 1], [], []>} : vector<16x32xf32>, vector<32x32xf32>, vector<16x32xf32> -> vector<16x32xf32>
    %c1_91 = arith.constant 1 : index
    %c0_92 = arith.constant 0 : index
    %c0_93 = arith.constant 0 : index
    %201 = vector.load %arg12[%c1_91, %c0_92, %c0_93] : memref<2x1x32xf32, #tpu.memory_space<vmem>>, vector<1x1x32xf32>
    %202 = vector.shape_cast %201 : vector<1x1x32xf32> to vector<1x32xf32>
    %203 = vector.broadcast %202 : vector<1x32xf32> to vector<16x32xf32>
    %204 = arith.addf %200, %203 : vector<16x32xf32>
    %c1_94 = arith.constant 1 : index
    %c0_95 = arith.constant 0 : index
    %c0_96 = arith.constant 0 : index
    %205 = vector.load %arg13[%c1_94, %c0_95, %c0_96] : memref<2x32x64xf32, #tpu.memory_space<vmem>>, vector<1x32x64xf32>
    %206 = vector.shape_cast %205 : vector<1x32x64xf32> to vector<32x64xf32>
    %cst_97 = arith.constant dense<0.000000e+00> : vector<16x64xf32>
    %207 = tpu.matmul %204, %206, %cst_97 {dimension_numbers = #tpu.dot_dimension_numbers<[1], [0], [0], [1], [0, 0, 1, 1], [], []>} : vector<16x32xf32>, vector<32x64xf32>, vector<16x64xf32> -> vector<16x64xf32>
    %c1_98 = arith.constant 1 : index
    %c0_99 = arith.constant 0 : index
    %c0_100 = arith.constant 0 : index
    %208 = vector.load %arg14[%c1_98, %c0_99, %c0_100] : memref<2x1x64xf32, #tpu.memory_space<vmem>>, vector<1x1x64xf32>
    %209 = vector.shape_cast %208 : vector<1x1x64xf32> to vector<1x64xf32>
    %210 = vector.broadcast %209 : vector<1x64xf32> to vector<16x64xf32>
    %211 = arith.addf %207, %210 : vector<16x64xf32>
    %cst_101 = arith.constant 0.000000e+00 : f32
    %212 = vector.broadcast %cst_101 : f32 to vector<16x64xf32>
    %213 = arith.maximumf %211, %212 : vector<16x64xf32>
    %c1_102 = arith.constant 1 : index
    %c0_103 = arith.constant 0 : index
    %c0_104 = arith.constant 0 : index
    %214 = vector.load %arg15[%c1_102, %c0_103, %c0_104] : memref<2x64x32xf32, #tpu.memory_space<vmem>>, vector<1x64x32xf32>
    %215 = vector.shape_cast %214 : vector<1x64x32xf32> to vector<64x32xf32>
    %cst_105 = arith.constant dense<0.000000e+00> : vector<16x32xf32>
    %216 = tpu.matmul %213, %215, %cst_105 {dimension_numbers = #tpu.dot_dimension_numbers<[1], [0], [0], [1], [0, 0, 1, 1], [], []>} : vector<16x64xf32>, vector<64x32xf32>, vector<16x32xf32> -> vector<16x32xf32>
    %c1_106 = arith.constant 1 : index
    %c0_107 = arith.constant 0 : index
    %c0_108 = arith.constant 0 : index
    %217 = vector.load %arg16[%c1_106, %c0_107, %c0_108] : memref<2x1x32xf32, #tpu.memory_space<vmem>>, vector<1x1x32xf32>
    %218 = vector.shape_cast %217 : vector<1x1x32xf32> to vector<1x32xf32>
    %219 = vector.broadcast %218 : vector<1x32xf32> to vector<16x32xf32>
    %220 = arith.addf %216, %219 : vector<16x32xf32>
    %221 = arith.addf %220, %120 : vector<16x32xf32>
    %c0_109 = arith.constant 0 : index
    %c0_110 = arith.constant 0 : index
    %222 = vector.load %arg17[%c0_109, %c0_110] : memref<32x32xf32, #tpu.memory_space<vmem>>, vector<32x32xf32>
    %cst_111 = arith.constant dense<0.000000e+00> : vector<16x32xf32>
    %223 = tpu.matmul %221, %222, %cst_111 {dimension_numbers = #tpu.dot_dimension_numbers<[1], [0], [0], [1], [0, 0, 1, 1], [], []>} : vector<16x32xf32>, vector<32x32xf32>, vector<16x32xf32> -> vector<16x32xf32>
    %c0_112 = arith.constant 0 : index
    %c0_113 = arith.constant 0 : index
    %224 = vector.load %arg18[%c0_112, %c0_113] : memref<1x32xf32, #tpu.memory_space<vmem>>, vector<1x32xf32>
    %225 = vector.broadcast %224 : vector<1x32xf32> to vector<16x32xf32>
    %226 = arith.addf %223, %225 : vector<16x32xf32>
    %cst_114 = arith.constant 0.000000e+00 : f32
    %227 = vector.broadcast %cst_114 : f32 to vector<16x32xf32>
    %228 = arith.maximumf %226, %227 : vector<16x32xf32>
    %c0_115 = arith.constant 0 : index
    %c0_116 = arith.constant 0 : index
    %229 = vector.load %arg19[%c0_115, %c0_116] : memref<32x1xf32, #tpu.memory_space<vmem>>, vector<32x1xf32>
    %cst_117 = arith.constant dense<0.000000e+00> : vector<16x1xf32>
    %230 = tpu.matmul %228, %229, %cst_117 {dimension_numbers = #tpu.dot_dimension_numbers<[1], [0], [0], [1], [0, 0, 1, 1], [], []>} : vector<16x32xf32>, vector<32x1xf32>, vector<16x1xf32> -> vector<16x1xf32>
    %c0_118 = arith.constant 0 : index
    %c0_119 = arith.constant 0 : index
    %231 = vector.load %arg20[%c0_118, %c0_119] : memref<1x1xf32, #tpu.memory_space<vmem>>, vector<1x1xf32>
    %232 = vector.broadcast %231 : vector<1x1xf32> to vector<16x1xf32>
    %233 = arith.addf %230, %232 : vector<16x1xf32>
    %c0_120 = arith.constant 0 : index
    %c0_121 = arith.constant 0 : index
    %234 = vector.load %arg21[%c0_120, %c0_121] : memref<16x1xf32, #tpu.memory_space<vmem>>, vector<16x1xf32>
    tpu.vector_store %arg21[%c0_120, %c0_121], %233 {strides = array<i32>} : memref<16x1xf32, #tpu.memory_space<vmem>>, vector<16x1xf32>,
    return
  }
  func.func @transform_0(%arg0: i32) -> (i32, i32) {
    %c0_i32 = arith.constant 0 : i32
    %c0_i32_0 = arith.constant 0 : i32
    %c0_i32_1 = arith.constant 0 : i32
    return %c0_i32, %c0_i32_0 : i32, i32
  }
  func.func @transform_1(%arg0: i32) -> (i32, i32) {
    %c0_i32 = arith.constant 0 : i32
    %c0_i32_0 = arith.constant 0 : i32
    %c0_i32_1 = arith.constant 0 : i32
    return %c0_i32, %c0_i32_0 : i32, i32
  }
  func.func @transform_2(%arg0: i32) -> (i32, i32) {
    %c0_i32 = arith.constant 0 : i32
    %c0_i32_0 = arith.constant 0 : i32
    %c0_i32_1 = arith.constant 0 : i32
    return %c0_i32, %c0_i32_0 : i32, i32
  }
  func.func @transform_3(%arg0: i32) -> (i32, i32) {
    %c0_i32 = arith.constant 0 : i32
    %c0_i32_0 = arith.constant 0 : i32
    %c0_i32_1 = arith.constant 0 : i32
    return %c0_i32, %c0_i32_0 : i32, i32
  }
  func.func @transform_4(%arg0: i32) -> (i32, i32) {
    %c0_i32 = arith.constant 0 : i32
    %c0_i32_0 = arith.constant 0 : i32
    %c0_i32_1 = arith.constant 0 : i32
    return %c0_i32, %c0_i32_0 : i32, i32
  }
  func.func @transform_5(%arg0: i32) -> (i32, i32) {
    %c0_i32 = arith.constant 0 : i32
    %c0_i32_0 = arith.constant 0 : i32
    %c0_i32_1 = arith.constant 0 : i32
    return %c0_i32, %c0_i32_0 : i32, i32
  }
  func.func @transform_6(%arg0: i32) -> (i32, i32) {
    %c0_i32 = arith.constant 0 : i32
    %c0_i32_0 = arith.constant 0 : i32
    %c0_i32_1 = arith.constant 0 : i32
    return %c0_i32, %c0_i32_0 : i32, i32
  }
  func.func @transform_7(%arg0: i32) -> (i32, i32) {
    %c0_i32 = arith.constant 0 : i32
    %c0_i32_0 = arith.constant 0 : i32
    %c0_i32_1 = arith.constant 0 : i32
    return %c0_i32, %c0_i32_0 : i32, i32
  }
  func.func @transform_8(%arg0: i32) -> (i32, i32, i32) {
    %c0_i32 = arith.constant 0 : i32
    %c0_i32_0 = arith.constant 0 : i32
    %c0_i32_1 = arith.constant 0 : i32
    %c0_i32_2 = arith.constant 0 : i32
    return %c0_i32, %c0_i32_0, %c0_i32_1 : i32, i32, i32
  }
  func.func @transform_9(%arg0: i32) -> (i32, i32, i32) {
    %c0_i32 = arith.constant 0 : i32
    %c0_i32_0 = arith.constant 0 : i32
    %c0_i32_1 = arith.constant 0 : i32
    %c0_i32_2 = arith.constant 0 : i32
    return %c0_i32, %c0_i32_0, %c0_i32_1 : i32, i32, i32
  }
  func.func @transform_10(%arg0: i32) -> (i32, i32, i32) {
    %c0_i32 = arith.constant 0 : i32
    %c0_i32_0 = arith.constant 0 : i32
    %c0_i32_1 = arith.constant 0 : i32
    %c0_i32_2 = arith.constant 0 : i32
    return %c0_i32, %c0_i32_0, %c0_i32_1 : i32, i32, i32
  }
  func.func @transform_11(%arg0: i32) -> (i32, i32, i32) {
    %c0_i32 = arith.constant 0 : i32
    %c0_i32_0 = arith.constant 0 : i32
    %c0_i32_1 = arith.constant 0 : i32
    %c0_i32_2 = arith.constant 0 : i32
    return %c0_i32, %c0_i32_0, %c0_i32_1 : i32, i32, i32
  }
  func.func @transform_12(%arg0: i32) -> (i32, i32, i32) {
    %c0_i32 = arith.constant 0 : i32
    %c0_i32_0 = arith.constant 0 : i32
    %c0_i32_1 = arith.constant 0 : i32
    %c0_i32_2 = arith.constant 0 : i32
    return %c0_i32, %c0_i32_0, %c0_i32_1 : i32, i32, i32
  }
  func.func @transform_13(%arg0: i32) -> (i32, i32, i32) {
    %c0_i32 = arith.constant 0 : i32
    %c0_i32_0 = arith.constant 0 : i32
    %c0_i32_1 = arith.constant 0 : i32
    %c0_i32_2 = arith.constant 0 : i32
    return %c0_i32, %c0_i32_0, %c0_i32_1 : i32, i32, i32
  }
  func.func @transform_14(%arg0: i32) -> (i32, i32, i32) {
    %c0_i32 = arith.constant 0 : i32
    %c0_i32_0 = arith.constant 0 : i32
    %c0_i32_1 = arith.constant 0 : i32
    %c0_i32_2 = arith.constant 0 : i32
    return %c0_i32, %c0_i32_0, %c0_i32_1 : i32, i32, i32
  }
  func.func @transform_15(%arg0: i32) -> (i32, i32, i32) {
    %c0_i32 = arith.constant 0 : i32
    %c0_i32_0 = arith.constant 0 : i32
    %c0_i32_1 = arith.constant 0 : i32
    %c0_i32_2 = arith.constant 0 : i32
    return %c0_i32, %c0_i32_0, %c0_i32_1 : i32, i32, i32
  }
  func.func @transform_16(%arg0: i32) -> (i32, i32) {
    %c0_i32 = arith.constant 0 : i32
    %c0_i32_0 = arith.constant 0 : i32
    %c0_i32_1 = arith.constant 0 : i32
    return %c0_i32, %c0_i32_0 : i32, i32
  }
  func.func @transform_17(%arg0: i32) -> (i32, i32) {
    %c0_i32 = arith.constant 0 : i32
    %c0_i32_0 = arith.constant 0 : i32
    %c0_i32_1 = arith.constant 0 : i32
    return %c0_i32, %c0_i32_0 : i32, i32
  }
  func.func @transform_18(%arg0: i32) -> (i32, i32) {
    %c0_i32 = arith.constant 0 : i32
    %c0_i32_0 = arith.constant 0 : i32
    %c0_i32_1 = arith.constant 0 : i32
    return %c0_i32, %c0_i32_0 : i32, i32
  }
  func.func @transform_19(%arg0: i32) -> (i32, i32) {
    %c0_i32 = arith.constant 0 : i32
    %c0_i32_0 = arith.constant 0 : i32
    %c0_i32_1 = arith.constant 0 : i32
    return %c0_i32, %c0_i32_0 : i32, i32
  }
  func.func @transform_20(%arg0: i32) -> (i32, i32) {
    %c0_i32 = arith.constant 0 : i32
    %c0_i32_0 = arith.constant 0 : i32
    %c0_i32_1 = arith.constant 0 : i32
    return %c0_i32, %c0_i32_0 : i32, i32
  }
}

</mosaic_0001>

<llo_original>
// kernel: edge_property_prediction_model1.1
$region0: #{edge_property_prediction_model1.1}
  #allocation0 [shape = 'u32[]', space=smem, size = 0x4, offset = 0x4, fixed_abs, tag = 'smem constant byte address 0x4 - core index']
  #allocation1 [shape = 'u32[144,128]{1,0:T(1,128)}', space=vmem, size = 0x12000, scoped, tag = 'internal scratch']
  #allocation2 [shape = 'f32[1,1]{1,0:T(1,128)S(1)}', space=vmem, size = 0x200, scoped, tag = 'scoped memory for edge_property_prediction_model1.1']
  %s0 = inlined_call_operand.vmem [shape: f32[16,8], index: 0, kind: input, shape index: {}]
  %s1 = inlined_call_operand.vmem [shape: f32[16,16], index: 1, kind: input, shape index: {}]
  %s2 = inlined_call_operand.hbm [shape: f32[8,32], index: 2, kind: input, shape index: {}]
  %s3 = inlined_call_operand.vmem [shape: f32[1,32], index: 3, kind: input, shape index: {}]
  %s4 = inlined_call_operand.vmem [shape: f32[32,32], index: 4, kind: input, shape index: {}]
  %s5 = inlined_call_operand.hbm [shape: f32[1,32], index: 5, kind: input, shape index: {}]
  %s6 = inlined_call_operand.hbm [shape: f32[8,32], index: 6, kind: input, shape index: {}]
  %s7 = inlined_call_operand.hbm [shape: f32[1,32], index: 7, kind: input, shape index: {}]
  %s8 = inlined_call_operand.vmem [shape: f32[2,32,96], index: 8, kind: input, shape index: {}]
  %s9 = inlined_call_operand.hbm [shape: f32[2,1,96], index: 9, kind: input, shape index: {}]
  %s10 = inlined_call_operand.vmem [shape: f32[2,32,32], index: 10, kind: input, shape index: {}]
  %s11 = inlined_call_operand.hbm [shape: f32[2,1,32], index: 11, kind: input, shape index: {}]
  %s12 = inlined_call_operand.vmem [shape: f32[2,32,64], index: 12, kind: input, shape index: {}]
  %s13 = inlined_call_operand.hbm [shape: f32[2,1,64], index: 13, kind: input, shape index: {}]
  %s14 = inlined_call_operand.vmem [shape: f32[2,64,32], index: 14, kind: input, shape index: {}]
  %s15 = inlined_call_operand.hbm [shape: f32[2,1,32], index: 15, kind: input, shape index: {}]
  %s16 = inlined_call_operand.hbm [shape: f32[32,32], index: 16, kind: input, shape index: {}]
  %s17 = inlined_call_operand.hbm [shape: f32[1,32], index: 17, kind: input, shape index: {}]
  %s18 = inlined_call_operand.vmem [shape: f32[32,1], index: 18, kind: input, shape index: {}]
  %s19 = inlined_call_operand.<no memory space> [shape: f32[1,1], index: 19, kind: input, shape index: {}]
  %s20 = inlined_call_operand.vmem [shape: f32[16,1], index: 20, kind: output, shape index: {}]
  %s21 = sld [smem:[#allocation0]]
  $region130: #{edge_property_prediction_model1.1} parent=0
    _
  %s23 = ssub.s32 1, %s21
  %s24 = scalar_select 0, %s23, %s21
  %v25 = vstv %s19
  %26 = vst [vmem:[#allocation2] sm:$0x1] %v25
  $region1: #{edge_property_prediction_model1.1} parent=0
    #allocation3 [shape = 'u8[4096]{0}', space=vmem, size = 0x1000, scoped, tag = 'input window, operand 2, single buffered']
    #allocation4 [shape = 's32[1]{0}', space=sflag, size = 0x4, scoped, tag = 'scoped memory for edge_property_prediction_model1.1']
    #allocation5 [shape = 'u8[512]{0}', space=vmem, size = 0x400, scoped, tag = 'input window, operand 5, single buffered']
    #allocation6 [shape = 's32[1]{0}', space=sflag, size = 0x4, scoped, tag = 'scoped memory for edge_property_prediction_model1.1']
    #allocation7 [shape = 'u8[4096]{0}', space=vmem, size = 0x1000, scoped, tag = 'input window, operand 6, single buffered']
    #allocation8 [shape = 'u8[512]{0}', space=vmem, size = 0x400, scoped, tag = 'input window, operand 7, single buffered']
    #allocation9 [shape = 's32[1]{0}', space=sflag, size = 0x4, scoped, tag = 'scoped memory for edge_property_prediction_model1.1']
    #allocation10 [shape = 'u8[1024]{0}', space=vmem, size = 0x400, scoped, tag = 'input window, operand 9, single buffered']
    #allocation11 [shape = 'u8[1024]{0}', space=vmem, size = 0x400, scoped, tag = 'input window, operand 11, single buffered']
    #allocation12 [shape = 's32[1]{0}', space=sflag, size = 0x4, scoped, tag = 'scoped memory for edge_property_prediction_model1.1']
    #allocation13 [shape = 'u8[1024]{0}', space=vmem, size = 0x400, scoped, tag = 'input window, operand 13, single buffered']
    #allocation14 [shape = 'u8[1024]{0}', space=vmem, size = 0x400, scoped, tag = 'input window, operand 15, single buffered']
    #allocation15 [shape = 's32[1]{0}', space=sflag, size = 0x4, scoped, tag = 'scoped memory for edge_property_prediction_model1.1']
    #allocation16 [shape = 'u8[16384]{0}', space=vmem, size = 0x4000, scoped, tag = 'input window, operand 16, single buffered']
    #allocation17 [shape = 'u8[512]{0}', space=vmem, size = 0x400, scoped, tag = 'input window, operand 17, single buffered']
    #allocation18 [shape = 's32[1]{0}', space=sflag, size = 0x4, scoped, tag = 'scoped memory for edge_property_prediction_model1.1']
    %27 = vsyncpa [#allocation4], 0
    %28 = vsyncpa [#allocation6], 0
    %29 = vsyncpa [#allocation9], 0
    %30 = vsyncpa [#allocation12], 0
    %31 = vsyncpa [#allocation15], 0
    %32 = vsyncpa [#allocation18], 0
    // Predicated region
    $region2: #{edge_property_prediction_model1.1} parent=1 // pred_check
      _
    $region3: #{edge_property_prediction_model1.1} parent=1 // pred_check_branch
      %34 = sbr.rel (0) target = $region5
    $region4: #{edge_property_prediction_model1.1} parent=1 // pred_region
      _
    $region5: #{edge_property_prediction_model1.1} parent=1 // pred_fallthru
      _
    // Predicated region
    $region6: #{edge_property_prediction_model1.1} parent=1 // pred_check
      _
    $region7: #{edge_property_prediction_model1.1} parent=1 // pred_check_branch
      %36 = sbr.rel (0) target = $region9
    $region8: #{edge_property_prediction_model1.1} parent=1 // pred_region
      _
    $region9: #{edge_property_prediction_model1.1} parent=1 // pred_fallthru
      _
    // Predicated region
    $region10: #{edge_property_prediction_model1.1} parent=1 // pred_check
      _
    $region11: #{edge_property_prediction_model1.1} parent=1 // pred_check_branch
      %38 = sbr.rel (0) target = $region13
    $region12: #{edge_property_prediction_model1.1} parent=1 // pred_region
      %s40 = ssub.s32 128, 128
      %41 = vsyncadd [#allocation4], %s40
      %s43 = sshll.u32 [#allocation3], 4
      %s44 = int_to_ptr.vmem [resolvable:$true] %s43
      %46 = dma.hbm_to_vmem [thread:$0]  %s2, 128, %s44, [#allocation4]
    $region13: #{edge_property_prediction_model1.1} parent=1 // pred_fallthru
      _
    // Predicated region
    $region14: #{edge_property_prediction_model1.1} parent=1 // pred_check
      _
    $region15: #{edge_property_prediction_model1.1} parent=1 // pred_check_branch
      %48 = sbr.rel (0) target = $region17
    $region16: #{edge_property_prediction_model1.1} parent=1 // pred_region
      _
    $region17: #{edge_property_prediction_model1.1} parent=1 // pred_fallthru
      _
    // Predicated region
    $region18: #{edge_property_prediction_model1.1} parent=1 // pred_check
      _
    $region19: #{edge_property_prediction_model1.1} parent=1 // pred_check_branch
      %50 = sbr.rel (0) target = $region21
    $region20: #{edge_property_prediction_model1.1} parent=1 // pred_region
      _
    $region21: #{edge_property_prediction_model1.1} parent=1 // pred_fallthru
      _
    // Predicated region
    $region22: #{edge_property_prediction_model1.1} parent=1 // pred_check
      _
    $region23: #{edge_property_prediction_model1.1} parent=1 // pred_check_branch
      %52 = sbr.rel (0) target = $region25
    $region24: #{edge_property_prediction_model1.1} parent=1 // pred_region
      %s54 = ssub.s32 16, 16
      %55 = vsyncadd [#allocation6], %s54
      %s57 = sshll.u32 [#allocation5], 4
      %s58 = int_to_ptr.vmem [resolvable:$true] %s57
      %60 = dma.hbm_to_vmem [thread:$0]  %s5, 16, %s58, [#allocation6]
    $region25: #{edge_property_prediction_model1.1} parent=1 // pred_fallthru
      _
    // Predicated region
    $region26: #{edge_property_prediction_model1.1} parent=1 // pred_check
      _
    $region27: #{edge_property_prediction_model1.1} parent=1 // pred_check_branch
      %62 = sbr.rel (0) target = $region29
    $region28: #{edge_property_prediction_model1.1} parent=1 // pred_region
      %s64 = ssub.s32 128, 128
      %65 = vsyncadd [#allocation6], %s64
      %s67 = sshll.u32 [#allocation7], 4
      %s68 = int_to_ptr.vmem [resolvable:$true] %s67
      %70 = dma.hbm_to_vmem [thread:$0]  %s6, 128, %s68, [#allocation6]
    $region29: #{edge_property_prediction_model1.1} parent=1 // pred_fallthru
      _
    // Predicated region
    $region30: #{edge_property_prediction_model1.1} parent=1 // pred_check
      _
    $region31: #{edge_property_prediction_model1.1} parent=1 // pred_check_branch
      %72 = sbr.rel (0) target = $region33
    $region32: #{edge_property_prediction_model1.1} parent=1 // pred_region
      %s74 = ssub.s32 16, 16
      %75 = vsyncadd [#allocation9], %s74
      %s77 = sshll.u32 [#allocation8], 4
      %s78 = int_to_ptr.vmem [resolvable:$true] %s77
      %80 = dma.hbm_to_vmem [thread:$0]  %s7, 16, %s78, [#allocation9]
    $region33: #{edge_property_prediction_model1.1} parent=1 // pred_fallthru
      _
    // Predicated region
    $region34: #{edge_property_prediction_model1.1} parent=1 // pred_check
      _
    $region35: #{edge_property_prediction_model1.1} parent=1 // pred_check_branch
      %82 = sbr.rel (0) target = $region37
    $region36: #{edge_property_prediction_model1.1} parent=1 // pred_region
      _
    $region37: #{edge_property_prediction_model1.1} parent=1 // pred_fallthru
      _
    // Predicated region
    $region38: #{edge_property_prediction_model1.1} parent=1 // pred_check
      _
    $region39: #{edge_property_prediction_model1.1} parent=1 // pred_check_branch
      %84 = sbr.rel (0) target = $region41
    $region40: #{edge_property_prediction_model1.1} parent=1 // pred_region
      %s86 = ssub.s32 32, 32
      %87 = vsyncadd [#allocation9], %s86
      %s88 = sshll.u32 [#allocation10], 4
      %s89 = int_to_ptr.vmem [resolvable:$true] %s88
      %94 = dma.hbm_to_vmem [thread:$0]  %s9, 32, %s89, [#allocation9], 16, 16, 1
    $region41: #{edge_property_prediction_model1.1} parent=1 // pred_fallthru
      _
    // Predicated region
    $region42: #{edge_property_prediction_model1.1} parent=1 // pred_check
      _
    $region43: #{edge_property_prediction_model1.1} parent=1 // pred_check_branch
      %96 = sbr.rel (0) target = $region45
    $region44: #{edge_property_prediction_model1.1} parent=1 // pred_region
      _
    $region45: #{edge_property_prediction_model1.1} parent=1 // pred_fallthru
      _
    // Predicated region
    $region46: #{edge_property_prediction_model1.1} parent=1 // pred_check
      _
    $region47: #{edge_property_prediction_model1.1} parent=1 // pred_check_branch
      %98 = sbr.rel (0) target = $region49
    $region48: #{edge_property_prediction_model1.1} parent=1 // pred_region
      %s100 = ssub.s32 32, 32
      %101 = vsyncadd [#allocation12], %s100
      %s102 = sshll.u32 [#allocation11], 4
      %s103 = int_to_ptr.vmem [resolvable:$true] %s102
      %108 = dma.hbm_to_vmem [thread:$0]  %s11, 32, %s103, [#allocation12], 16, 16, 1
    $region49: #{edge_property_prediction_model1.1} parent=1 // pred_fallthru
      _
    // Predicated region
    $region50: #{edge_property_prediction_model1.1} parent=1 // pred_check
      _
    $region51: #{edge_property_prediction_model1.1} parent=1 // pred_check_branch
      %110 = sbr.rel (0) target = $region53
    $region52: #{edge_property_prediction_model1.1} parent=1 // pred_region
      _
    $region53: #{edge_property_prediction_model1.1} parent=1 // pred_fallthru
      _
    // Predicated region
    $region54: #{edge_property_prediction_model1.1} parent=1 // pred_check
      _
    $region55: #{edge_property_prediction_model1.1} parent=1 // pred_check_branch
      %112 = sbr.rel (0) target = $region57
    $region56: #{edge_property_prediction_model1.1} parent=1 // pred_region
      %s114 = ssub.s32 32, 32
      %115 = vsyncadd [#allocation12], %s114
      %s116 = sshll.u32 [#allocation13], 4
      %s117 = int_to_ptr.vmem [resolvable:$true] %s116
      %122 = dma.hbm_to_vmem [thread:$0]  %s13, 32, %s117, [#allocation12], 16, 16, 1
    $region57: #{edge_property_prediction_model1.1} parent=1 // pred_fallthru
      _
    // Predicated region
    $region58: #{edge_property_prediction_model1.1} parent=1 // pred_check
      _
    $region59: #{edge_property_prediction_model1.1} parent=1 // pred_check_branch
      %124 = sbr.rel (0) target = $region61
    $region60: #{edge_property_prediction_model1.1} parent=1 // pred_region
      _
    $region61: #{edge_property_prediction_model1.1} parent=1 // pred_fallthru
      _
    // Predicated region
    $region62: #{edge_property_prediction_model1.1} parent=1 // pred_check
      _
    $region63: #{edge_property_prediction_model1.1} parent=1 // pred_check_branch
      %126 = sbr.rel (0) target = $region65
    $region64: #{edge_property_prediction_model1.1} parent=1 // pred_region
      %s128 = ssub.s32 32, 32
      %129 = vsyncadd [#allocation15], %s128
      %s130 = sshll.u32 [#allocation14], 4
      %s131 = int_to_ptr.vmem [resolvable:$true] %s130
      %136 = dma.hbm_to_vmem [thread:$0]  %s15, 32, %s131, [#allocation15], 16, 16, 1
    $region65: #{edge_property_prediction_model1.1} parent=1 // pred_fallthru
      _
    // Predicated region
    $region66: #{edge_property_prediction_model1.1} parent=1 // pred_check
      _
    $region67: #{edge_property_prediction_model1.1} parent=1 // pred_check_branch
      %138 = sbr.rel (0) target = $region69
    $region68: #{edge_property_prediction_model1.1} parent=1 // pred_region
      %s140 = ssub.s32 512, 512
      %141 = vsyncadd [#allocation15], %s140
      %s142 = sshll.u32 [#allocation16], 4
      %s143 = int_to_ptr.vmem [resolvable:$true] %s142
      %148 = dma.hbm_to_vmem [thread:$0]  %s16, 512, %s143, [#allocation15], 128, 128, 8
    $region69: #{edge_property_prediction_model1.1} parent=1 // pred_fallthru
      _
    // Predicated region
    $region70: #{edge_property_prediction_model1.1} parent=1 // pred_check
      _
    $region71: #{edge_property_prediction_model1.1} parent=1 // pred_check_branch
      %150 = sbr.rel (0) target = $region73
    $region72: #{edge_property_prediction_model1.1} parent=1 // pred_region
      %s152 = ssub.s32 16, 16
      %153 = vsyncadd [#allocation18], %s152
      %s155 = sshll.u32 [#allocation17], 4
      %s156 = int_to_ptr.vmem [resolvable:$true] %s155
      %158 = dma.hbm_to_vmem [thread:$0]  %s17, 16, %s156, [#allocation18]
    $region73: #{edge_property_prediction_model1.1} parent=1 // pred_fallthru
      _
    // Predicated region
    $region74: #{edge_property_prediction_model1.1} parent=1 // pred_check
      _
    $region75: #{edge_property_prediction_model1.1} parent=1 // pred_check_branch
      %160 = sbr.rel (0) target = $region77
    $region76: #{edge_property_prediction_model1.1} parent=1 // pred_region
      _
    $region77: #{edge_property_prediction_model1.1} parent=1 // pred_fallthru
      _
    // Predicated region
    $region78: #{edge_property_prediction_model1.1} parent=1 // pred_check
      _
    $region79: #{edge_property_prediction_model1.1} parent=1 // pred_check_branch
      %162 = sbr.rel (0) target = $region81
    $region80: #{edge_property_prediction_model1.1} parent=1 // pred_region
      _
    $region81: #{edge_property_prediction_model1.1} parent=1 // pred_fallthru
      _
    // Predicated region
    $region82: #{edge_property_prediction_model1.1} parent=1 // pred_check
      _
    $region83: #{edge_property_prediction_model1.1} parent=1 // pred_check_branch
      %164 = sbr.rel (0) target = $region85
    $region84: #{edge_property_prediction_model1.1} parent=1 // pred_region
      %165 = dma.done [#allocation4], 128
    $region85: #{edge_property_prediction_model1.1} parent=1 // pred_fallthru
      _
    // Predicated region
    $region86: #{edge_property_prediction_model1.1} parent=1 // pred_check
      _
    $region87: #{edge_property_prediction_model1.1} parent=1 // pred_check_branch
      %167 = sbr.rel (0) target = $region89
    $region88: #{edge_property_prediction_model1.1} parent=1 // pred_region
      %168 = dma.done [#allocation6], 16
    $region89: #{edge_property_prediction_model1.1} parent=1 // pred_fallthru
      _
    // Predicated region
    $region90: #{edge_property_prediction_model1.1} parent=1 // pred_check
      _
    $region91: #{edge_property_prediction_model1.1} parent=1 // pred_check_branch
      %170 = sbr.rel (0) target = $region93
    $region92: #{edge_property_prediction_model1.1} parent=1 // pred_region
      %171 = dma.done [#allocation6], 128
    $region93: #{edge_property_prediction_model1.1} parent=1 // pred_fallthru
      _
    // Predicated region
    $region94: #{edge_property_prediction_model1.1} parent=1 // pred_check
      _
    $region95: #{edge_property_prediction_model1.1} parent=1 // pred_check_branch
      %173 = sbr.rel (0) target = $region97
    $region96: #{edge_property_prediction_model1.1} parent=1 // pred_region
      %174 = dma.done [#allocation9], 16
    $region97: #{edge_property_prediction_model1.1} parent=1 // pred_fallthru
      _
    // Predicated region
    $region98: #{edge_property_prediction_model1.1} parent=1 // pred_check
      _
    $region99: #{edge_property_prediction_model1.1} parent=1 // pred_check_branch
      %176 = sbr.rel (0) target = $region101
    $region100: #{edge_property_prediction_model1.1} parent=1 // pred_region
      %177 = dma.done [#allocation9], 32
    $region101: #{edge_property_prediction_model1.1} parent=1 // pred_fallthru
      _
    // Predicated region
    $region102: #{edge_property_prediction_model1.1} parent=1 // pred_check
      _
    $region103: #{edge_property_prediction_model1.1} parent=1 // pred_check_branch
      %179 = sbr.rel (0) target = $region105
    $region104: #{edge_property_prediction_model1.1} parent=1 // pred_region
      %180 = dma.done [#allocation12], 32
    $region105: #{edge_property_prediction_model1.1} parent=1 // pred_fallthru
      _
    // Predicated region
    $region106: #{edge_property_prediction_model1.1} parent=1 // pred_check
      _
    $region107: #{edge_property_prediction_model1.1} parent=1 // pred_check_branch
      %182 = sbr.rel (0) target = $region109
    $region108: #{edge_property_prediction_model1.1} parent=1 // pred_region
      %183 = dma.done [#allocation12], 32
    $region109: #{edge_property_prediction_model1.1} parent=1 // pred_fallthru
      _
    // Predicated region
    $region110: #{edge_property_prediction_model1.1} parent=1 // pred_check
      _
    $region111: #{edge_property_prediction_model1.1} parent=1 // pred_check_branch
      %185 = sbr.rel (0) target = $region113
    $region112: #{edge_property_prediction_model1.1} parent=1 // pred_region
      %186 = dma.done [#allocation15], 32
    $region113: #{edge_property_prediction_model1.1} parent=1 // pred_fallthru
      _
    // Predicated region
    $region114: #{edge_property_prediction_model1.1} parent=1 // pred_check
      _
    $region115: #{edge_property_prediction_model1.1} parent=1 // pred_check_branch
      %188 = sbr.rel (0) target = $region117
    $region116: #{edge_property_prediction_model1.1} parent=1 // pred_region
      %189 = dma.done [#allocation15], 512
    $region117: #{edge_property_prediction_model1.1} parent=1 // pred_fallthru
      _
    // Predicated region
    $region118: #{edge_property_prediction_model1.1} parent=1 // pred_check
      _
    $region119: #{edge_property_prediction_model1.1} parent=1 // pred_check_branch
      %191 = sbr.rel (0) target = $region121
    $region120: #{edge_property_prediction_model1.1} parent=1 // pred_region
      %192 = dma.done [#allocation18], 16
    $region121: #{edge_property_prediction_model1.1} parent=1 // pred_fallthru
      _
    %v193 = vld [vmem:[%s0] sm:$0xff]
    %v194 = vld [vmem:[%s0 + $0x8] sm:$0xff]
    %v195 = vld [vmem:[%s1] sm:$0xff]
    %v196 = vld [vmem:[%s1 + $0x8] sm:$0xff]
    %v197 = vld [vmem:[#allocation3] sm:$0xff]
    %v198 = vld [vmem:[%s3] sm:$0x1]
    %v200 = vlaneseq
    %v201 = vshrl.u32 %v200, 7
    %v202 = vsub.s32 0, %v201
    %v203 = vrot.slane %v198, %v202
    %vm205 = vcmask 64512
    %v207 = vsel %vm205, %v193, 0
    %v210 = vsel %vm205, %v194, 0
    %212 = vmatprep.subr.mxu0 0.0
    %213 = vmatpush1.msra.mxu0 %v197
    %214 = vmatprep.subr.mxu0 0.0
    %215 = vmatpush1.msra.mxu0 0.0
    %216 = vmatprep.subr.mxu0 0.0
    %217 = vmatpush1.msra.mxu0 0.0
    %218 = vmatprep.subr.mxu0 0.0
    %219 = vmatpush1.msra.mxu0 0.0
    %220 = vmatprep.subr.mxu0 0.0
    %221 = vmatpush1.msra.mxu0 0.0
    %222 = vmatprep.subr.mxu0 0.0
    %223 = vmatpush1.msra.mxu0 0.0
    %224 = vmatprep.subr.mxu0 0.0
    %225 = vmatpush1.msra.mxu0 0.0
    %226 = vmatprep.subr.mxu0 0.0
    %227 = vmatpush1.msra.mxu0 0.0
    %228 = vmatprep.subr.mxu0 0.0
    %229 = vmatpush1.msra.mxu0 0.0
    %230 = vmatprep.subr.mxu0 0.0
    %231 = vmatpush1.msra.mxu0 0.0
    %232 = vmatprep.subr.mxu0 0.0
    %233 = vmatpush1.msra.mxu0 0.0
    %234 = vmatprep.subr.mxu0 0.0
    %235 = vmatpush1.msra.mxu0 0.0
    %236 = vmatprep.subr.mxu0 0.0
    %237 = vmatpush1.msra.mxu0 0.0
    %238 = vmatprep.subr.mxu0 0.0
    %239 = vmatpush1.msra.mxu0 0.0
    %240 = vmatprep.subr.mxu0 0.0
    %241 = vmatpush1.msra.mxu0 0.0
    %242 = vmatprep.subr.mxu0 0.0
    %243 = vmatpush1.msra.mxu0 0.0
    %244 = vmatprep.subr.mxu0 0.0
    %245 = vmatpush1.msra.mxu0 0.0
    %246 = vmatprep.subr.mxu0 0.0
    %247 = vmatpush1.msra.mxu0 0.0
    %248 = vmatprep.subr.mxu0 0.0
    %249 = vmatpush1.msra.mxu0 0.0
    %250 = vmatprep.subr.mxu0 0.0
    %251 = vmatpush1.msra.mxu0 0.0
    %252 = vmatprep.subr.mxu0 0.0
    %253 = vmatpush1.msra.mxu0 0.0
    %254 = vmatprep.subr.mxu0 0.0
    %255 = vmatpush1.msra.mxu0 0.0
    %256 = vmatprep.subr.mxu0 0.0
    %257 = vmatpush1.msra.mxu0 0.0
    %258 = vmatprep.subr.mxu0 0.0
    %259 = vmatpush1.msra.mxu0 0.0
    %260 = vmatprep.subr.mxu0 0.0
    %261 = vmatpush1.msra.mxu0 0.0
    %262 = vmatprep.subr.mxu0 0.0
    %263 = vmatpush1.msra.mxu0 0.0
    %264 = vmatprep.subr.mxu0 0.0
    %265 = vmatpush1.msra.mxu0 0.0
    %266 = vmatprep.subr.mxu0 0.0
    %267 = vmatpush1.msra.mxu0 0.0
    %268 = vmatprep.subr.mxu0 0.0
    %269 = vmatpush1.msra.mxu0 0.0
    %270 = vmatprep.subr.mxu0 0.0
    %271 = vmatpush1.msra.mxu0 0.0
    %272 = vmatprep.subr.mxu0 0.0
    %273 = vmatpush1.msra.mxu0 0.0
    %274 = vmatprep.subr.mxu0 0.0
    %275 = vmatpush1.msra.mxu0 0.0
    %276 = vmatprep.mubr.f32.mxu0 0.0
    %277 = vmatmul.mubr.f32.gmra.mrb[0].mxu0 %v207
    %v278 = vpop.f32.mrb[0].mxu0
    %v279 = vadd.f32 %v203, %v278
    %v280 = vpop.f32.mrb[0].mxu0
    %281 = vmatprep.mubr.f32.mxu0 0.0
    %282 = vmatmul.mubr.f32.gmra.mrb[0].mxu0 %v210
    %v283 = vpop.f32.mrb[0].mxu0
    %v284 = vadd.f32 %v203, %v283
    %v285 = vpop.f32.mrb[0].mxu0
    %286 = vdwg.mxu0
    %v287 = vmax.f32 %v279, 0.0
    %v288 = vmax.f32 %v284, 0.0
    %v289 = vld [vmem:[%s4] sm:$0xff]
    %v290 = vld [vmem:[%s4 + $0x8] sm:$0xff]
    %v291 = vld [vmem:[%s4 + $0x10] sm:$0xff]
    %v292 = vld [vmem:[%s4 + $0x18] sm:$0xff]
    %v293 = vld [vmem:[#allocation5] sm:$0x1]
    %v295 = vlaneseq
    %v296 = vshrl.u32 %v295, 7
    %v297 = vsub.s32 0, %v296
    %v298 = vrot.slane %v293, %v297
    %vm300 = vcmask 261120
    %v302 = vsel %vm300, %v287, 0
    %v305 = vsel %vm300, %v288, 0
    %307 = vmatprep.subr.mxu0 0.0
    %308 = vmatpush1.msra.mxu0 %v289
    %309 = vmatprep.subr.mxu0 0.0
    %310 = vmatpush1.msra.mxu0 %v290
    %311 = vmatprep.subr.mxu0 0.0
    %312 = vmatpush1.msra.mxu0 %v291
    %313 = vmatprep.subr.mxu0 0.0
    %314 = vmatpush1.msra.mxu0 %v292
    %315 = vmatprep.subr.mxu0 0.0
    %316 = vmatpush1.msra.mxu0 0.0
    %317 = vmatprep.subr.mxu0 0.0
    %318 = vmatpush1.msra.mxu0 0.0
    %319 = vmatprep.subr.mxu0 0.0
    %320 = vmatpush1.msra.mxu0 0.0
    %321 = vmatprep.subr.mxu0 0.0
    %322 = vmatpush1.msra.mxu0 0.0
    %323 = vmatprep.subr.mxu0 0.0
    %324 = vmatpush1.msra.mxu0 0.0
    %325 = vmatprep.subr.mxu0 0.0
    %326 = vmatpush1.msra.mxu0 0.0
    %327 = vmatprep.subr.mxu0 0.0
    %328 = vmatpush1.msra.mxu0 0.0
    %329 = vmatprep.subr.mxu0 0.0
    %330 = vmatpush1.msra.mxu0 0.0
    %331 = vmatprep.subr.mxu0 0.0
    %332 = vmatpush1.msra.mxu0 0.0
    %333 = vmatprep.subr.mxu0 0.0
    %334 = vmatpush1.msra.mxu0 0.0
    %335 = vmatprep.subr.mxu0 0.0
    %336 = vmatpush1.msra.mxu0 0.0
    %337 = vmatprep.subr.mxu0 0.0
    %338 = vmatpush1.msra.mxu0 0.0
    %339 = vmatprep.subr.mxu0 0.0
    %340 = vmatpush1.msra.mxu0 0.0
    %341 = vmatprep.subr.mxu0 0.0
    %342 = vmatpush1.msra.mxu0 0.0
    %343 = vmatprep.subr.mxu0 0.0
    %344 = vmatpush1.msra.mxu0 0.0
    %345 = vmatprep.subr.mxu0 0.0
    %346 = vmatpush1.msra.mxu0 0.0
    %347 = vmatprep.subr.mxu0 0.0
    %348 = vmatpush1.msra.mxu0 0.0
    %349 = vmatprep.subr.mxu0 0.0
    %350 = vmatpush1.msra.mxu0 0.0
    %351 = vmatprep.subr.mxu0 0.0
    %352 = vmatpush1.msra.mxu0 0.0
    %353 = vmatprep.subr.mxu0 0.0
    %354 = vmatpush1.msra.mxu0 0.0
    %355 = vmatprep.subr.mxu0 0.0
    %356 = vmatpush1.msra.mxu0 0.0
    %357 = vmatprep.subr.mxu0 0.0
    %358 = vmatpush1.msra.mxu0 0.0
    %359 = vmatprep.subr.mxu0 0.0
    %360 = vmatpush1.msra.mxu0 0.0
    %361 = vmatprep.subr.mxu0 0.0
    %362 = vmatpush1.msra.mxu0 0.0
    %363 = vmatprep.subr.mxu0 0.0
    %364 = vmatpush1.msra.mxu0 0.0
    %365 = vmatprep.subr.mxu0 0.0
    %366 = vmatpush1.msra.mxu0 0.0
    %367 = vmatprep.subr.mxu0 0.0
    %368 = vmatpush1.msra.mxu0 0.0
    %369 = vmatprep.subr.mxu0 0.0
    %370 = vmatpush1.msra.mxu0 0.0
    %371 = vmatprep.mubr.f32.mxu0 0.0
    %372 = vmatmul.mubr.f32.gmra.mrb[0].mxu0 %v302
    %v373 = vpop.f32.mrb[0].mxu0
    %v374 = vadd.f32 %v298, %v373
    %v375 = vpop.f32.mrb[0].mxu0
    %376 = vmatprep.mubr.f32.mxu0 0.0
    %377 = vmatmul.mubr.f32.gmra.mrb[0].mxu0 %v305
    %v378 = vpop.f32.mrb[0].mxu0
    %v379 = vadd.f32 %v298, %v378
    %v380 = vpop.f32.mrb[0].mxu0
    %381 = vdwg.mxu0
    %v382 = vld [vmem:[#allocation7] sm:$0xff]
    %383 = vmatprep.subr.mxu0 0.0
    %384 = vmatpush1.msra.mxu0 %v382
    %385 = vmatprep.subr.mxu0 0.0
    %386 = vmatpush1.msra.mxu0 0.0
    %387 = vmatprep.subr.mxu0 0.0
    %388 = vmatpush1.msra.mxu0 0.0
    %389 = vmatprep.subr.mxu0 0.0
    %390 = vmatpush1.msra.mxu0 0.0
    %391 = vmatprep.subr.mxu0 0.0
    %392 = vmatpush1.msra.mxu0 0.0
    %393 = vmatprep.subr.mxu0 0.0
    %394 = vmatpush1.msra.mxu0 0.0
    %395 = vmatprep.subr.mxu0 0.0
    %396 = vmatpush1.msra.mxu0 0.0
    %397 = vmatprep.subr.mxu0 0.0
    %398 = vmatpush1.msra.mxu0 0.0
    %399 = vmatprep.subr.mxu0 0.0
    %400 = vmatpush1.msra.mxu0 0.0
    %401 = vmatprep.subr.mxu0 0.0
    %402 = vmatpush1.msra.mxu0 0.0
    %403 = vmatprep.subr.mxu0 0.0
    %404 = vmatpush1.msra.mxu0 0.0
    %405 = vmatprep.subr.mxu0 0.0
    %406 = vmatpush1.msra.mxu0 0.0
    %407 = vmatprep.subr.mxu0 0.0
    %408 = vmatpush1.msra.mxu0 0.0
    %409 = vmatprep.subr.mxu0 0.0
    %410 = vmatpush1.msra.mxu0 0.0
    %411 = vmatprep.subr.mxu0 0.0
    %412 = vmatpush1.msra.mxu0 0.0
    %413 = vmatprep.subr.mxu0 0.0
    %414 = vmatpush1.msra.mxu0 0.0
    %415 = vmatprep.subr.mxu0 0.0
    %416 = vmatpush1.msra.mxu0 0.0
    %417 = vmatprep.subr.mxu0 0.0
    %418 = vmatpush1.msra.mxu0 0.0
    %419 = vmatprep.subr.mxu0 0.0
    %420 = vmatpush1.msra.mxu0 0.0
    %421 = vmatprep.subr.mxu0 0.0
    %422 = vmatpush1.msra.mxu0 0.0
    %423 = vmatprep.subr.mxu0 0.0
    %424 = vmatpush1.msra.mxu0 0.0
    %425 = vmatprep.subr.mxu0 0.0
    %426 = vmatpush1.msra.mxu0 0.0
    %427 = vmatprep.subr.mxu0 0.0
    %428 = vmatpush1.msra.mxu0 0.0
    %429 = vmatprep.subr.mxu0 0.0
    %430 = vmatpush1.msra.mxu0 0.0
    %431 = vmatprep.subr.mxu0 0.0
    %432 = vmatpush1.msra.mxu0 0.0
    %433 = vmatprep.subr.mxu0 0.0
    %434 = vmatpush1.msra.mxu0 0.0
    %435 = vmatprep.subr.mxu0 0.0
    %436 = vmatpush1.msra.mxu0 0.0
    %437 = vmatprep.subr.mxu0 0.0
    %438 = vmatpush1.msra.mxu0 0.0
    %439 = vmatprep.subr.mxu0 0.0
    %440 = vmatpush1.msra.mxu0 0.0
    %441 = vmatprep.subr.mxu0 0.0
    %442 = vmatpush1.msra.mxu0 0.0
    %443 = vmatprep.subr.mxu0 0.0
    %444 = vmatpush1.msra.mxu0 0.0
    %445 = vmatprep.subr.mxu0 0.0
    %446 = vmatpush1.msra.mxu0 0.0
    %447 = vmatprep.mubr.f32.mxu0 0.0
    %448 = vmatmul.mubr.f32.gmra.mrb[0].mxu0 %v207
    %v449 = vpop.f32.mrb[0].mxu0
    %v450 = vadd.f32 0.0, %v449
    %v451 = vpop.f32.mrb[0].mxu0
    %452 = vmatprep.mubr.f32.mxu0 0.0
    %453 = vmatmul.mubr.f32.gmra.mrb[0].mxu0 %v210
    %v454 = vpop.f32.mrb[0].mxu0
    %v455 = vadd.f32 0.0, %v454
    %v456 = vpop.f32.mrb[0].mxu0
    %457 = vdwg.mxu0
    %v458 = vadd.f32 %v374, %v450
    %v459 = vadd.f32 %v379, %v455
    %v460 = vld [vmem:[#allocation8] sm:$0x1]
    %v462 = vlaneseq
    %v463 = vshrl.u32 %v462, 7
    %v464 = vsub.s32 0, %v463
    %v465 = vrot.slane %v460, %v464
    %v467 = vadd.f32 %v458, %v465
    %v468 = vadd.f32 %v459, %v465
    %v469 = vld [vmem:[%s8] sm:$0xff]
    %v470 = vld [vmem:[%s8 + $0x8] sm:$0xff]
    %v471 = vld [vmem:[%s8 + $0x10] sm:$0xff]
    %v472 = vld [vmem:[%s8 + $0x18] sm:$0xff]
    %v473 = vld [vmem:[#allocation10] sm:$0x1]
    %v475 = vlaneseq
    %v476 = vshrl.u32 %v475, 7
    %v477 = vsub.s32 0, %v476
    %v478 = vrot.slane %v473, %v477
    %v481 = vsel %vm300, %v467, 0
    %v484 = vsel %vm300, %v468, 0
    %486 = vmatprep.subr.mxu0 0.0
    %487 = vmatpush1.msra.mxu0 %v469
    %488 = vmatprep.subr.mxu0 0.0
    %489 = vmatpush1.msra.mxu0 %v470
    %490 = vmatprep.subr.mxu0 0.0
    %491 = vmatpush1.msra.mxu0 %v471
    %492 = vmatprep.subr.mxu0 0.0
    %493 = vmatpush1.msra.mxu0 %v472
    %494 = vmatprep.subr.mxu0 0.0
    %495 = vmatpush1.msra.mxu0 0.0
    %496 = vmatprep.subr.mxu0 0.0
    %497 = vmatpush1.msra.mxu0 0.0
    %498 = vmatprep.subr.mxu0 0.0
    %499 = vmatpush1.msra.mxu0 0.0
    %500 = vmatprep.subr.mxu0 0.0
    %501 = vmatpush1.msra.mxu0 0.0
    %502 = vmatprep.subr.mxu0 0.0
    %503 = vmatpush1.msra.mxu0 0.0
    %504 = vmatprep.subr.mxu0 0.0
    %505 = vmatpush1.msra.mxu0 0.0
    %506 = vmatprep.subr.mxu0 0.0
    %507 = vmatpush1.msra.mxu0 0.0
    %508 = vmatprep.subr.mxu0 0.0
    %509 = vmatpush1.msra.mxu0 0.0
    %510 = vmatprep.subr.mxu0 0.0
    %511 = vmatpush1.msra.mxu0 0.0
    %512 = vmatprep.subr.mxu0 0.0
    %513 = vmatpush1.msra.mxu0 0.0
    %514 = vmatprep.subr.mxu0 0.0
    %515 = vmatpush1.msra.mxu0 0.0
    %516 = vmatprep.subr.mxu0 0.0
    %517 = vmatpush1.msra.mxu0 0.0
    %518 = vmatprep.subr.mxu0 0.0
    %519 = vmatpush1.msra.mxu0 0.0
    %520 = vmatprep.subr.mxu0 0.0
    %521 = vmatpush1.msra.mxu0 0.0
    %522 = vmatprep.subr.mxu0 0.0
    %523 = vmatpush1.msra.mxu0 0.0
    %524 = vmatprep.subr.mxu0 0.0
    %525 = vmatpush1.msra.mxu0 0.0
    %526 = vmatprep.subr.mxu0 0.0
    %527 = vmatpush1.msra.mxu0 0.0
    %528 = vmatprep.subr.mxu0 0.0
    %529 = vmatpush1.msra.mxu0 0.0
    %530 = vmatprep.subr.mxu0 0.0
    %531 = vmatpush1.msra.mxu0 0.0
    %532 = vmatprep.subr.mxu0 0.0
    %533 = vmatpush1.msra.mxu0 0.0
    %534 = vmatprep.subr.mxu0 0.0
    %535 = vmatpush1.msra.mxu0 0.0
    %536 = vmatprep.subr.mxu0 0.0
    %537 = vmatpush1.msra.mxu0 0.0
    %538 = vmatprep.subr.mxu0 0.0
    %539 = vmatpush1.msra.mxu0 0.0
    %540 = vmatprep.subr.mxu0 0.0
    %541 = vmatpush1.msra.mxu0 0.0
    %542 = vmatprep.subr.mxu0 0.0
    %543 = vmatpush1.msra.mxu0 0.0
    %544 = vmatprep.subr.mxu0 0.0
    %545 = vmatpush1.msra.mxu0 0.0
    %546 = vmatprep.subr.mxu0 0.0
    %547 = vmatpush1.msra.mxu0 0.0
    %548 = vmatprep.subr.mxu0 0.0
    %549 = vmatpush1.msra.mxu0 0.0
    %550 = vmatprep.mubr.f32.mxu0 0.0
    %551 = vmatmul.mubr.f32.gmra.mrb[0].mxu0 %v481
    %v552 = vpop.f32.mrb[0].mxu0
    %v553 = vadd.f32 %v478, %v552
    %v554 = vpop.f32.mrb[0].mxu0
    %555 = vmatprep.mubr.f32.mxu0 0.0
    %556 = vmatmul.mubr.f32.gmra.mrb[0].mxu0 %v484
    %v557 = vpop.f32.mrb[0].mxu0
    %v558 = vadd.f32 %v478, %v557
    %v559 = vpop.f32.mrb[0].mxu0
    %560 = vdwg.mxu0
    %v561 = vmul.f32 %v553, 0.35355338
    %v562 = vmul.f32 %v558, 0.35355338
    %565 = vrot.lane.b32.xlu0 %v553, 96
    %v566 = vpop.permute.xlu0 %565
    %567 = vrot.lane.b32.xlu0 %v558, 96
    %v568 = vpop.permute.xlu0 %567
    %v570 = vsel %vm205, %v561, 0
    %v573 = vsel %vm205, %v562, 0
    %v575 = vsel %vm205, %v566, 0
    %v577 = vsel %vm205, %v568, 0
    %579 = vmatprep.subr.mxu0 0.0
    %580 = vmatpush1.xpose.msra.mxu0 %v575
    %581 = vmatprep.subr.mxu0 0.0
    %582 = vmatpush1.xpose.msra.mxu0 %v577
    %583 = vmatprep.subr.mxu0 0.0
    %584 = vmatpush1.xpose.msra.mxu0 0.0
    %585 = vmatprep.subr.mxu0 0.0
    %586 = vmatpush1.xpose.msra.mxu0 0.0
    %587 = vmatprep.subr.mxu0 0.0
    %588 = vmatpush1.xpose.msra.mxu0 0.0
    %589 = vmatprep.subr.mxu0 0.0
    %590 = vmatpush1.xpose.msra.mxu0 0.0
    %591 = vmatprep.subr.mxu0 0.0
    %592 = vmatpush1.xpose.msra.mxu0 0.0
    %593 = vmatprep.subr.mxu0 0.0
    %594 = vmatpush1.xpose.msra.mxu0 0.0
    %595 = vmatprep.subr.mxu0 0.0
    %596 = vmatpush1.xpose.msra.mxu0 0.0
    %597 = vmatprep.subr.mxu0 0.0
    %598 = vmatpush1.xpose.msra.mxu0 0.0
    %599 = vmatprep.subr.mxu0 0.0
    %600 = vmatpush1.xpose.msra.mxu0 0.0
    %601 = vmatprep.subr.mxu0 0.0
    %602 = vmatpush1.xpose.msra.mxu0 0.0
    %603 = vmatprep.subr.mxu0 0.0
    %604 = vmatpush1.xpose.msra.mxu0 0.0
    %605 = vmatprep.subr.mxu0 0.0
    %606 = vmatpush1.xpose.msra.mxu0 0.0
    %607 = vmatprep.subr.mxu0 0.0
    %608 = vmatpush1.xpose.msra.mxu0 0.0
    %609 = vmatprep.subr.mxu0 0.0
    %610 = vmatpush1.xpose.msra.mxu0 0.0
    %611 = vmatprep.subr.mxu0 0.0
    %612 = vmatpush1.xpose.msra.mxu0 0.0
    %613 = vmatprep.subr.mxu0 0.0
    %614 = vmatpush1.xpose.msra.mxu0 0.0
    %615 = vmatprep.subr.mxu0 0.0
    %616 = vmatpush1.xpose.msra.mxu0 0.0
    %617 = vmatprep.subr.mxu0 0.0
    %618 = vmatpush1.xpose.msra.mxu0 0.0
    %619 = vmatprep.subr.mxu0 0.0
    %620 = vmatpush1.xpose.msra.mxu0 0.0
    %621 = vmatprep.subr.mxu0 0.0
    %622 = vmatpush1.xpose.msra.mxu0 0.0
    %623 = vmatprep.subr.mxu0 0.0
    %624 = vmatpush1.xpose.msra.mxu0 0.0
    %625 = vmatprep.subr.mxu0 0.0
    %626 = vmatpush1.xpose.msra.mxu0 0.0
    %627 = vmatprep.subr.mxu0 0.0
    %628 = vmatpush1.xpose.msra.mxu0 0.0
    %629 = vmatprep.subr.mxu0 0.0
    %630 = vmatpush1.xpose.msra.mxu0 0.0
    %631 = vmatprep.subr.mxu0 0.0
    %632 = vmatpush1.xpose.msra.mxu0 0.0
    %633 = vmatprep.subr.mxu0 0.0
    %634 = vmatpush1.xpose.msra.mxu0 0.0
    %635 = vmatprep.subr.mxu0 0.0
    %636 = vmatpush1.xpose.msra.mxu0 0.0
    %637 = vmatprep.subr.mxu0 0.0
    %638 = vmatpush1.xpose.msra.mxu0 0.0
    %639 = vmatprep.subr.mxu0 0.0
    %640 = vmatpush1.xpose.msra.mxu0 0.0
    %641 = vmatprep.subr.mxu0 0.0
    %642 = vmatpush1.xpose.msra.mxu0 0.0
    %643 = vmatprep.mubr.f32.mxu0 0.0
    %644 = vmatmul.mubr.f32.gmra.mrb[0].mxu0 %v570
    %v645 = vpop.f32.mrb[0].mxu0
    %v646 = vadd.f32 %v195, %v645
    %v647 = vpop.f32.mrb[0].mxu0
    %648 = vmatprep.mubr.f32.mxu0 0.0
    %649 = vmatmul.mubr.f32.gmra.mrb[0].mxu0 %v573
    %v650 = vpop.f32.mrb[0].mxu0
    %v651 = vadd.f32 %v196, %v650
    %v652 = vpop.f32.mrb[0].mxu0
    %653 = vdwg.mxu0
    %vm654 = vcmask 130048
    %v655 = vsel %vm654, %v646, -inf
    %656 = vmax.xlane.f32.xlu0 %v655
    %v657 = vpop.xlane.xlu0 %656
    %v658 = vsel %vm654, %v651, -inf
    %659 = vmax.xlane.f32.xlu0 %v658
    %v660 = vpop.xlane.xlu0 %659
    %v661 = vsub.f32 %v646, %v657
    %v662 = vsub.f32 %v651, %v660
    %v663 = vmul.f32 %v661, 1.442695
    %v664 = vpow.pop %v663
    %v665 = vmul.f32 %v662, 1.442695
    %v666 = vpow.pop %v665
    %v667 = vsel %vm654, %v664, 0.0
    %668 = vadd.xlane.f32.xlu0 %v667
    %v669 = vpop.xlane.xlu0 %668
    %v670 = vsel %vm654, %v666, 0.0
    %671 = vadd.xlane.f32.xlu0 %v670
    %v672 = vpop.xlane.xlu0 %671
    %v673 = vrcp.pop %v669
    %v674 = vrcp.pop %v672
    %v675 = vmul.f32 %v664, %v673
    %v676 = vmul.f32 %v666, %v674
    %677 = vrot.lane.b32.xlu0 %v553, 64
    %v678 = vpop.permute.xlu0 %677
    %679 = vrot.lane.b32.xlu0 %v558, 64
    %v680 = vpop.permute.xlu0 %679
    %v684 = vsel %vm654, %v675, 0
    %v687 = vsel %vm654, %v676, 0
    %689 = vmatprep.subr.mxu0 0.0
    %690 = vmatpush1.msra.mxu0 %v678
    %691 = vmatprep.subr.mxu0 0.0
    %692 = vmatpush1.msra.mxu0 %v680
    %693 = vmatprep.subr.mxu0 0.0
    %694 = vmatpush1.msra.mxu0 0.0
    %695 = vmatprep.subr.mxu0 0.0
    %696 = vmatpush1.msra.mxu0 0.0
    %697 = vmatprep.subr.mxu0 0.0
    %698 = vmatpush1.msra.mxu0 0.0
    %699 = vmatprep.subr.mxu0 0.0
    %700 = vmatpush1.msra.mxu0 0.0
    %701 = vmatprep.subr.mxu0 0.0
    %702 = vmatpush1.msra.mxu0 0.0
    %703 = vmatprep.subr.mxu0 0.0
    %704 = vmatpush1.msra.mxu0 0.0
    %705 = vmatprep.subr.mxu0 0.0
    %706 = vmatpush1.msra.mxu0 0.0
    %707 = vmatprep.subr.mxu0 0.0
    %708 = vmatpush1.msra.mxu0 0.0
    %709 = vmatprep.subr.mxu0 0.0
    %710 = vmatpush1.msra.mxu0 0.0
    %711 = vmatprep.subr.mxu0 0.0
    %712 = vmatpush1.msra.mxu0 0.0
    %713 = vmatprep.subr.mxu0 0.0
    %714 = vmatpush1.msra.mxu0 0.0
    %715 = vmatprep.subr.mxu0 0.0
    %716 = vmatpush1.msra.mxu0 0.0
    %717 = vmatprep.subr.mxu0 0.0
    %718 = vmatpush1.msra.mxu0 0.0
    %719 = vmatprep.subr.mxu0 0.0
    %720 = vmatpush1.msra.mxu0 0.0
    %721 = vmatprep.subr.mxu0 0.0
    %722 = vmatpush1.msra.mxu0 0.0
    %723 = vmatprep.subr.mxu0 0.0
    %724 = vmatpush1.msra.mxu0 0.0
    %725 = vmatprep.subr.mxu0 0.0
    %726 = vmatpush1.msra.mxu0 0.0
    %727 = vmatprep.subr.mxu0 0.0
    %728 = vmatpush1.msra.mxu0 0.0
    %729 = vmatprep.subr.mxu0 0.0
    %730 = vmatpush1.msra.mxu0 0.0
    %731 = vmatprep.subr.mxu0 0.0
    %732 = vmatpush1.msra.mxu0 0.0
    %733 = vmatprep.subr.mxu0 0.0
    %734 = vmatpush1.msra.mxu0 0.0
    %735 = vmatprep.subr.mxu0 0.0
    %736 = vmatpush1.msra.mxu0 0.0
    %737 = vmatprep.subr.mxu0 0.0
    %738 = vmatpush1.msra.mxu0 0.0
    %739 = vmatprep.subr.mxu0 0.0
    %740 = vmatpush1.msra.mxu0 0.0
    %741 = vmatprep.subr.mxu0 0.0
    %742 = vmatpush1.msra.mxu0 0.0
    %743 = vmatprep.subr.mxu0 0.0
    %744 = vmatpush1.msra.mxu0 0.0
    %745 = vmatprep.subr.mxu0 0.0
    %746 = vmatpush1.msra.mxu0 0.0
    %747 = vmatprep.subr.mxu0 0.0
    %748 = vmatpush1.msra.mxu0 0.0
    %749 = vmatprep.subr.mxu0 0.0
    %750 = vmatpush1.msra.mxu0 0.0
    %751 = vmatprep.subr.mxu0 0.0
    %752 = vmatpush1.msra.mxu0 0.0
    %753 = vmatprep.mubr.f32.mxu0 0.0
    %754 = vmatmul.mubr.f32.gmra.mrb[0].mxu0 %v684
    %v755 = vpop.f32.mrb[0].mxu0
    %v756 = vadd.f32 0.0, %v755
    %v757 = vpop.f32.mrb[0].mxu0
    %758 = vmatprep.mubr.f32.mxu0 0.0
    %759 = vmatmul.mubr.f32.gmra.mrb[0].mxu0 %v687
    %v760 = vpop.f32.mrb[0].mxu0
    %v761 = vadd.f32 0.0, %v760
    %v762 = vpop.f32.mrb[0].mxu0
    %763 = vdwg.mxu0
    %764 = vrot.lane.b32.xlu0 %v561, 120
    %v765 = vpop.permute.xlu0 %764
    %766 = vrot.lane.b32.xlu0 %v562, 120
    %v767 = vpop.permute.xlu0 %766
    %768 = vrot.lane.b32.xlu0 %v553, 88
    %v769 = vpop.permute.xlu0 %768
    %770 = vrot.lane.b32.xlu0 %v558, 88
    %v771 = vpop.permute.xlu0 %770
    %v772 = vsel %vm205, %v765, 0
    %v774 = vsel %vm205, %v767, 0
    %v776 = vsel %vm205, %v769, 0
    %v778 = vsel %vm205, %v771, 0
    %780 = vmatprep.subr.mxu0 0.0
    %781 = vmatpush1.xpose.msra.mxu0 %v776
    %782 = vmatprep.subr.mxu0 0.0
    %783 = vmatpush1.xpose.msra.mxu0 %v778
    %784 = vmatprep.subr.mxu0 0.0
    %785 = vmatpush1.xpose.msra.mxu0 0.0
    %786 = vmatprep.subr.mxu0 0.0
    %787 = vmatpush1.xpose.msra.mxu0 0.0
    %788 = vmatprep.subr.mxu0 0.0
    %789 = vmatpush1.xpose.msra.mxu0 0.0
    %790 = vmatprep.subr.mxu0 0.0
    %791 = vmatpush1.xpose.msra.mxu0 0.0
    %792 = vmatprep.subr.mxu0 0.0
    %793 = vmatpush1.xpose.msra.mxu0 0.0
    %794 = vmatprep.subr.mxu0 0.0
    %795 = vmatpush1.xpose.msra.mxu0 0.0
    %796 = vmatprep.subr.mxu0 0.0
    %797 = vmatpush1.xpose.msra.mxu0 0.0
    %798 = vmatprep.subr.mxu0 0.0
    %799 = vmatpush1.xpose.msra.mxu0 0.0
    %800 = vmatprep.subr.mxu0 0.0
    %801 = vmatpush1.xpose.msra.mxu0 0.0
    %802 = vmatprep.subr.mxu0 0.0
    %803 = vmatpush1.xpose.msra.mxu0 0.0
    %804 = vmatprep.subr.mxu0 0.0
    %805 = vmatpush1.xpose.msra.mxu0 0.0
    %806 = vmatprep.subr.mxu0 0.0
    %807 = vmatpush1.xpose.msra.mxu0 0.0
    %808 = vmatprep.subr.mxu0 0.0
    %809 = vmatpush1.xpose.msra.mxu0 0.0
    %810 = vmatprep.subr.mxu0 0.0
    %811 = vmatpush1.xpose.msra.mxu0 0.0
    %812 = vmatprep.subr.mxu0 0.0
    %813 = vmatpush1.xpose.msra.mxu0 0.0
    %814 = vmatprep.subr.mxu0 0.0
    %815 = vmatpush1.xpose.msra.mxu0 0.0
    %816 = vmatprep.subr.mxu0 0.0
    %817 = vmatpush1.xpose.msra.mxu0 0.0
    %818 = vmatprep.subr.mxu0 0.0
    %819 = vmatpush1.xpose.msra.mxu0 0.0
    %820 = vmatprep.subr.mxu0 0.0
    %821 = vmatpush1.xpose.msra.mxu0 0.0
    %822 = vmatprep.subr.mxu0 0.0
    %823 = vmatpush1.xpose.msra.mxu0 0.0
    %824 = vmatprep.subr.mxu0 0.0
    %825 = vmatpush1.xpose.msra.mxu0 0.0
    %826 = vmatprep.subr.mxu0 0.0
    %827 = vmatpush1.xpose.msra.mxu0 0.0
    %828 = vmatprep.subr.mxu0 0.0
    %829 = vmatpush1.xpose.msra.mxu0 0.0
    %830 = vmatprep.subr.mxu0 0.0
    %831 = vmatpush1.xpose.msra.mxu0 0.0
    %832 = vmatprep.subr.mxu0 0.0
    %833 = vmatpush1.xpose.msra.mxu0 0.0
    %834 = vmatprep.subr.mxu0 0.0
    %835 = vmatpush1.xpose.msra.mxu0 0.0
    %836 = vmatprep.subr.mxu0 0.0
    %837 = vmatpush1.xpose.msra.mxu0 0.0
    %838 = vmatprep.subr.mxu0 0.0
    %839 = vmatpush1.xpose.msra.mxu0 0.0
    %840 = vmatprep.subr.mxu0 0.0
    %841 = vmatpush1.xpose.msra.mxu0 0.0
    %842 = vmatprep.subr.mxu0 0.0
    %843 = vmatpush1.xpose.msra.mxu0 0.0
    %844 = vmatprep.mubr.f32.mxu0 0.0
    %845 = vmatmul.mubr.f32.gmra.mrb[0].mxu0 %v772
    %v846 = vpop.f32.mrb[0].mxu0
    %v847 = vadd.f32 %v195, %v846
    %v848 = vpop.f32.mrb[0].mxu0
    %849 = vmatprep.mubr.f32.mxu0 0.0
    %850 = vmatmul.mubr.f32.gmra.mrb[0].mxu0 %v774
    %v851 = vpop.f32.mrb[0].mxu0
    %v852 = vadd.f32 %v196, %v851
    %v853 = vpop.f32.mrb[0].mxu0
    %854 = vdwg.mxu0
    %v855 = vsel %vm654, %v847, -inf
    %856 = vmax.xlane.f32.xlu0 %v855
    %v857 = vpop.xlane.xlu0 %856
    %v858 = vsel %vm654, %v852, -inf
    %859 = vmax.xlane.f32.xlu0 %v858
    %v860 = vpop.xlane.xlu0 %859
    %v861 = vsub.f32 %v847, %v857
    %v862 = vsub.f32 %v852, %v860
    %v863 = vmul.f32 %v861, 1.442695
    %v864 = vpow.pop %v863
    %v865 = vmul.f32 %v862, 1.442695
    %v866 = vpow.pop %v865
    %v867 = vsel %vm654, %v864, 0.0
    %868 = vadd.xlane.f32.xlu0 %v867
    %v869 = vpop.xlane.xlu0 %868
    %v870 = vsel %vm654, %v866, 0.0
    %871 = vadd.xlane.f32.xlu0 %v870
    %v872 = vpop.xlane.xlu0 %871
    %v873 = vrcp.pop %v869
    %v874 = vrcp.pop %v872
    %v875 = vmul.f32 %v864, %v873
    %v876 = vmul.f32 %v866, %v874
    %877 = vrot.lane.b32.xlu0 %v553, 56
    %v878 = vpop.permute.xlu0 %877
    %879 = vrot.lane.b32.xlu0 %v558, 56
    %v880 = vpop.permute.xlu0 %879
    %v884 = vsel %vm654, %v875, 0
    %v887 = vsel %vm654, %v876, 0
    %889 = vmatprep.subr.mxu0 0.0
    %890 = vmatpush1.msra.mxu0 %v878
    %891 = vmatprep.subr.mxu0 0.0
    %892 = vmatpush1.msra.mxu0 %v880
    %893 = vmatprep.subr.mxu0 0.0
    %894 = vmatpush1.msra.mxu0 0.0
    %895 = vmatprep.subr.mxu0 0.0
    %896 = vmatpush1.msra.mxu0 0.0
    %897 = vmatprep.subr.mxu0 0.0
    %898 = vmatpush1.msra.mxu0 0.0
    %899 = vmatprep.subr.mxu0 0.0
    %900 = vmatpush1.msra.mxu0 0.0
    %901 = vmatprep.subr.mxu0 0.0
    %902 = vmatpush1.msra.mxu0 0.0
    %903 = vmatprep.subr.mxu0 0.0
    %904 = vmatpush1.msra.mxu0 0.0
    %905 = vmatprep.subr.mxu0 0.0
    %906 = vmatpush1.msra.mxu0 0.0
    %907 = vmatprep.subr.mxu0 0.0
    %908 = vmatpush1.msra.mxu0 0.0
    %909 = vmatprep.subr.mxu0 0.0
    %910 = vmatpush1.msra.mxu0 0.0
    %911 = vmatprep.subr.mxu0 0.0
    %912 = vmatpush1.msra.mxu0 0.0
    %913 = vmatprep.subr.mxu0 0.0
    %914 = vmatpush1.msra.mxu0 0.0
    %915 = vmatprep.subr.mxu0 0.0
    %916 = vmatpush1.msra.mxu0 0.0
    %917 = vmatprep.subr.mxu0 0.0
    %918 = vmatpush1.msra.mxu0 0.0
    %919 = vmatprep.subr.mxu0 0.0
    %920 = vmatpush1.msra.mxu0 0.0
    %921 = vmatprep.subr.mxu0 0.0
    %922 = vmatpush1.msra.mxu0 0.0
    %923 = vmatprep.subr.mxu0 0.0
    %924 = vmatpush1.msra.mxu0 0.0
    %925 = vmatprep.subr.mxu0 0.0
    %926 = vmatpush1.msra.mxu0 0.0
    %927 = vmatprep.subr.mxu0 0.0
    %928 = vmatpush1.msra.mxu0 0.0
    %929 = vmatprep.subr.mxu0 0.0
    %930 = vmatpush1.msra.mxu0 0.0
    %931 = vmatprep.subr.mxu0 0.0
    %932 = vmatpush1.msra.mxu0 0.0
    %933 = vmatprep.subr.mxu0 0.0
    %934 = vmatpush1.msra.mxu0 0.0
    %935 = vmatprep.subr.mxu0 0.0
    %936 = vmatpush1.msra.mxu0 0.0
    %937 = vmatprep.subr.mxu0 0.0
    %938 = vmatpush1.msra.mxu0 0.0
    %939 = vmatprep.subr.mxu0 0.0
    %940 = vmatpush1.msra.mxu0 0.0
    %941 = vmatprep.subr.mxu0 0.0
    %942 = vmatpush1.msra.mxu0 0.0
    %943 = vmatprep.subr.mxu0 0.0
    %944 = vmatpush1.msra.mxu0 0.0
    %945 = vmatprep.subr.mxu0 0.0
    %946 = vmatpush1.msra.mxu0 0.0
    %947 = vmatprep.subr.mxu0 0.0
    %948 = vmatpush1.msra.mxu0 0.0
    %949 = vmatprep.subr.mxu0 0.0
    %950 = vmatpush1.msra.mxu0 0.0
    %951 = vmatprep.subr.mxu0 0.0
    %952 = vmatpush1.msra.mxu0 0.0
    %953 = vmatprep.mubr.f32.mxu0 0.0
    %954 = vmatmul.mubr.f32.gmra.mrb[0].mxu0 %v884
    %v955 = vpop.f32.mrb[0].mxu0
    %v956 = vadd.f32 0.0, %v955
    %v957 = vpop.f32.mrb[0].mxu0
    %958 = vmatprep.mubr.f32.mxu0 0.0
    %959 = vmatmul.mubr.f32.gmra.mrb[0].mxu0 %v887
    %v960 = vpop.f32.mrb[0].mxu0
    %v961 = vadd.f32 0.0, %v960
    %v962 = vpop.f32.mrb[0].mxu0
    %963 = vdwg.mxu0
    %964 = vrot.lane.b32.xlu0 %v561, 112
    %v965 = vpop.permute.xlu0 %964
    %966 = vrot.lane.b32.xlu0 %v562, 112
    %v967 = vpop.permute.xlu0 %966
    %968 = vrot.lane.b32.xlu0 %v553, 80
    %v969 = vpop.permute.xlu0 %968
    %970 = vrot.lane.b32.xlu0 %v558, 80
    %v971 = vpop.permute.xlu0 %970
    %v972 = vsel %vm205, %v965, 0
    %v974 = vsel %vm205, %v967, 0
    %v976 = vsel %vm205, %v969, 0
    %v978 = vsel %vm205, %v971, 0
    %980 = vmatprep.subr.mxu0 0.0
    %981 = vmatpush1.xpose.msra.mxu0 %v976
    %982 = vmatprep.subr.mxu0 0.0
    %983 = vmatpush1.xpose.msra.mxu0 %v978
    %984 = vmatprep.subr.mxu0 0.0
    %985 = vmatpush1.xpose.msra.mxu0 0.0
    %986 = vmatprep.subr.mxu0 0.0
    %987 = vmatpush1.xpose.msra.mxu0 0.0
    %988 = vmatprep.subr.mxu0 0.0
    %989 = vmatpush1.xpose.msra.mxu0 0.0
    %990 = vmatprep.subr.mxu0 0.0
    %991 = vmatpush1.xpose.msra.mxu0 0.0
    %992 = vmatprep.subr.mxu0 0.0
    %993 = vmatpush1.xpose.msra.mxu0 0.0
    %994 = vmatprep.subr.mxu0 0.0
    %995 = vmatpush1.xpose.msra.mxu0 0.0
    %996 = vmatprep.subr.mxu0 0.0
    %997 = vmatpush1.xpose.msra.mxu0 0.0
    %998 = vmatprep.subr.mxu0 0.0
    %999 = vmatpush1.xpose.msra.mxu0 0.0
    %1000 = vmatprep.subr.mxu0 0.0
    %1001 = vmatpush1.xpose.msra.mxu0 0.0
    %1002 = vmatprep.subr.mxu0 0.0
    %1003 = vmatpush1.xpose.msra.mxu0 0.0
    %1004 = vmatprep.subr.mxu0 0.0
    %1005 = vmatpush1.xpose.msra.mxu0 0.0
    %1006 = vmatprep.subr.mxu0 0.0
    %1007 = vmatpush1.xpose.msra.mxu0 0.0
    %1008 = vmatprep.subr.mxu0 0.0
    %1009 = vmatpush1.xpose.msra.mxu0 0.0
    %1010 = vmatprep.subr.mxu0 0.0
    %1011 = vmatpush1.xpose.msra.mxu0 0.0
    %1012 = vmatprep.subr.mxu0 0.0
    %1013 = vmatpush1.xpose.msra.mxu0 0.0
    %1014 = vmatprep.subr.mxu0 0.0
    %1015 = vmatpush1.xpose.msra.mxu0 0.0
    %1016 = vmatprep.subr.mxu0 0.0
    %1017 = vmatpush1.xpose.msra.mxu0 0.0
    %1018 = vmatprep.subr.mxu0 0.0
    %1019 = vmatpush1.xpose.msra.mxu0 0.0
    %1020 = vmatprep.subr.mxu0 0.0
    %1021 = vmatpush1.xpose.msra.mxu0 0.0
    %1022 = vmatprep.subr.mxu0 0.0
    %1023 = vmatpush1.xpose.msra.mxu0 0.0
    %1024 = vmatprep.subr.mxu0 0.0
    %1025 = vmatpush1.xpose.msra.mxu0 0.0
    %1026 = vmatprep.subr.mxu0 0.0
    %1027 = vmatpush1.xpose.msra.mxu0 0.0
    %1028 = vmatprep.subr.mxu0 0.0
    %1029 = vmatpush1.xpose.msra.mxu0 0.0
    %1030 = vmatprep.subr.mxu0 0.0
    %1031 = vmatpush1.xpose.msra.mxu0 0.0
    %1032 = vmatprep.subr.mxu0 0.0
    %1033 = vmatpush1.xpose.msra.mxu0 0.0
    %1034 = vmatprep.subr.mxu0 0.0
    %1035 = vmatpush1.xpose.msra.mxu0 0.0
    %1036 = vmatprep.subr.mxu0 0.0
    %1037 = vmatpush1.xpose.msra.mxu0 0.0
    %1038 = vmatprep.subr.mxu0 0.0
    %1039 = vmatpush1.xpose.msra.mxu0 0.0
    %1040 = vmatprep.subr.mxu0 0.0
    %1041 = vmatpush1.xpose.msra.mxu0 0.0
    %1042 = vmatprep.subr.mxu0 0.0
    %1043 = vmatpush1.xpose.msra.mxu0 0.0
    %1044 = vmatprep.mubr.f32.mxu0 0.0
    %1045 = vmatmul.mubr.f32.gmra.mrb[0].mxu0 %v972
    %v1046 = vpop.f32.mrb[0].mxu0
    %v1047 = vadd.f32 %v195, %v1046
    %v1048 = vpop.f32.mrb[0].mxu0
    %1049 = vmatprep.mubr.f32.mxu0 0.0
    %1050 = vmatmul.mubr.f32.gmra.mrb[0].mxu0 %v974
    %v1051 = vpop.f32.mrb[0].mxu0
    %v1052 = vadd.f32 %v196, %v1051
    %v1053 = vpop.f32.mrb[0].mxu0
    %1054 = vdwg.mxu0
    %v1055 = vsel %vm654, %v1047, -inf
    %1056 = vmax.xlane.f32.xlu0 %v1055
    %v1057 = vpop.xlane.xlu0 %1056
    %v1058 = vsel %vm654, %v1052, -inf
    %1059 = vmax.xlane.f32.xlu0 %v1058
    %v1060 = vpop.xlane.xlu0 %1059
    %v1061 = vsub.f32 %v1047, %v1057
    %v1062 = vsub.f32 %v1052, %v1060
    %v1063 = vmul.f32 %v1061, 1.442695
    %v1064 = vpow.pop %v1063
    %v1065 = vmul.f32 %v1062, 1.442695
    %v1066 = vpow.pop %v1065
    %v1067 = vsel %vm654, %v1064, 0.0
    %1068 = vadd.xlane.f32.xlu0 %v1067
    %v1069 = vpop.xlane.xlu0 %1068
    %v1070 = vsel %vm654, %v1066, 0.0
    %1071 = vadd.xlane.f32.xlu0 %v1070
    %v1072 = vpop.xlane.xlu0 %1071
    %v1073 = vrcp.pop %v1069
    %v1074 = vrcp.pop %v1072
    %v1075 = vmul.f32 %v1064, %v1073
    %v1076 = vmul.f32 %v1066, %v1074
    %1077 = vrot.lane.b32.xlu0 %v553, 48
    %v1078 = vpop.permute.xlu0 %1077
    %1079 = vrot.lane.b32.xlu0 %v558, 48
    %v1080 = vpop.permute.xlu0 %1079
    %v1084 = vsel %vm654, %v1075, 0
    %v1087 = vsel %vm654, %v1076, 0
    %1089 = vmatprep.subr.mxu0 0.0
    %1090 = vmatpush1.msra.mxu0 %v1078
    %1091 = vmatprep.subr.mxu0 0.0
    %1092 = vmatpush1.msra.mxu0 %v1080
    %1093 = vmatprep.subr.mxu0 0.0
    %1094 = vmatpush1.msra.mxu0 0.0
    %1095 = vmatprep.subr.mxu0 0.0
    %1096 = vmatpush1.msra.mxu0 0.0
    %1097 = vmatprep.subr.mxu0 0.0
    %1098 = vmatpush1.msra.mxu0 0.0
    %1099 = vmatprep.subr.mxu0 0.0
    %1100 = vmatpush1.msra.mxu0 0.0
    %1101 = vmatprep.subr.mxu0 0.0
    %1102 = vmatpush1.msra.mxu0 0.0
    %1103 = vmatprep.subr.mxu0 0.0
    %1104 = vmatpush1.msra.mxu0 0.0
    %1105 = vmatprep.subr.mxu0 0.0
    %1106 = vmatpush1.msra.mxu0 0.0
    %1107 = vmatprep.subr.mxu0 0.0
    %1108 = vmatpush1.msra.mxu0 0.0
    %1109 = vmatprep.subr.mxu0 0.0
    %1110 = vmatpush1.msra.mxu0 0.0
    %1111 = vmatprep.subr.mxu0 0.0
    %1112 = vmatpush1.msra.mxu0 0.0
    %1113 = vmatprep.subr.mxu0 0.0
    %1114 = vmatpush1.msra.mxu0 0.0
    %1115 = vmatprep.subr.mxu0 0.0
    %1116 = vmatpush1.msra.mxu0 0.0
    %1117 = vmatprep.subr.mxu0 0.0
    %1118 = vmatpush1.msra.mxu0 0.0
    %1119 = vmatprep.subr.mxu0 0.0
    %1120 = vmatpush1.msra.mxu0 0.0
    %1121 = vmatprep.subr.mxu0 0.0
    %1122 = vmatpush1.msra.mxu0 0.0
    %1123 = vmatprep.subr.mxu0 0.0
    %1124 = vmatpush1.msra.mxu0 0.0
    %1125 = vmatprep.subr.mxu0 0.0
    %1126 = vmatpush1.msra.mxu0 0.0
    %1127 = vmatprep.subr.mxu0 0.0
    %1128 = vmatpush1.msra.mxu0 0.0
    %1129 = vmatprep.subr.mxu0 0.0
    %1130 = vmatpush1.msra.mxu0 0.0
    %1131 = vmatprep.subr.mxu0 0.0
    %1132 = vmatpush1.msra.mxu0 0.0
    %1133 = vmatprep.subr.mxu0 0.0
    %1134 = vmatpush1.msra.mxu0 0.0
    %1135 = vmatprep.subr.mxu0 0.0
    %1136 = vmatpush1.msra.mxu0 0.0
    %1137 = vmatprep.subr.mxu0 0.0
    %1138 = vmatpush1.msra.mxu0 0.0
    %1139 = vmatprep.subr.mxu0 0.0
    %1140 = vmatpush1.msra.mxu0 0.0
    %1141 = vmatprep.subr.mxu0 0.0
    %1142 = vmatpush1.msra.mxu0 0.0
    %1143 = vmatprep.subr.mxu0 0.0
    %1144 = vmatpush1.msra.mxu0 0.0
    %1145 = vmatprep.subr.mxu0 0.0
    %1146 = vmatpush1.msra.mxu0 0.0
    %1147 = vmatprep.subr.mxu0 0.0
    %1148 = vmatpush1.msra.mxu0 0.0
    %1149 = vmatprep.subr.mxu0 0.0
    %1150 = vmatpush1.msra.mxu0 0.0
    %1151 = vmatprep.subr.mxu0 0.0
    %1152 = vmatpush1.msra.mxu0 0.0
    %1153 = vmatprep.mubr.f32.mxu0 0.0
    %1154 = vmatmul.mubr.f32.gmra.mrb[0].mxu0 %v1084
    %v1155 = vpop.f32.mrb[0].mxu0
    %v1156 = vadd.f32 0.0, %v1155
    %v1157 = vpop.f32.mrb[0].mxu0
    %1158 = vmatprep.mubr.f32.mxu0 0.0
    %1159 = vmatmul.mubr.f32.gmra.mrb[0].mxu0 %v1087
    %v1160 = vpop.f32.mrb[0].mxu0
    %v1161 = vadd.f32 0.0, %v1160
    %v1162 = vpop.f32.mrb[0].mxu0
    %1163 = vdwg.mxu0
    %1164 = vrot.lane.b32.xlu0 %v561, 104
    %v1165 = vpop.permute.xlu0 %1164
    %1166 = vrot.lane.b32.xlu0 %v562, 104
    %v1167 = vpop.permute.xlu0 %1166
    %1168 = vrot.lane.b32.xlu0 %v553, 72
    %v1169 = vpop.permute.xlu0 %1168
    %1170 = vrot.lane.b32.xlu0 %v558, 72
    %v1171 = vpop.permute.xlu0 %1170
    %v1172 = vsel %vm205, %v1165, 0
    %v1174 = vsel %vm205, %v1167, 0
    %v1176 = vsel %vm205, %v1169, 0
    %v1178 = vsel %vm205, %v1171, 0
    %1180 = vmatprep.subr.mxu0 0.0
    %1181 = vmatpush1.xpose.msra.mxu0 %v1176
    %1182 = vmatprep.subr.mxu0 0.0
    %1183 = vmatpush1.xpose.msra.mxu0 %v1178
    %1184 = vmatprep.subr.mxu0 0.0
    %1185 = vmatpush1.xpose.msra.mxu0 0.0
    %1186 = vmatprep.subr.mxu0 0.0
    %1187 = vmatpush1.xpose.msra.mxu0 0.0
    %1188 = vmatprep.subr.mxu0 0.0
    %1189 = vmatpush1.xpose.msra.mxu0 0.0
    %1190 = vmatprep.subr.mxu0 0.0
    %1191 = vmatpush1.xpose.msra.mxu0 0.0
    %1192 = vmatprep.subr.mxu0 0.0
    %1193 = vmatpush1.xpose.msra.mxu0 0.0
    %1194 = vmatprep.subr.mxu0 0.0
    %1195 = vmatpush1.xpose.msra.mxu0 0.0
    %1196 = vmatprep.subr.mxu0 0.0
    %1197 = vmatpush1.xpose.msra.mxu0 0.0
    %1198 = vmatprep.subr.mxu0 0.0
    %1199 = vmatpush1.xpose.msra.mxu0 0.0
    %1200 = vmatprep.subr.mxu0 0.0
    %1201 = vmatpush1.xpose.msra.mxu0 0.0
    %1202 = vmatprep.subr.mxu0 0.0
    %1203 = vmatpush1.xpose.msra.mxu0 0.0
    %1204 = vmatprep.subr.mxu0 0.0
    %1205 = vmatpush1.xpose.msra.mxu0 0.0
    %1206 = vmatprep.subr.mxu0 0.0
    %1207 = vmatpush1.xpose.msra.mxu0 0.0
    %1208 = vmatprep.subr.mxu0 0.0
    %1209 = vmatpush1.xpose.msra.mxu0 0.0
    %1210 = vmatprep.subr.mxu0 0.0
    %1211 = vmatpush1.xpose.msra.mxu0 0.0
    %1212 = vmatprep.subr.mxu0 0.0
    %1213 = vmatpush1.xpose.msra.mxu0 0.0
    %1214 = vmatprep.subr.mxu0 0.0
    %1215 = vmatpush1.xpose.msra.mxu0 0.0
    %1216 = vmatprep.subr.mxu0 0.0
    %1217 = vmatpush1.xpose.msra.mxu0 0.0
    %1218 = vmatprep.subr.mxu0 0.0
    %1219 = vmatpush1.xpose.msra.mxu0 0.0
    %1220 = vmatprep.subr.mxu0 0.0
    %1221 = vmatpush1.xpose.msra.mxu0 0.0
    %1222 = vmatprep.subr.mxu0 0.0
    %1223 = vmatpush1.xpose.msra.mxu0 0.0
    %1224 = vmatprep.subr.mxu0 0.0
    %1225 = vmatpush1.xpose.msra.mxu0 0.0
    %1226 = vmatprep.subr.mxu0 0.0
    %1227 = vmatpush1.xpose.msra.mxu0 0.0
    %1228 = vmatprep.subr.mxu0 0.0
    %1229 = vmatpush1.xpose.msra.mxu0 0.0
    %1230 = vmatprep.subr.mxu0 0.0
    %1231 = vmatpush1.xpose.msra.mxu0 0.0
    %1232 = vmatprep.subr.mxu0 0.0
    %1233 = vmatpush1.xpose.msra.mxu0 0.0
    %1234 = vmatprep.subr.mxu0 0.0
    %1235 = vmatpush1.xpose.msra.mxu0 0.0
    %1236 = vmatprep.subr.mxu0 0.0
    %1237 = vmatpush1.xpose.msra.mxu0 0.0
    %1238 = vmatprep.subr.mxu0 0.0
    %1239 = vmatpush1.xpose.msra.mxu0 0.0
    %1240 = vmatprep.subr.mxu0 0.0
    %1241 = vmatpush1.xpose.msra.mxu0 0.0
    %1242 = vmatprep.subr.mxu0 0.0
    %1243 = vmatpush1.xpose.msra.mxu0 0.0
    %1244 = vmatprep.mubr.f32.mxu0 0.0
    %1245 = vmatmul.mubr.f32.gmra.mrb[0].mxu0 %v1172
    %v1246 = vpop.f32.mrb[0].mxu0
    %v1247 = vadd.f32 %v195, %v1246
    %v1248 = vpop.f32.mrb[0].mxu0
    %1249 = vmatprep.mubr.f32.mxu0 0.0
    %1250 = vmatmul.mubr.f32.gmra.mrb[0].mxu0 %v1174
    %v1251 = vpop.f32.mrb[0].mxu0
    %v1252 = vadd.f32 %v196, %v1251
    %v1253 = vpop.f32.mrb[0].mxu0
    %1254 = vdwg.mxu0
    %v1255 = vsel %vm654, %v1247, -inf
    %1256 = vmax.xlane.f32.xlu0 %v1255
    %v1257 = vpop.xlane.xlu0 %1256
    %v1258 = vsel %vm654, %v1252, -inf
    %1259 = vmax.xlane.f32.xlu0 %v1258
    %v1260 = vpop.xlane.xlu0 %1259
    %v1261 = vsub.f32 %v1247, %v1257
    %v1262 = vsub.f32 %v1252, %v1260
    %v1263 = vmul.f32 %v1261, 1.442695
    %v1264 = vpow.pop %v1263
    %v1265 = vmul.f32 %v1262, 1.442695
    %v1266 = vpow.pop %v1265
    %v1267 = vsel %vm654, %v1264, 0.0
    %1268 = vadd.xlane.f32.xlu0 %v1267
    %v1269 = vpop.xlane.xlu0 %1268
    %v1270 = vsel %vm654, %v1266, 0.0
    %1271 = vadd.xlane.f32.xlu0 %v1270
    %v1272 = vpop.xlane.xlu0 %1271
    %v1273 = vrcp.pop %v1269
    %v1274 = vrcp.pop %v1272
    %v1275 = vmul.f32 %v1264, %v1273
    %v1276 = vmul.f32 %v1266, %v1274
    %1277 = vrot.lane.b32.xlu0 %v553, 40
    %v1278 = vpop.permute.xlu0 %1277
    %1279 = vrot.lane.b32.xlu0 %v558, 40
    %v1280 = vpop.permute.xlu0 %1279
    %v1284 = vsel %vm654, %v1275, 0
    %v1287 = vsel %vm654, %v1276, 0
    %1289 = vmatprep.subr.mxu0 0.0
    %1290 = vmatpush1.msra.mxu0 %v1278
    %1291 = vmatprep.subr.mxu0 0.0
    %1292 = vmatpush1.msra.mxu0 %v1280
    %1293 = vmatprep.subr.mxu0 0.0
    %1294 = vmatpush1.msra.mxu0 0.0
    %1295 = vmatprep.subr.mxu0 0.0
    %1296 = vmatpush1.msra.mxu0 0.0
    %1297 = vmatprep.subr.mxu0 0.0
    %1298 = vmatpush1.msra.mxu0 0.0
    %1299 = vmatprep.subr.mxu0 0.0
    %1300 = vmatpush1.msra.mxu0 0.0
    %1301 = vmatprep.subr.mxu0 0.0
    %1302 = vmatpush1.msra.mxu0 0.0
    %1303 = vmatprep.subr.mxu0 0.0
    %1304 = vmatpush1.msra.mxu0 0.0
    %1305 = vmatprep.subr.mxu0 0.0
    %1306 = vmatpush1.msra.mxu0 0.0
    %1307 = vmatprep.subr.mxu0 0.0
    %1308 = vmatpush1.msra.mxu0 0.0
    %1309 = vmatprep.subr.mxu0 0.0
    %1310 = vmatpush1.msra.mxu0 0.0
    %1311 = vmatprep.subr.mxu0 0.0
    %1312 = vmatpush1.msra.mxu0 0.0
    %1313 = vmatprep.subr.mxu0 0.0
    %1314 = vmatpush1.msra.mxu0 0.0
    %1315 = vmatprep.subr.mxu0 0.0
    %1316 = vmatpush1.msra.mxu0 0.0
    %1317 = vmatprep.subr.mxu0 0.0
    %1318 = vmatpush1.msra.mxu0 0.0
    %1319 = vmatprep.subr.mxu0 0.0
    %1320 = vmatpush1.msra.mxu0 0.0
    %1321 = vmatprep.subr.mxu0 0.0
    %1322 = vmatpush1.msra.mxu0 0.0
    %1323 = vmatprep.subr.mxu0 0.0
    %1324 = vmatpush1.msra.mxu0 0.0
    %1325 = vmatprep.subr.mxu0 0.0
    %1326 = vmatpush1.msra.mxu0 0.0
    %1327 = vmatprep.subr.mxu0 0.0
    %1328 = vmatpush1.msra.mxu0 0.0
    %1329 = vmatprep.subr.mxu0 0.0
    %1330 = vmatpush1.msra.mxu0 0.0
    %1331 = vmatprep.subr.mxu0 0.0
    %1332 = vmatpush1.msra.mxu0 0.0
    %1333 = vmatprep.subr.mxu0 0.0
    %1334 = vmatpush1.msra.mxu0 0.0
    %1335 = vmatprep.subr.mxu0 0.0
    %1336 = vmatpush1.msra.mxu0 0.0
    %1337 = vmatprep.subr.mxu0 0.0
    %1338 = vmatpush1.msra.mxu0 0.0
    %1339 = vmatprep.subr.mxu0 0.0
    %1340 = vmatpush1.msra.mxu0 0.0
    %1341 = vmatprep.subr.mxu0 0.0
    %1342 = vmatpush1.msra.mxu0 0.0
    %1343 = vmatprep.subr.mxu0 0.0
    %1344 = vmatpush1.msra.mxu0 0.0
    %1345 = vmatprep.subr.mxu0 0.0
    %1346 = vmatpush1.msra.mxu0 0.0
    %1347 = vmatprep.subr.mxu0 0.0
    %1348 = vmatpush1.msra.mxu0 0.0
    %1349 = vmatprep.subr.mxu0 0.0
    %1350 = vmatpush1.msra.mxu0 0.0
    %1351 = vmatprep.subr.mxu0 0.0
    %1352 = vmatpush1.msra.mxu0 0.0
    %1353 = vmatprep.mubr.f32.mxu0 0.0
    %1354 = vmatmul.mubr.f32.gmra.mrb[0].mxu0 %v1284
    %v1355 = vpop.f32.mrb[0].mxu0
    %v1356 = vadd.f32 0.0, %v1355
    %v1357 = vpop.f32.mrb[0].mxu0
    %1358 = vmatprep.mubr.f32.mxu0 0.0
    %1359 = vmatmul.mubr.f32.gmra.mrb[0].mxu0 %v1287
    %v1360 = vpop.f32.mrb[0].mxu0
    %v1361 = vadd.f32 0.0, %v1360
    %v1362 = vpop.f32.mrb[0].mxu0
    %1363 = vdwg.mxu0
    %1366 = vrot.lane.b32.xlu0 %v956, 8
    %v1367 = vpop.permute.xlu0 %1366
    %1368 = vrot.lane.b32.xlu0 %v961, 8
    %v1369 = vpop.permute.xlu0 %1368
    %1374 = vrot.lane.b32.xlu0 %v1156, 16
    %v1375 = vpop.permute.xlu0 %1374
    %1376 = vrot.lane.b32.xlu0 %v1161, 16
    %v1377 = vpop.permute.xlu0 %1376
    %1382 = vrot.lane.b32.xlu0 %v1356, 24
    %v1383 = vpop.permute.xlu0 %1382
    %1384 = vrot.lane.b32.xlu0 %v1361, 24
    %v1385 = vpop.permute.xlu0 %1384
    %v1388 = vsel %vm205, %v756, %v1367
    %v1389 = vsel %vm205, %v761, %v1369
    %v1390 = vsel %vm654, %v1388, %v1375
    %v1391 = vsel %vm654, %v1389, %v1377
    %vm1392 = vcmask 195584
    %v1393 = vsel %vm1392, %v1390, %v1383
    %v1394 = vsel %vm1392, %v1391, %v1385
    %v1395 = vld [vmem:[%s10] sm:$0xff]
    %v1396 = vld [vmem:[%s10 + $0x8] sm:$0xff]
    %v1397 = vld [vmem:[%s10 + $0x10] sm:$0xff]
    %v1398 = vld [vmem:[%s10 + $0x18] sm:$0xff]
    %v1399 = vld [vmem:[#allocation11] sm:$0x1]
    %v1401 = vlaneseq
    %v1402 = vshrl.u32 %v1401, 7
    %v1403 = vsub.s32 0, %v1402
    %v1404 = vrot.slane %v1399, %v1403
    %v1407 = vsel %vm300, %v1393, 0
    %v1410 = vsel %vm300, %v1394, 0
    %1412 = vmatprep.subr.mxu0 0.0
    %1413 = vmatpush1.msra.mxu0 %v1395
    %1414 = vmatprep.subr.mxu0 0.0
    %1415 = vmatpush1.msra.mxu0 %v1396
    %1416 = vmatprep.subr.mxu0 0.0
    %1417 = vmatpush1.msra.mxu0 %v1397
    %1418 = vmatprep.subr.mxu0 0.0
    %1419 = vmatpush1.msra.mxu0 %v1398
    %1420 = vmatprep.subr.mxu0 0.0
    %1421 = vmatpush1.msra.mxu0 0.0
    %1422 = vmatprep.subr.mxu0 0.0
    %1423 = vmatpush1.msra.mxu0 0.0
    %1424 = vmatprep.subr.mxu0 0.0
    %1425 = vmatpush1.msra.mxu0 0.0
    %1426 = vmatprep.subr.mxu0 0.0
    %1427 = vmatpush1.msra.mxu0 0.0
    %1428 = vmatprep.subr.mxu0 0.0
    %1429 = vmatpush1.msra.mxu0 0.0
    %1430 = vmatprep.subr.mxu0 0.0
    %1431 = vmatpush1.msra.mxu0 0.0
    %1432 = vmatprep.subr.mxu0 0.0
    %1433 = vmatpush1.msra.mxu0 0.0
    %1434 = vmatprep.subr.mxu0 0.0
    %1435 = vmatpush1.msra.mxu0 0.0
    %1436 = vmatprep.subr.mxu0 0.0
    %1437 = vmatpush1.msra.mxu0 0.0
    %1438 = vmatprep.subr.mxu0 0.0
    %1439 = vmatpush1.msra.mxu0 0.0
    %1440 = vmatprep.subr.mxu0 0.0
    %1441 = vmatpush1.msra.mxu0 0.0
    %1442 = vmatprep.subr.mxu0 0.0
    %1443 = vmatpush1.msra.mxu0 0.0
    %1444 = vmatprep.subr.mxu0 0.0
    %1445 = vmatpush1.msra.mxu0 0.0
    %1446 = vmatprep.subr.mxu0 0.0
    %1447 = vmatpush1.msra.mxu0 0.0
    %1448 = vmatprep.subr.mxu0 0.0
    %1449 = vmatpush1.msra.mxu0 0.0
    %1450 = vmatprep.subr.mxu0 0.0
    %1451 = vmatpush1.msra.mxu0 0.0
    %1452 = vmatprep.subr.mxu0 0.0
    %1453 = vmatpush1.msra.mxu0 0.0
    %1454 = vmatprep.subr.mxu0 0.0
    %1455 = vmatpush1.msra.mxu0 0.0
    %1456 = vmatprep.subr.mxu0 0.0
    %1457 = vmatpush1.msra.mxu0 0.0
    %1458 = vmatprep.subr.mxu0 0.0
    %1459 = vmatpush1.msra.mxu0 0.0
    %1460 = vmatprep.subr.mxu0 0.0
    %1461 = vmatpush1.msra.mxu0 0.0
    %1462 = vmatprep.subr.mxu0 0.0
    %1463 = vmatpush1.msra.mxu0 0.0
    %1464 = vmatprep.subr.mxu0 0.0
    %1465 = vmatpush1.msra.mxu0 0.0
    %1466 = vmatprep.subr.mxu0 0.0
    %1467 = vmatpush1.msra.mxu0 0.0
    %1468 = vmatprep.subr.mxu0 0.0
    %1469 = vmatpush1.msra.mxu0 0.0
    %1470 = vmatprep.subr.mxu0 0.0
    %1471 = vmatpush1.msra.mxu0 0.0
    %1472 = vmatprep.subr.mxu0 0.0
    %1473 = vmatpush1.msra.mxu0 0.0
    %1474 = vmatprep.subr.mxu0 0.0
    %1475 = vmatpush1.msra.mxu0 0.0
    %1476 = vmatprep.mubr.f32.mxu0 0.0
    %1477 = vmatmul.mubr.f32.gmra.mrb[0].mxu0 %v1407
    %v1478 = vpop.f32.mrb[0].mxu0
    %v1479 = vadd.f32 %v1404, %v1478
    %v1480 = vpop.f32.mrb[0].mxu0
    %1481 = vmatprep.mubr.f32.mxu0 0.0
    %1482 = vmatmul.mubr.f32.gmra.mrb[0].mxu0 %v1410
    %v1483 = vpop.f32.mrb[0].mxu0
    %v1484 = vadd.f32 %v1404, %v1483
    %v1485 = vpop.f32.mrb[0].mxu0
    %1486 = vdwg.mxu0
    %v1487 = vld [vmem:[%s12] sm:$0xff]
    %v1488 = vld [vmem:[%s12 + $0x8] sm:$0xff]
    %v1489 = vld [vmem:[%s12 + $0x10] sm:$0xff]
    %v1490 = vld [vmem:[%s12 + $0x18] sm:$0xff]
    %v1491 = vld [vmem:[#allocation13] sm:$0x1]
    %v1493 = vlaneseq
    %v1494 = vshrl.u32 %v1493, 7
    %v1495 = vsub.s32 0, %v1494
    %v1496 = vrot.slane %v1491, %v1495
    %v1499 = vsel %vm300, %v1479, 0
    %v1502 = vsel %vm300, %v1484, 0
    %1504 = vmatprep.subr.mxu0 0.0
    %1505 = vmatpush1.msra.mxu0 %v1487
    %1506 = vmatprep.subr.mxu0 0.0
    %1507 = vmatpush1.msra.mxu0 %v1488
    %1508 = vmatprep.subr.mxu0 0.0
    %1509 = vmatpush1.msra.mxu0 %v1489
    %1510 = vmatprep.subr.mxu0 0.0
    %1511 = vmatpush1.msra.mxu0 %v1490
    %1512 = vmatprep.subr.mxu0 0.0
    %1513 = vmatpush1.msra.mxu0 0.0
    %1514 = vmatprep.subr.mxu0 0.0
    %1515 = vmatpush1.msra.mxu0 0.0
    %1516 = vmatprep.subr.mxu0 0.0
    %1517 = vmatpush1.msra.mxu0 0.0
    %1518 = vmatprep.subr.mxu0 0.0
    %1519 = vmatpush1.msra.mxu0 0.0
    %1520 = vmatprep.subr.mxu0 0.0
    %1521 = vmatpush1.msra.mxu0 0.0
    %1522 = vmatprep.subr.mxu0 0.0
    %1523 = vmatpush1.msra.mxu0 0.0
    %1524 = vmatprep.subr.mxu0 0.0
    %1525 = vmatpush1.msra.mxu0 0.0
    %1526 = vmatprep.subr.mxu0 0.0
    %1527 = vmatpush1.msra.mxu0 0.0
    %1528 = vmatprep.subr.mxu0 0.0
    %1529 = vmatpush1.msra.mxu0 0.0
    %1530 = vmatprep.subr.mxu0 0.0
    %1531 = vmatpush1.msra.mxu0 0.0
    %1532 = vmatprep.subr.mxu0 0.0
    %1533 = vmatpush1.msra.mxu0 0.0
    %1534 = vmatprep.subr.mxu0 0.0
    %1535 = vmatpush1.msra.mxu0 0.0
    %1536 = vmatprep.subr.mxu0 0.0
    %1537 = vmatpush1.msra.mxu0 0.0
    %1538 = vmatprep.subr.mxu0 0.0
    %1539 = vmatpush1.msra.mxu0 0.0
    %1540 = vmatprep.subr.mxu0 0.0
    %1541 = vmatpush1.msra.mxu0 0.0
    %1542 = vmatprep.subr.mxu0 0.0
    %1543 = vmatpush1.msra.mxu0 0.0
    %1544 = vmatprep.subr.mxu0 0.0
    %1545 = vmatpush1.msra.mxu0 0.0
    %1546 = vmatprep.subr.mxu0 0.0
    %1547 = vmatpush1.msra.mxu0 0.0
    %1548 = vmatprep.subr.mxu0 0.0
    %1549 = vmatpush1.msra.mxu0 0.0
    %1550 = vmatprep.subr.mxu0 0.0
    %1551 = vmatpush1.msra.mxu0 0.0
    %1552 = vmatprep.subr.mxu0 0.0
    %1553 = vmatpush1.msra.mxu0 0.0
    %1554 = vmatprep.subr.mxu0 0.0
    %1555 = vmatpush1.msra.mxu0 0.0
    %1556 = vmatprep.subr.mxu0 0.0
    %1557 = vmatpush1.msra.mxu0 0.0
    %1558 = vmatprep.subr.mxu0 0.0
    %1559 = vmatpush1.msra.mxu0 0.0
    %1560 = vmatprep.subr.mxu0 0.0
    %1561 = vmatpush1.msra.mxu0 0.0
    %1562 = vmatprep.subr.mxu0 0.0
    %1563 = vmatpush1.msra.mxu0 0.0
    %1564 = vmatprep.subr.mxu0 0.0
    %1565 = vmatpush1.msra.mxu0 0.0
    %1566 = vmatprep.subr.mxu0 0.0
    %1567 = vmatpush1.msra.mxu0 0.0
    %1568 = vmatprep.mubr.f32.mxu0 0.0
    %1569 = vmatmul.mubr.f32.gmra.mrb[0].mxu0 %v1499
    %v1570 = vpop.f32.mrb[0].mxu0
    %v1571 = vadd.f32 %v1496, %v1570
    %v1572 = vpop.f32.mrb[0].mxu0
    %1573 = vmatprep.mubr.f32.mxu0 0.0
    %1574 = vmatmul.mubr.f32.gmra.mrb[0].mxu0 %v1502
    %v1575 = vpop.f32.mrb[0].mxu0
    %v1576 = vadd.f32 %v1496, %v1575
    %v1577 = vpop.f32.mrb[0].mxu0
    %1578 = vdwg.mxu0
    %v1579 = vmax.f32 %v1571, 0.0
    %v1580 = vmax.f32 %v1576, 0.0
    %v1581 = vld [vmem:[%s14] sm:$0xff]
    %v1582 = vld [vmem:[%s14 + $0x8] sm:$0xff]
    %v1583 = vld [vmem:[%s14 + $0x10] sm:$0xff]
    %v1584 = vld [vmem:[%s14 + $0x18] sm:$0xff]
    %v1585 = vld [vmem:[%s14 + $0x20] sm:$0xff]
    %v1586 = vld [vmem:[%s14 + $0x28] sm:$0xff]
    %v1587 = vld [vmem:[%s14 + $0x30] sm:$0xff]
    %v1588 = vld [vmem:[%s14 + $0x38] sm:$0xff]
    %v1589 = vld [vmem:[#allocation14] sm:$0x1]
    %v1591 = vlaneseq
    %v1592 = vshrl.u32 %v1591, 7
    %v1593 = vsub.s32 0, %v1592
    %v1594 = vrot.slane %v1589, %v1593
    %vm1596 = vcmask 523264
    %v1598 = vsel %vm1596, %v1579, 0
    %v1601 = vsel %vm1596, %v1580, 0
    %1603 = vmatprep.subr.mxu0 0.0
    %1604 = vmatpush1.msra.mxu0 %v1581
    %1605 = vmatprep.subr.mxu0 0.0
    %1606 = vmatpush1.msra.mxu0 %v1582
    %1607 = vmatprep.subr.mxu0 0.0
    %1608 = vmatpush1.msra.mxu0 %v1583
    %1609 = vmatprep.subr.mxu0 0.0
    %1610 = vmatpush1.msra.mxu0 %v1584
    %1611 = vmatprep.subr.mxu0 0.0
    %1612 = vmatpush1.msra.mxu0 %v1585
    %1613 = vmatprep.subr.mxu0 0.0
    %1614 = vmatpush1.msra.mxu0 %v1586
    %1615 = vmatprep.subr.mxu0 0.0
    %1616 = vmatpush1.msra.mxu0 %v1587
    %1617 = vmatprep.subr.mxu0 0.0
    %1618 = vmatpush1.msra.mxu0 %v1588
    %1619 = vmatprep.subr.mxu0 0.0
    %1620 = vmatpush1.msra.mxu0 0.0
    %1621 = vmatprep.subr.mxu0 0.0
    %1622 = vmatpush1.msra.mxu0 0.0
    %1623 = vmatprep.subr.mxu0 0.0
    %1624 = vmatpush1.msra.mxu0 0.0
    %1625 = vmatprep.subr.mxu0 0.0
    %1626 = vmatpush1.msra.mxu0 0.0
    %1627 = vmatprep.subr.mxu0 0.0
    %1628 = vmatpush1.msra.mxu0 0.0
    %1629 = vmatprep.subr.mxu0 0.0
    %1630 = vmatpush1.msra.mxu0 0.0
    %1631 = vmatprep.subr.mxu0 0.0
    %1632 = vmatpush1.msra.mxu0 0.0
    %1633 = vmatprep.subr.mxu0 0.0
    %1634 = vmatpush1.msra.mxu0 0.0
    %1635 = vmatprep.subr.mxu0 0.0
    %1636 = vmatpush1.msra.mxu0 0.0
    %1637 = vmatprep.subr.mxu0 0.0
    %1638 = vmatpush1.msra.mxu0 0.0
    %1639 = vmatprep.subr.mxu0 0.0
    %1640 = vmatpush1.msra.mxu0 0.0
    %1641 = vmatprep.subr.mxu0 0.0
    %1642 = vmatpush1.msra.mxu0 0.0
    %1643 = vmatprep.subr.mxu0 0.0
    %1644 = vmatpush1.msra.mxu0 0.0
    %1645 = vmatprep.subr.mxu0 0.0
    %1646 = vmatpush1.msra.mxu0 0.0
    %1647 = vmatprep.subr.mxu0 0.0
    %1648 = vmatpush1.msra.mxu0 0.0
    %1649 = vmatprep.subr.mxu0 0.0
    %1650 = vmatpush1.msra.mxu0 0.0
    %1651 = vmatprep.subr.mxu0 0.0
    %1652 = vmatpush1.msra.mxu0 0.0
    %1653 = vmatprep.subr.mxu0 0.0
    %1654 = vmatpush1.msra.mxu0 0.0
    %1655 = vmatprep.subr.mxu0 0.0
    %1656 = vmatpush1.msra.mxu0 0.0
    %1657 = vmatprep.subr.mxu0 0.0
    %1658 = vmatpush1.msra.mxu0 0.0
    %1659 = vmatprep.subr.mxu0 0.0
    %1660 = vmatpush1.msra.mxu0 0.0
    %1661 = vmatprep.subr.mxu0 0.0
    %1662 = vmatpush1.msra.mxu0 0.0
    %1663 = vmatprep.subr.mxu0 0.0
    %1664 = vmatpush1.msra.mxu0 0.0
    %1665 = vmatprep.subr.mxu0 0.0
    %1666 = vmatpush1.msra.mxu0 0.0
    %1667 = vmatprep.mubr.f32.mxu0 0.0
    %1668 = vmatmul.mubr.f32.gmra.mrb[0].mxu0 %v1598
    %v1669 = vpop.f32.mrb[0].mxu0
    %v1670 = vadd.f32 %v1594, %v1669
    %v1671 = vpop.f32.mrb[0].mxu0
    %1672 = vmatprep.mubr.f32.mxu0 0.0
    %1673 = vmatmul.mubr.f32.gmra.mrb[0].mxu0 %v1601
    %v1674 = vpop.f32.mrb[0].mxu0
    %v1675 = vadd.f32 %v1594, %v1674
    %v1676 = vpop.f32.mrb[0].mxu0
    %1677 = vdwg.mxu0
    %v1678 = vadd.f32 %v1670, %v467
    %v1679 = vadd.f32 %v1675, %v468
    %s1680 = scalar_lea.vmem %s8, 32
    %v1681 = vld [vmem:[%s1680] sm:$0xff]
    %v1682 = vld [vmem:[%s1680 + $0x8] sm:$0xff]
    %v1683 = vld [vmem:[%s1680 + $0x10] sm:$0xff]
    %v1684 = vld [vmem:[%s1680 + $0x18] sm:$0xff]
    %s1685 = scalar_lea.vmem [#allocation10], 1
    %v1686 = vld [vmem:[%s1685] sm:$0x1]
    %v1688 = vlaneseq
    %v1689 = vshrl.u32 %v1688, 7
    %v1690 = vsub.s32 0, %v1689
    %v1691 = vrot.slane %v1686, %v1690
    %v1694 = vsel %vm300, %v1678, 0
    %v1697 = vsel %vm300, %v1679, 0
    %1699 = vmatprep.subr.mxu0 0.0
    %1700 = vmatpush1.msra.mxu0 %v1681
    %1701 = vmatprep.subr.mxu0 0.0
    %1702 = vmatpush1.msra.mxu0 %v1682
    %1703 = vmatprep.subr.mxu0 0.0
    %1704 = vmatpush1.msra.mxu0 %v1683
    %1705 = vmatprep.subr.mxu0 0.0
    %1706 = vmatpush1.msra.mxu0 %v1684
    %1707 = vmatprep.subr.mxu0 0.0
    %1708 = vmatpush1.msra.mxu0 0.0
    %1709 = vmatprep.subr.mxu0 0.0
    %1710 = vmatpush1.msra.mxu0 0.0
    %1711 = vmatprep.subr.mxu0 0.0
    %1712 = vmatpush1.msra.mxu0 0.0
    %1713 = vmatprep.subr.mxu0 0.0
    %1714 = vmatpush1.msra.mxu0 0.0
    %1715 = vmatprep.subr.mxu0 0.0
    %1716 = vmatpush1.msra.mxu0 0.0
    %1717 = vmatprep.subr.mxu0 0.0
    %1718 = vmatpush1.msra.mxu0 0.0
    %1719 = vmatprep.subr.mxu0 0.0
    %1720 = vmatpush1.msra.mxu0 0.0
    %1721 = vmatprep.subr.mxu0 0.0
    %1722 = vmatpush1.msra.mxu0 0.0
    %1723 = vmatprep.subr.mxu0 0.0
    %1724 = vmatpush1.msra.mxu0 0.0
    %1725 = vmatprep.subr.mxu0 0.0
    %1726 = vmatpush1.msra.mxu0 0.0
    %1727 = vmatprep.subr.mxu0 0.0
    %1728 = vmatpush1.msra.mxu0 0.0
    %1729 = vmatprep.subr.mxu0 0.0
    %1730 = vmatpush1.msra.mxu0 0.0
    %1731 = vmatprep.subr.mxu0 0.0
    %1732 = vmatpush1.msra.mxu0 0.0
    %1733 = vmatprep.subr.mxu0 0.0
    %1734 = vmatpush1.msra.mxu0 0.0
    %1735 = vmatprep.subr.mxu0 0.0
    %1736 = vmatpush1.msra.mxu0 0.0
    %1737 = vmatprep.subr.mxu0 0.0
    %1738 = vmatpush1.msra.mxu0 0.0
    %1739 = vmatprep.subr.mxu0 0.0
    %1740 = vmatpush1.msra.mxu0 0.0
    %1741 = vmatprep.subr.mxu0 0.0
    %1742 = vmatpush1.msra.mxu0 0.0
    %1743 = vmatprep.subr.mxu0 0.0
    %1744 = vmatpush1.msra.mxu0 0.0
    %1745 = vmatprep.subr.mxu0 0.0
    %1746 = vmatpush1.msra.mxu0 0.0
    %1747 = vmatprep.subr.mxu0 0.0
    %1748 = vmatpush1.msra.mxu0 0.0
    %1749 = vmatprep.subr.mxu0 0.0
    %1750 = vmatpush1.msra.mxu0 0.0
    %1751 = vmatprep.subr.mxu0 0.0
    %1752 = vmatpush1.msra.mxu0 0.0
    %1753 = vmatprep.subr.mxu0 0.0
    %1754 = vmatpush1.msra.mxu0 0.0
    %1755 = vmatprep.subr.mxu0 0.0
    %1756 = vmatpush1.msra.mxu0 0.0
    %1757 = vmatprep.subr.mxu0 0.0
    %1758 = vmatpush1.msra.mxu0 0.0
    %1759 = vmatprep.subr.mxu0 0.0
    %1760 = vmatpush1.msra.mxu0 0.0
    %1761 = vmatprep.subr.mxu0 0.0
    %1762 = vmatpush1.msra.mxu0 0.0
    %1763 = vmatprep.mubr.f32.mxu0 0.0
    %1764 = vmatmul.mubr.f32.gmra.mrb[0].mxu0 %v1694
    %v1765 = vpop.f32.mrb[0].mxu0
    %v1766 = vadd.f32 %v1691, %v1765
    %v1767 = vpop.f32.mrb[0].mxu0
    %1768 = vmatprep.mubr.f32.mxu0 0.0
    %1769 = vmatmul.mubr.f32.gmra.mrb[0].mxu0 %v1697
    %v1770 = vpop.f32.mrb[0].mxu0
    %v1771 = vadd.f32 %v1691, %v1770
    %v1772 = vpop.f32.mrb[0].mxu0
    %1773 = vdwg.mxu0
    %v1774 = vmul.f32 %v1766, 0.35355338
    %v1775 = vmul.f32 %v1771, 0.35355338
    %1778 = vrot.lane.b32.xlu0 %v1766, 96
    %v1779 = vpop.permute.xlu0 %1778
    %1780 = vrot.lane.b32.xlu0 %v1771, 96
    %v1781 = vpop.permute.xlu0 %1780
    %v1783 = vsel %vm205, %v1774, 0
    %v1786 = vsel %vm205, %v1775, 0
    %v1788 = vsel %vm205, %v1779, 0
    %v1790 = vsel %vm205, %v1781, 0
    %1792 = vmatprep.subr.mxu0 0.0
    %1793 = vmatpush1.xpose.msra.mxu0 %v1788
    %1794 = vmatprep.subr.mxu0 0.0
    %1795 = vmatpush1.xpose.msra.mxu0 %v1790
    %1796 = vmatprep.subr.mxu0 0.0
    %1797 = vmatpush1.xpose.msra.mxu0 0.0
    %1798 = vmatprep.subr.mxu0 0.0
    %1799 = vmatpush1.xpose.msra.mxu0 0.0
    %1800 = vmatprep.subr.mxu0 0.0
    %1801 = vmatpush1.xpose.msra.mxu0 0.0
    %1802 = vmatprep.subr.mxu0 0.0
    %1803 = vmatpush1.xpose.msra.mxu0 0.0
    %1804 = vmatprep.subr.mxu0 0.0
    %1805 = vmatpush1.xpose.msra.mxu0 0.0
    %1806 = vmatprep.subr.mxu0 0.0
    %1807 = vmatpush1.xpose.msra.mxu0 0.0
    %1808 = vmatprep.subr.mxu0 0.0
    %1809 = vmatpush1.xpose.msra.mxu0 0.0
    %1810 = vmatprep.subr.mxu0 0.0
    %1811 = vmatpush1.xpose.msra.mxu0 0.0
    %1812 = vmatprep.subr.mxu0 0.0
    %1813 = vmatpush1.xpose.msra.mxu0 0.0
    %1814 = vmatprep.subr.mxu0 0.0
    %1815 = vmatpush1.xpose.msra.mxu0 0.0
    %1816 = vmatprep.subr.mxu0 0.0
    %1817 = vmatpush1.xpose.msra.mxu0 0.0
    %1818 = vmatprep.subr.mxu0 0.0
    %1819 = vmatpush1.xpose.msra.mxu0 0.0
    %1820 = vmatprep.subr.mxu0 0.0
    %1821 = vmatpush1.xpose.msra.mxu0 0.0
    %1822 = vmatprep.subr.mxu0 0.0
    %1823 = vmatpush1.xpose.msra.mxu0 0.0
    %1824 = vmatprep.subr.mxu0 0.0
    %1825 = vmatpush1.xpose.msra.mxu0 0.0
    %1826 = vmatprep.subr.mxu0 0.0
    %1827 = vmatpush1.xpose.msra.mxu0 0.0
    %1828 = vmatprep.subr.mxu0 0.0
    %1829 = vmatpush1.xpose.msra.mxu0 0.0
    %1830 = vmatprep.subr.mxu0 0.0
    %1831 = vmatpush1.xpose.msra.mxu0 0.0
    %1832 = vmatprep.subr.mxu0 0.0
    %1833 = vmatpush1.xpose.msra.mxu0 0.0
    %1834 = vmatprep.subr.mxu0 0.0
    %1835 = vmatpush1.xpose.msra.mxu0 0.0
    %1836 = vmatprep.subr.mxu0 0.0
    %1837 = vmatpush1.xpose.msra.mxu0 0.0
    %1838 = vmatprep.subr.mxu0 0.0
    %1839 = vmatpush1.xpose.msra.mxu0 0.0
    %1840 = vmatprep.subr.mxu0 0.0
    %1841 = vmatpush1.xpose.msra.mxu0 0.0
    %1842 = vmatprep.subr.mxu0 0.0
    %1843 = vmatpush1.xpose.msra.mxu0 0.0
    %1844 = vmatprep.subr.mxu0 0.0
    %1845 = vmatpush1.xpose.msra.mxu0 0.0
    %1846 = vmatprep.subr.mxu0 0.0
    %1847 = vmatpush1.xpose.msra.mxu0 0.0
    %1848 = vmatprep.subr.mxu0 0.0
    %1849 = vmatpush1.xpose.msra.mxu0 0.0
    %1850 = vmatprep.subr.mxu0 0.0
    %1851 = vmatpush1.xpose.msra.mxu0 0.0
    %1852 = vmatprep.subr.mxu0 0.0
    %1853 = vmatpush1.xpose.msra.mxu0 0.0
    %1854 = vmatprep.subr.mxu0 0.0
    %1855 = vmatpush1.xpose.msra.mxu0 0.0
    %1856 = vmatprep.mubr.f32.mxu0 0.0
    %1857 = vmatmul.mubr.f32.gmra.mrb[0].mxu0 %v1783
    %v1858 = vpop.f32.mrb[0].mxu0
    %v1859 = vadd.f32 %v195, %v1858
    %v1860 = vpop.f32.mrb[0].mxu0
    %1861 = vmatprep.mubr.f32.mxu0 0.0
    %1862 = vmatmul.mubr.f32.gmra.mrb[0].mxu0 %v1786
    %v1863 = vpop.f32.mrb[0].mxu0
    %v1864 = vadd.f32 %v196, %v1863
    %v1865 = vpop.f32.mrb[0].mxu0
    %1866 = vdwg.mxu0
    %v1867 = vsel %vm654, %v1859, -inf
    %1868 = vmax.xlane.f32.xlu0 %v1867
    %v1869 = vpop.xlane.xlu0 %1868
    %v1870 = vsel %vm654, %v1864, -inf
    %1871 = vmax.xlane.f32.xlu0 %v1870
    %v1872 = vpop.xlane.xlu0 %1871
    %v1873 = vsub.f32 %v1859, %v1869
    %v1874 = vsub.f32 %v1864, %v1872
    %v1875 = vmul.f32 %v1873, 1.442695
    %v1876 = vpow.pop %v1875
    %v1877 = vmul.f32 %v1874, 1.442695
    %v1878 = vpow.pop %v1877
    %v1879 = vsel %vm654, %v1876, 0.0
    %1880 = vadd.xlane.f32.xlu0 %v1879
    %v1881 = vpop.xlane.xlu0 %1880
    %v1882 = vsel %vm654, %v1878, 0.0
    %1883 = vadd.xlane.f32.xlu0 %v1882
    %v1884 = vpop.xlane.xlu0 %1883
    %v1885 = vrcp.pop %v1881
    %v1886 = vrcp.pop %v1884
    %v1887 = vmul.f32 %v1876, %v1885
    %v1888 = vmul.f32 %v1878, %v1886
    %1889 = vrot.lane.b32.xlu0 %v1766, 64
    %v1890 = vpop.permute.xlu0 %1889
    %1891 = vrot.lane.b32.xlu0 %v1771, 64
    %v1892 = vpop.permute.xlu0 %1891
    %v1896 = vsel %vm654, %v1887, 0
    %v1899 = vsel %vm654, %v1888, 0
    %1901 = vmatprep.subr.mxu0 0.0
    %1902 = vmatpush1.msra.mxu0 %v1890
    %1903 = vmatprep.subr.mxu0 0.0
    %1904 = vmatpush1.msra.mxu0 %v1892
    %1905 = vmatprep.subr.mxu0 0.0
    %1906 = vmatpush1.msra.mxu0 0.0
    %1907 = vmatprep.subr.mxu0 0.0
    %1908 = vmatpush1.msra.mxu0 0.0
    %1909 = vmatprep.subr.mxu0 0.0
    %1910 = vmatpush1.msra.mxu0 0.0
    %1911 = vmatprep.subr.mxu0 0.0
    %1912 = vmatpush1.msra.mxu0 0.0
    %1913 = vmatprep.subr.mxu0 0.0
    %1914 = vmatpush1.msra.mxu0 0.0
    %1915 = vmatprep.subr.mxu0 0.0
    %1916 = vmatpush1.msra.mxu0 0.0
    %1917 = vmatprep.subr.mxu0 0.0
    %1918 = vmatpush1.msra.mxu0 0.0
    %1919 = vmatprep.subr.mxu0 0.0
    %1920 = vmatpush1.msra.mxu0 0.0
    %1921 = vmatprep.subr.mxu0 0.0
    %1922 = vmatpush1.msra.mxu0 0.0
    %1923 = vmatprep.subr.mxu0 0.0
    %1924 = vmatpush1.msra.mxu0 0.0
    %1925 = vmatprep.subr.mxu0 0.0
    %1926 = vmatpush1.msra.mxu0 0.0
    %1927 = vmatprep.subr.mxu0 0.0
    %1928 = vmatpush1.msra.mxu0 0.0
    %1929 = vmatprep.subr.mxu0 0.0
    %1930 = vmatpush1.msra.mxu0 0.0
    %1931 = vmatprep.subr.mxu0 0.0
    %1932 = vmatpush1.msra.mxu0 0.0
    %1933 = vmatprep.subr.mxu0 0.0
    %1934 = vmatpush1.msra.mxu0 0.0
    %1935 = vmatprep.subr.mxu0 0.0
    %1936 = vmatpush1.msra.mxu0 0.0
    %1937 = vmatprep.subr.mxu0 0.0
    %1938 = vmatpush1.msra.mxu0 0.0
    %1939 = vmatprep.subr.mxu0 0.0
    %1940 = vmatpush1.msra.mxu0 0.0
    %1941 = vmatprep.subr.mxu0 0.0
    %1942 = vmatpush1.msra.mxu0 0.0
    %1943 = vmatprep.subr.mxu0 0.0
    %1944 = vmatpush1.msra.mxu0 0.0
    %1945 = vmatprep.subr.mxu0 0.0
    %1946 = vmatpush1.msra.mxu0 0.0
    %1947 = vmatprep.subr.mxu0 0.0
    %1948 = vmatpush1.msra.mxu0 0.0
    %1949 = vmatprep.subr.mxu0 0.0
    %1950 = vmatpush1.msra.mxu0 0.0
    %1951 = vmatprep.subr.mxu0 0.0
    %1952 = vmatpush1.msra.mxu0 0.0
    %1953 = vmatprep.subr.mxu0 0.0
    %1954 = vmatpush1.msra.mxu0 0.0
    %1955 = vmatprep.subr.mxu0 0.0
    %1956 = vmatpush1.msra.mxu0 0.0
    %1957 = vmatprep.subr.mxu0 0.0
    %1958 = vmatpush1.msra.mxu0 0.0
    %1959 = vmatprep.subr.mxu0 0.0
    %1960 = vmatpush1.msra.mxu0 0.0
    %1961 = vmatprep.subr.mxu0 0.0
    %1962 = vmatpush1.msra.mxu0 0.0
    %1963 = vmatprep.subr.mxu0 0.0
    %1964 = vmatpush1.msra.mxu0 0.0
    %1965 = vmatprep.mubr.f32.mxu0 0.0
    %1966 = vmatmul.mubr.f32.gmra.mrb[0].mxu0 %v1896
    %v1967 = vpop.f32.mrb[0].mxu0
    %v1968 = vadd.f32 0.0, %v1967
    %v1969 = vpop.f32.mrb[0].mxu0
    %1970 = vmatprep.mubr.f32.mxu0 0.0
    %1971 = vmatmul.mubr.f32.gmra.mrb[0].mxu0 %v1899
    %v1972 = vpop.f32.mrb[0].mxu0
    %v1973 = vadd.f32 0.0, %v1972
    %v1974 = vpop.f32.mrb[0].mxu0
    %1975 = vdwg.mxu0
    %1976 = vrot.lane.b32.xlu0 %v1774, 120
    %v1977 = vpop.permute.xlu0 %1976
    %1978 = vrot.lane.b32.xlu0 %v1775, 120
    %v1979 = vpop.permute.xlu0 %1978
    %1980 = vrot.lane.b32.xlu0 %v1766, 88
    %v1981 = vpop.permute.xlu0 %1980
    %1982 = vrot.lane.b32.xlu0 %v1771, 88
    %v1983 = vpop.permute.xlu0 %1982
    %v1984 = vsel %vm205, %v1977, 0
    %v1986 = vsel %vm205, %v1979, 0
    %v1988 = vsel %vm205, %v1981, 0
    %v1990 = vsel %vm205, %v1983, 0
    %1992 = vmatprep.subr.mxu0 0.0
    %1993 = vmatpush1.xpose.msra.mxu0 %v1988
    %1994 = vmatprep.subr.mxu0 0.0
    %1995 = vmatpush1.xpose.msra.mxu0 %v1990
    %1996 = vmatprep.subr.mxu0 0.0
    %1997 = vmatpush1.xpose.msra.mxu0 0.0
    %1998 = vmatprep.subr.mxu0 0.0
    %1999 = vmatpush1.xpose.msra.mxu0 0.0
    %2000 = vmatprep.subr.mxu0 0.0
    %2001 = vmatpush1.xpose.msra.mxu0 0.0
    %2002 = vmatprep.subr.mxu0 0.0
    %2003 = vmatpush1.xpose.msra.mxu0 0.0
    %2004 = vmatprep.subr.mxu0 0.0
    %2005 = vmatpush1.xpose.msra.mxu0 0.0
    %2006 = vmatprep.subr.mxu0 0.0
    %2007 = vmatpush1.xpose.msra.mxu0 0.0
    %2008 = vmatprep.subr.mxu0 0.0
    %2009 = vmatpush1.xpose.msra.mxu0 0.0
    %2010 = vmatprep.subr.mxu0 0.0
    %2011 = vmatpush1.xpose.msra.mxu0 0.0
    %2012 = vmatprep.subr.mxu0 0.0
    %2013 = vmatpush1.xpose.msra.mxu0 0.0
    %2014 = vmatprep.subr.mxu0 0.0
    %2015 = vmatpush1.xpose.msra.mxu0 0.0
    %2016 = vmatprep.subr.mxu0 0.0
    %2017 = vmatpush1.xpose.msra.mxu0 0.0
    %2018 = vmatprep.subr.mxu0 0.0
    %2019 = vmatpush1.xpose.msra.mxu0 0.0
    %2020 = vmatprep.subr.mxu0 0.0
    %2021 = vmatpush1.xpose.msra.mxu0 0.0
    %2022 = vmatprep.subr.mxu0 0.0
    %2023 = vmatpush1.xpose.msra.mxu0 0.0
    %2024 = vmatprep.subr.mxu0 0.0
    %2025 = vmatpush1.xpose.msra.mxu0 0.0
    %2026 = vmatprep.subr.mxu0 0.0
    %2027 = vmatpush1.xpose.msra.mxu0 0.0
    %2028 = vmatprep.subr.mxu0 0.0
    %2029 = vmatpush1.xpose.msra.mxu0 0.0
    %2030 = vmatprep.subr.mxu0 0.0
    %2031 = vmatpush1.xpose.msra.mxu0 0.0
    %2032 = vmatprep.subr.mxu0 0.0
    %2033 = vmatpush1.xpose.msra.mxu0 0.0
    %2034 = vmatprep.subr.mxu0 0.0
    %2035 = vmatpush1.xpose.msra.mxu0 0.0
    %2036 = vmatprep.subr.mxu0 0.0
    %2037 = vmatpush1.xpose.msra.mxu0 0.0
    %2038 = vmatprep.subr.mxu0 0.0
    %2039 = vmatpush1.xpose.msra.mxu0 0.0
    %2040 = vmatprep.subr.mxu0 0.0
    %2041 = vmatpush1.xpose.msra.mxu0 0.0
    %2042 = vmatprep.subr.mxu0 0.0
    %2043 = vmatpush1.xpose.msra.mxu0 0.0
    %2044 = vmatprep.subr.mxu0 0.0
    %2045 = vmatpush1.xpose.msra.mxu0 0.0
    %2046 = vmatprep.subr.mxu0 0.0
    %2047 = vmatpush1.xpose.msra.mxu0 0.0
    %2048 = vmatprep.subr.mxu0 0.0
    %2049 = vmatpush1.xpose.msra.mxu0 0.0
    %2050 = vmatprep.subr.mxu0 0.0
    %2051 = vmatpush1.xpose.msra.mxu0 0.0
    %2052 = vmatprep.subr.mxu0 0.0
    %2053 = vmatpush1.xpose.msra.mxu0 0.0
    %2054 = vmatprep.subr.mxu0 0.0
    %2055 = vmatpush1.xpose.msra.mxu0 0.0
    %2056 = vmatprep.mubr.f32.mxu0 0.0
    %2057 = vmatmul.mubr.f32.gmra.mrb[0].mxu0 %v1984
    %v2058 = vpop.f32.mrb[0].mxu0
    %v2059 = vadd.f32 %v195, %v2058
    %v2060 = vpop.f32.mrb[0].mxu0
    %2061 = vmatprep.mubr.f32.mxu0 0.0
    %2062 = vmatmul.mubr.f32.gmra.mrb[0].mxu0 %v1986
    %v2063 = vpop.f32.mrb[0].mxu0
    %v2064 = vadd.f32 %v196, %v2063
    %v2065 = vpop.f32.mrb[0].mxu0
    %2066 = vdwg.mxu0
    %v2067 = vsel %vm654, %v2059, -inf
    %2068 = vmax.xlane.f32.xlu0 %v2067
    %v2069 = vpop.xlane.xlu0 %2068
    %v2070 = vsel %vm654, %v2064, -inf
    %2071 = vmax.xlane.f32.xlu0 %v2070
    %v2072 = vpop.xlane.xlu0 %2071
    %v2073 = vsub.f32 %v2059, %v2069
    %v2074 = vsub.f32 %v2064, %v2072
    %v2075 = vmul.f32 %v2073, 1.442695
    %v2076 = vpow.pop %v2075
    %v2077 = vmul.f32 %v2074, 1.442695
    %v2078 = vpow.pop %v2077
    %v2079 = vsel %vm654, %v2076, 0.0
    %2080 = vadd.xlane.f32.xlu0 %v2079
    %v2081 = vpop.xlane.xlu0 %2080
    %v2082 = vsel %vm654, %v2078, 0.0
    %2083 = vadd.xlane.f32.xlu0 %v2082
    %v2084 = vpop.xlane.xlu0 %2083
    %v2085 = vrcp.pop %v2081
    %v2086 = vrcp.pop %v2084
    %v2087 = vmul.f32 %v2076, %v2085
    %v2088 = vmul.f32 %v2078, %v2086
    %2089 = vrot.lane.b32.xlu0 %v1766, 56
    %v2090 = vpop.permute.xlu0 %2089
    %2091 = vrot.lane.b32.xlu0 %v1771, 56
    %v2092 = vpop.permute.xlu0 %2091
    %v2096 = vsel %vm654, %v2087, 0
    %v2099 = vsel %vm654, %v2088, 0
    %2101 = vmatprep.subr.mxu0 0.0
    %2102 = vmatpush1.msra.mxu0 %v2090
    %2103 = vmatprep.subr.mxu0 0.0
    %2104 = vmatpush1.msra.mxu0 %v2092
    %2105 = vmatprep.subr.mxu0 0.0
    %2106 = vmatpush1.msra.mxu0 0.0
    %2107 = vmatprep.subr.mxu0 0.0
    %2108 = vmatpush1.msra.mxu0 0.0
    %2109 = vmatprep.subr.mxu0 0.0
    %2110 = vmatpush1.msra.mxu0 0.0
    %2111 = vmatprep.subr.mxu0 0.0
    %2112 = vmatpush1.msra.mxu0 0.0
    %2113 = vmatprep.subr.mxu0 0.0
    %2114 = vmatpush1.msra.mxu0 0.0
    %2115 = vmatprep.subr.mxu0 0.0
    %2116 = vmatpush1.msra.mxu0 0.0
    %2117 = vmatprep.subr.mxu0 0.0
    %2118 = vmatpush1.msra.mxu0 0.0
    %2119 = vmatprep.subr.mxu0 0.0
    %2120 = vmatpush1.msra.mxu0 0.0
    %2121 = vmatprep.subr.mxu0 0.0
    %2122 = vmatpush1.msra.mxu0 0.0
    %2123 = vmatprep.subr.mxu0 0.0
    %2124 = vmatpush1.msra.mxu0 0.0
    %2125 = vmatprep.subr.mxu0 0.0
    %2126 = vmatpush1.msra.mxu0 0.0
    %2127 = vmatprep.subr.mxu0 0.0
    %2128 = vmatpush1.msra.mxu0 0.0
    %2129 = vmatprep.subr.mxu0 0.0
    %2130 = vmatpush1.msra.mxu0 0.0
    %2131 = vmatprep.subr.mxu0 0.0
    %2132 = vmatpush1.msra.mxu0 0.0
    %2133 = vmatprep.subr.mxu0 0.0
    %2134 = vmatpush1.msra.mxu0 0.0
    %2135 = vmatprep.subr.mxu0 0.0
    %2136 = vmatpush1.msra.mxu0 0.0
    %2137 = vmatprep.subr.mxu0 0.0
    %2138 = vmatpush1.msra.mxu0 0.0
    %2139 = vmatprep.subr.mxu0 0.0
    %2140 = vmatpush1.msra.mxu0 0.0
    %2141 = vmatprep.subr.mxu0 0.0
    %2142 = vmatpush1.msra.mxu0 0.0
    %2143 = vmatprep.subr.mxu0 0.0
    %2144 = vmatpush1.msra.mxu0 0.0
    %2145 = vmatprep.subr.mxu0 0.0
    %2146 = vmatpush1.msra.mxu0 0.0
    %2147 = vmatprep.subr.mxu0 0.0
    %2148 = vmatpush1.msra.mxu0 0.0
    %2149 = vmatprep.subr.mxu0 0.0
    %2150 = vmatpush1.msra.mxu0 0.0
    %2151 = vmatprep.subr.mxu0 0.0
    %2152 = vmatpush1.msra.mxu0 0.0
    %2153 = vmatprep.subr.mxu0 0.0
    %2154 = vmatpush1.msra.mxu0 0.0
    %2155 = vmatprep.subr.mxu0 0.0
    %2156 = vmatpush1.msra.mxu0 0.0
    %2157 = vmatprep.subr.mxu0 0.0
    %2158 = vmatpush1.msra.mxu0 0.0
    %2159 = vmatprep.subr.mxu0 0.0
    %2160 = vmatpush1.msra.mxu0 0.0
    %2161 = vmatprep.subr.mxu0 0.0
    %2162 = vmatpush1.msra.mxu0 0.0
    %2163 = vmatprep.subr.mxu0 0.0
    %2164 = vmatpush1.msra.mxu0 0.0
    %2165 = vmatprep.mubr.f32.mxu0 0.0
    %2166 = vmatmul.mubr.f32.gmra.mrb[0].mxu0 %v2096
    %v2167 = vpop.f32.mrb[0].mxu0
    %v2168 = vadd.f32 0.0, %v2167
    %v2169 = vpop.f32.mrb[0].mxu0
    %2170 = vmatprep.mubr.f32.mxu0 0.0
    %2171 = vmatmul.mubr.f32.gmra.mrb[0].mxu0 %v2099
    %v2172 = vpop.f32.mrb[0].mxu0
    %v2173 = vadd.f32 0.0, %v2172
    %v2174 = vpop.f32.mrb[0].mxu0
    %2175 = vdwg.mxu0
    %2176 = vrot.lane.b32.xlu0 %v1774, 112
    %v2177 = vpop.permute.xlu0 %2176
    %2178 = vrot.lane.b32.xlu0 %v1775, 112
    %v2179 = vpop.permute.xlu0 %2178
    %2180 = vrot.lane.b32.xlu0 %v1766, 80
    %v2181 = vpop.permute.xlu0 %2180
    %2182 = vrot.lane.b32.xlu0 %v1771, 80
    %v2183 = vpop.permute.xlu0 %2182
    %v2184 = vsel %vm205, %v2177, 0
    %v2186 = vsel %vm205, %v2179, 0
    %v2188 = vsel %vm205, %v2181, 0
    %v2190 = vsel %vm205, %v2183, 0
    %2192 = vmatprep.subr.mxu0 0.0
    %2193 = vmatpush1.xpose.msra.mxu0 %v2188
    %2194 = vmatprep.subr.mxu0 0.0
    %2195 = vmatpush1.xpose.msra.mxu0 %v2190
    %2196 = vmatprep.subr.mxu0 0.0
    %2197 = vmatpush1.xpose.msra.mxu0 0.0
    %2198 = vmatprep.subr.mxu0 0.0
    %2199 = vmatpush1.xpose.msra.mxu0 0.0
    %2200 = vmatprep.subr.mxu0 0.0
    %2201 = vmatpush1.xpose.msra.mxu0 0.0
    %2202 = vmatprep.subr.mxu0 0.0
    %2203 = vmatpush1.xpose.msra.mxu0 0.0
    %2204 = vmatprep.subr.mxu0 0.0
    %2205 = vmatpush1.xpose.msra.mxu0 0.0
    %2206 = vmatprep.subr.mxu0 0.0
    %2207 = vmatpush1.xpose.msra.mxu0 0.0
    %2208 = vmatprep.subr.mxu0 0.0
    %2209 = vmatpush1.xpose.msra.mxu0 0.0
    %2210 = vmatprep.subr.mxu0 0.0
    %2211 = vmatpush1.xpose.msra.mxu0 0.0
    %2212 = vmatprep.subr.mxu0 0.0
    %2213 = vmatpush1.xpose.msra.mxu0 0.0
    %2214 = vmatprep.subr.mxu0 0.0
    %2215 = vmatpush1.xpose.msra.mxu0 0.0
    %2216 = vmatprep.subr.mxu0 0.0
    %2217 = vmatpush1.xpose.msra.mxu0 0.0
    %2218 = vmatprep.subr.mxu0 0.0
    %2219 = vmatpush1.xpose.msra.mxu0 0.0
    %2220 = vmatprep.subr.mxu0 0.0
    %2221 = vmatpush1.xpose.msra.mxu0 0.0
    %2222 = vmatprep.subr.mxu0 0.0
    %2223 = vmatpush1.xpose.msra.mxu0 0.0
    %2224 = vmatprep.subr.mxu0 0.0
    %2225 = vmatpush1.xpose.msra.mxu0 0.0
    %2226 = vmatprep.subr.mxu0 0.0
    %2227 = vmatpush1.xpose.msra.mxu0 0.0
    %2228 = vmatprep.subr.mxu0 0.0
    %2229 = vmatpush1.xpose.msra.mxu0 0.0
    %2230 = vmatprep.subr.mxu0 0.0
    %2231 = vmatpush1.xpose.msra.mxu0 0.0
    %2232 = vmatprep.subr.mxu0 0.0
    %2233 = vmatpush1.xpose.msra.mxu0 0.0
    %2234 = vmatprep.subr.mxu0 0.0
    %2235 = vmatpush1.xpose.msra.mxu0 0.0
    %2236 = vmatprep.subr.mxu0 0.0
    %2237 = vmatpush1.xpose.msra.mxu0 0.0
    %2238 = vmatprep.subr.mxu0 0.0
    %2239 = vmatpush1.xpose.msra.mxu0 0.0
    %2240 = vmatprep.subr.mxu0 0.0
    %2241 = vmatpush1.xpose.msra.mxu0 0.0
    %2242 = vmatprep.subr.mxu0 0.0
    %2243 = vmatpush1.xpose.msra.mxu0 0.0
    %2244 = vmatprep.subr.mxu0 0.0
    %2245 = vmatpush1.xpose.msra.mxu0 0.0
    %2246 = vmatprep.subr.mxu0 0.0
    %2247 = vmatpush1.xpose.msra.mxu0 0.0
    %2248 = vmatprep.subr.mxu0 0.0
    %2249 = vmatpush1.xpose.msra.mxu0 0.0
    %2250 = vmatprep.subr.mxu0 0.0
    %2251 = vmatpush1.xpose.msra.mxu0 0.0
    %2252 = vmatprep.subr.mxu0 0.0
    %2253 = vmatpush1.xpose.msra.mxu0 0.0
    %2254 = vmatprep.subr.mxu0 0.0
    %2255 = vmatpush1.xpose.msra.mxu0 0.0
    %2256 = vmatprep.mubr.f32.mxu0 0.0
    %2257 = vmatmul.mubr.f32.gmra.mrb[0].mxu0 %v2184
    %v2258 = vpop.f32.mrb[0].mxu0
    %v2259 = vadd.f32 %v195, %v2258
    %v2260 = vpop.f32.mrb[0].mxu0
    %2261 = vmatprep.mubr.f32.mxu0 0.0
    %2262 = vmatmul.mubr.f32.gmra.mrb[0].mxu0 %v2186
    %v2263 = vpop.f32.mrb[0].mxu0
    %v2264 = vadd.f32 %v196, %v2263
    %v2265 = vpop.f32.mrb[0].mxu0
    %2266 = vdwg.mxu0
    %v2267 = vsel %vm654, %v2259, -inf
    %2268 = vmax.xlane.f32.xlu0 %v2267
    %v2269 = vpop.xlane.xlu0 %2268
    %v2270 = vsel %vm654, %v2264, -inf
    %2271 = vmax.xlane.f32.xlu0 %v2270
    %v2272 = vpop.xlane.xlu0 %2271
    %v2273 = vsub.f32 %v2259, %v2269
    %v2274 = vsub.f32 %v2264, %v2272
    %v2275 = vmul.f32 %v2273, 1.442695
    %v2276 = vpow.pop %v2275
    %v2277 = vmul.f32 %v2274, 1.442695
    %v2278 = vpow.pop %v2277
    %v2279 = vsel %vm654, %v2276, 0.0
    %2280 = vadd.xlane.f32.xlu0 %v2279
    %v2281 = vpop.xlane.xlu0 %2280
    %v2282 = vsel %vm654, %v2278, 0.0
    %2283 = vadd.xlane.f32.xlu0 %v2282
    %v2284 = vpop.xlane.xlu0 %2283
    %v2285 = vrcp.pop %v2281
    %v2286 = vrcp.pop %v2284
    %v2287 = vmul.f32 %v2276, %v2285
    %v2288 = vmul.f32 %v2278, %v2286
    %2289 = vrot.lane.b32.xlu0 %v1766, 48
    %v2290 = vpop.permute.xlu0 %2289
    %2291 = vrot.lane.b32.xlu0 %v1771, 48
    %v2292 = vpop.permute.xlu0 %2291
    %v2296 = vsel %vm654, %v2287, 0
    %v2299 = vsel %vm654, %v2288, 0
    %2301 = vmatprep.subr.mxu0 0.0
    %2302 = vmatpush1.msra.mxu0 %v2290
    %2303 = vmatprep.subr.mxu0 0.0
    %2304 = vmatpush1.msra.mxu0 %v2292
    %2305 = vmatprep.subr.mxu0 0.0
    %2306 = vmatpush1.msra.mxu0 0.0
    %2307 = vmatprep.subr.mxu0 0.0
    %2308 = vmatpush1.msra.mxu0 0.0
    %2309 = vmatprep.subr.mxu0 0.0
    %2310 = vmatpush1.msra.mxu0 0.0
    %2311 = vmatprep.subr.mxu0 0.0
    %2312 = vmatpush1.msra.mxu0 0.0
    %2313 = vmatprep.subr.mxu0 0.0
    %2314 = vmatpush1.msra.mxu0 0.0
    %2315 = vmatprep.subr.mxu0 0.0
    %2316 = vmatpush1.msra.mxu0 0.0
    %2317 = vmatprep.subr.mxu0 0.0
    %2318 = vmatpush1.msra.mxu0 0.0
    %2319 = vmatprep.subr.mxu0 0.0
    %2320 = vmatpush1.msra.mxu0 0.0
    %2321 = vmatprep.subr.mxu0 0.0
    %2322 = vmatpush1.msra.mxu0 0.0
    %2323 = vmatprep.subr.mxu0 0.0
    %2324 = vmatpush1.msra.mxu0 0.0
    %2325 = vmatprep.subr.mxu0 0.0
    %2326 = vmatpush1.msra.mxu0 0.0
    %2327 = vmatprep.subr.mxu0 0.0
    %2328 = vmatpush1.msra.mxu0 0.0
    %2329 = vmatprep.subr.mxu0 0.0
    %2330 = vmatpush1.msra.mxu0 0.0
    %2331 = vmatprep.subr.mxu0 0.0
    %2332 = vmatpush1.msra.mxu0 0.0
    %2333 = vmatprep.subr.mxu0 0.0
    %2334 = vmatpush1.msra.mxu0 0.0
    %2335 = vmatprep.subr.mxu0 0.0
    %2336 = vmatpush1.msra.mxu0 0.0
    %2337 = vmatprep.subr.mxu0 0.0
    %2338 = vmatpush1.msra.mxu0 0.0
    %2339 = vmatprep.subr.mxu0 0.0
    %2340 = vmatpush1.msra.mxu0 0.0
    %2341 = vmatprep.subr.mxu0 0.0
    %2342 = vmatpush1.msra.mxu0 0.0
    %2343 = vmatprep.subr.mxu0 0.0
    %2344 = vmatpush1.msra.mxu0 0.0
    %2345 = vmatprep.subr.mxu0 0.0
    %2346 = vmatpush1.msra.mxu0 0.0
    %2347 = vmatprep.subr.mxu0 0.0
    %2348 = vmatpush1.msra.mxu0 0.0
    %2349 = vmatprep.subr.mxu0 0.0
    %2350 = vmatpush1.msra.mxu0 0.0
    %2351 = vmatprep.subr.mxu0 0.0
    %2352 = vmatpush1.msra.mxu0 0.0
    %2353 = vmatprep.subr.mxu0 0.0
    %2354 = vmatpush1.msra.mxu0 0.0
    %2355 = vmatprep.subr.mxu0 0.0
    %2356 = vmatpush1.msra.mxu0 0.0
    %2357 = vmatprep.subr.mxu0 0.0
    %2358 = vmatpush1.msra.mxu0 0.0
    %2359 = vmatprep.subr.mxu0 0.0
    %2360 = vmatpush1.msra.mxu0 0.0
    %2361 = vmatprep.subr.mxu0 0.0
    %2362 = vmatpush1.msra.mxu0 0.0
    %2363 = vmatprep.subr.mxu0 0.0
    %2364 = vmatpush1.msra.mxu0 0.0
    %2365 = vmatprep.mubr.f32.mxu0 0.0
    %2366 = vmatmul.mubr.f32.gmra.mrb[0].mxu0 %v2296
    %v2367 = vpop.f32.mrb[0].mxu0
    %v2368 = vadd.f32 0.0, %v2367
    %v2369 = vpop.f32.mrb[0].mxu0
    %2370 = vmatprep.mubr.f32.mxu0 0.0
    %2371 = vmatmul.mubr.f32.gmra.mrb[0].mxu0 %v2299
    %v2372 = vpop.f32.mrb[0].mxu0
    %v2373 = vadd.f32 0.0, %v2372
    %v2374 = vpop.f32.mrb[0].mxu0
    %2375 = vdwg.mxu0
    %2376 = vrot.lane.b32.xlu0 %v1774, 104
    %v2377 = vpop.permute.xlu0 %2376
    %2378 = vrot.lane.b32.xlu0 %v1775, 104
    %v2379 = vpop.permute.xlu0 %2378
    %2380 = vrot.lane.b32.xlu0 %v1766, 72
    %v2381 = vpop.permute.xlu0 %2380
    %2382 = vrot.lane.b32.xlu0 %v1771, 72
    %v2383 = vpop.permute.xlu0 %2382
    %v2384 = vsel %vm205, %v2377, 0
    %v2386 = vsel %vm205, %v2379, 0
    %v2388 = vsel %vm205, %v2381, 0
    %v2390 = vsel %vm205, %v2383, 0
    %2392 = vmatprep.subr.mxu0 0.0
    %2393 = vmatpush1.xpose.msra.mxu0 %v2388
    %2394 = vmatprep.subr.mxu0 0.0
    %2395 = vmatpush1.xpose.msra.mxu0 %v2390
    %2396 = vmatprep.subr.mxu0 0.0
    %2397 = vmatpush1.xpose.msra.mxu0 0.0
    %2398 = vmatprep.subr.mxu0 0.0
    %2399 = vmatpush1.xpose.msra.mxu0 0.0
    %2400 = vmatprep.subr.mxu0 0.0
    %2401 = vmatpush1.xpose.msra.mxu0 0.0
    %2402 = vmatprep.subr.mxu0 0.0
    %2403 = vmatpush1.xpose.msra.mxu0 0.0
    %2404 = vmatprep.subr.mxu0 0.0
    %2405 = vmatpush1.xpose.msra.mxu0 0.0
    %2406 = vmatprep.subr.mxu0 0.0
    %2407 = vmatpush1.xpose.msra.mxu0 0.0
    %2408 = vmatprep.subr.mxu0 0.0
    %2409 = vmatpush1.xpose.msra.mxu0 0.0
    %2410 = vmatprep.subr.mxu0 0.0
    %2411 = vmatpush1.xpose.msra.mxu0 0.0
    %2412 = vmatprep.subr.mxu0 0.0
    %2413 = vmatpush1.xpose.msra.mxu0 0.0
    %2414 = vmatprep.subr.mxu0 0.0
    %2415 = vmatpush1.xpose.msra.mxu0 0.0
    %2416 = vmatprep.subr.mxu0 0.0
    %2417 = vmatpush1.xpose.msra.mxu0 0.0
    %2418 = vmatprep.subr.mxu0 0.0
    %2419 = vmatpush1.xpose.msra.mxu0 0.0
    %2420 = vmatprep.subr.mxu0 0.0
    %2421 = vmatpush1.xpose.msra.mxu0 0.0
    %2422 = vmatprep.subr.mxu0 0.0
    %2423 = vmatpush1.xpose.msra.mxu0 0.0
    %2424 = vmatprep.subr.mxu0 0.0
    %2425 = vmatpush1.xpose.msra.mxu0 0.0
    %2426 = vmatprep.subr.mxu0 0.0
    %2427 = vmatpush1.xpose.msra.mxu0 0.0
    %2428 = vmatprep.subr.mxu0 0.0
    %2429 = vmatpush1.xpose.msra.mxu0 0.0
    %2430 = vmatprep.subr.mxu0 0.0
    %2431 = vmatpush1.xpose.msra.mxu0 0.0
    %2432 = vmatprep.subr.mxu0 0.0
    %2433 = vmatpush1.xpose.msra.mxu0 0.0
    %2434 = vmatprep.subr.mxu0 0.0
    %2435 = vmatpush1.xpose.msra.mxu0 0.0
    %2436 = vmatprep.subr.mxu0 0.0
    %2437 = vmatpush1.xpose.msra.mxu0 0.0
    %2438 = vmatprep.subr.mxu0 0.0
    %2439 = vmatpush1.xpose.msra.mxu0 0.0
    %2440 = vmatprep.subr.mxu0 0.0
    %2441 = vmatpush1.xpose.msra.mxu0 0.0
    %2442 = vmatprep.subr.mxu0 0.0
    %2443 = vmatpush1.xpose.msra.mxu0 0.0
    %2444 = vmatprep.subr.mxu0 0.0
    %2445 = vmatpush1.xpose.msra.mxu0 0.0
    %2446 = vmatprep.subr.mxu0 0.0
    %2447 = vmatpush1.xpose.msra.mxu0 0.0
    %2448 = vmatprep.subr.mxu0 0.0
    %2449 = vmatpush1.xpose.msra.mxu0 0.0
    %2450 = vmatprep.subr.mxu0 0.0
    %2451 = vmatpush1.xpose.msra.mxu0 0.0
    %2452 = vmatprep.subr.mxu0 0.0
    %2453 = vmatpush1.xpose.msra.mxu0 0.0
    %2454 = vmatprep.subr.mxu0 0.0
    %2455 = vmatpush1.xpose.msra.mxu0 0.0
    %2456 = vmatprep.mubr.f32.mxu0 0.0
    %2457 = vmatmul.mubr.f32.gmra.mrb[0].mxu0 %v2384
    %v2458 = vpop.f32.mrb[0].mxu0
    %v2459 = vadd.f32 %v195, %v2458
    %v2460 = vpop.f32.mrb[0].mxu0
    %2461 = vmatprep.mubr.f32.mxu0 0.0
    %2462 = vmatmul.mubr.f32.gmra.mrb[0].mxu0 %v2386
    %v2463 = vpop.f32.mrb[0].mxu0
    %v2464 = vadd.f32 %v196, %v2463
    %v2465 = vpop.f32.mrb[0].mxu0
    %2466 = vdwg.mxu0
    %v2467 = vsel %vm654, %v2459, -inf
    %2468 = vmax.xlane.f32.xlu0 %v2467
    %v2469 = vpop.xlane.xlu0 %2468
    %v2470 = vsel %vm654, %v2464, -inf
    %2471 = vmax.xlane.f32.xlu0 %v2470
    %v2472 = vpop.xlane.xlu0 %2471
    %v2473 = vsub.f32 %v2459, %v2469
    %v2474 = vsub.f32 %v2464, %v2472
    %v2475 = vmul.f32 %v2473, 1.442695
    %v2476 = vpow.pop %v2475
    %v2477 = vmul.f32 %v2474, 1.442695
    %v2478 = vpow.pop %v2477
    %v2479 = vsel %vm654, %v2476, 0.0
    %2480 = vadd.xlane.f32.xlu0 %v2479
    %v2481 = vpop.xlane.xlu0 %2480
    %v2482 = vsel %vm654, %v2478, 0.0
    %2483 = vadd.xlane.f32.xlu0 %v2482
    %v2484 = vpop.xlane.xlu0 %2483
    %v2485 = vrcp.pop %v2481
    %v2486 = vrcp.pop %v2484
    %v2487 = vmul.f32 %v2476, %v2485
    %v2488 = vmul.f32 %v2478, %v2486
    %2489 = vrot.lane.b32.xlu0 %v1766, 40
    %v2490 = vpop.permute.xlu0 %2489
    %2491 = vrot.lane.b32.xlu0 %v1771, 40
    %v2492 = vpop.permute.xlu0 %2491
    %v2496 = vsel %vm654, %v2487, 0
    %v2499 = vsel %vm654, %v2488, 0
    %2501 = vmatprep.subr.mxu0 0.0
    %2502 = vmatpush1.msra.mxu0 %v2490
    %2503 = vmatprep.subr.mxu0 0.0
    %2504 = vmatpush1.msra.mxu0 %v2492
    %2505 = vmatprep.subr.mxu0 0.0
    %2506 = vmatpush1.msra.mxu0 0.0
    %2507 = vmatprep.subr.mxu0 0.0
    %2508 = vmatpush1.msra.mxu0 0.0
    %2509 = vmatprep.subr.mxu0 0.0
    %2510 = vmatpush1.msra.mxu0 0.0
    %2511 = vmatprep.subr.mxu0 0.0
    %2512 = vmatpush1.msra.mxu0 0.0
    %2513 = vmatprep.subr.mxu0 0.0
    %2514 = vmatpush1.msra.mxu0 0.0
    %2515 = vmatprep.subr.mxu0 0.0
    %2516 = vmatpush1.msra.mxu0 0.0
    %2517 = vmatprep.subr.mxu0 0.0
    %2518 = vmatpush1.msra.mxu0 0.0
    %2519 = vmatprep.subr.mxu0 0.0
    %2520 = vmatpush1.msra.mxu0 0.0
    %2521 = vmatprep.subr.mxu0 0.0
    %2522 = vmatpush1.msra.mxu0 0.0
    %2523 = vmatprep.subr.mxu0 0.0
    %2524 = vmatpush1.msra.mxu0 0.0
    %2525 = vmatprep.subr.mxu0 0.0
    %2526 = vmatpush1.msra.mxu0 0.0
    %2527 = vmatprep.subr.mxu0 0.0
    %2528 = vmatpush1.msra.mxu0 0.0
    %2529 = vmatprep.subr.mxu0 0.0
    %2530 = vmatpush1.msra.mxu0 0.0
    %2531 = vmatprep.subr.mxu0 0.0
    %2532 = vmatpush1.msra.mxu0 0.0
    %2533 = vmatprep.subr.mxu0 0.0
    %2534 = vmatpush1.msra.mxu0 0.0
    %2535 = vmatprep.subr.mxu0 0.0
    %2536 = vmatpush1.msra.mxu0 0.0
    %2537 = vmatprep.subr.mxu0 0.0
    %2538 = vmatpush1.msra.mxu0 0.0
    %2539 = vmatprep.subr.mxu0 0.0
    %2540 = vmatpush1.msra.mxu0 0.0
    %2541 = vmatprep.subr.mxu0 0.0
    %2542 = vmatpush1.msra.mxu0 0.0
    %2543 = vmatprep.subr.mxu0 0.0
    %2544 = vmatpush1.msra.mxu0 0.0
    %2545 = vmatprep.subr.mxu0 0.0
    %2546 = vmatpush1.msra.mxu0 0.0
    %2547 = vmatprep.subr.mxu0 0.0
    %2548 = vmatpush1.msra.mxu0 0.0
    %2549 = vmatprep.subr.mxu0 0.0
    %2550 = vmatpush1.msra.mxu0 0.0
    %2551 = vmatprep.subr.mxu0 0.0
    %2552 = vmatpush1.msra.mxu0 0.0
    %2553 = vmatprep.subr.mxu0 0.0
    %2554 = vmatpush1.msra.mxu0 0.0
    %2555 = vmatprep.subr.mxu0 0.0
    %2556 = vmatpush1.msra.mxu0 0.0
    %2557 = vmatprep.subr.mxu0 0.0
    %2558 = vmatpush1.msra.mxu0 0.0
    %2559 = vmatprep.subr.mxu0 0.0
    %2560 = vmatpush1.msra.mxu0 0.0
    %2561 = vmatprep.subr.mxu0 0.0
    %2562 = vmatpush1.msra.mxu0 0.0
    %2563 = vmatprep.subr.mxu0 0.0
    %2564 = vmatpush1.msra.mxu0 0.0
    %2565 = vmatprep.mubr.f32.mxu0 0.0
    %2566 = vmatmul.mubr.f32.gmra.mrb[0].mxu0 %v2496
    %v2567 = vpop.f32.mrb[0].mxu0
    %v2568 = vadd.f32 0.0, %v2567
    %v2569 = vpop.f32.mrb[0].mxu0
    %2570 = vmatprep.mubr.f32.mxu0 0.0
    %2571 = vmatmul.mubr.f32.gmra.mrb[0].mxu0 %v2499
    %v2572 = vpop.f32.mrb[0].mxu0
    %v2573 = vadd.f32 0.0, %v2572
    %v2574 = vpop.f32.mrb[0].mxu0
    %2575 = vdwg.mxu0
    %2578 = vrot.lane.b32.xlu0 %v2168, 8
    %v2579 = vpop.permute.xlu0 %2578
    %2580 = vrot.lane.b32.xlu0 %v2173, 8
    %v2581 = vpop.permute.xlu0 %2580
    %2586 = vrot.lane.b32.xlu0 %v2368, 16
    %v2587 = vpop.permute.xlu0 %2586
    %2588 = vrot.lane.b32.xlu0 %v2373, 16
    %v2589 = vpop.permute.xlu0 %2588
    %2594 = vrot.lane.b32.xlu0 %v2568, 24
    %v2595 = vpop.permute.xlu0 %2594
    %2596 = vrot.lane.b32.xlu0 %v2573, 24
    %v2597 = vpop.permute.xlu0 %2596
    %v2600 = vsel %vm205, %v1968, %v2579
    %v2601 = vsel %vm205, %v1973, %v2581
    %v2602 = vsel %vm654, %v2600, %v2587
    %v2603 = vsel %vm654, %v2601, %v2589
    %v2604 = vsel %vm1392, %v2602, %v2595
    %v2605 = vsel %vm1392, %v2603, %v2597
    %s2606 = scalar_lea.vmem %s10, 32
    %v2607 = vld [vmem:[%s2606] sm:$0xff]
    %v2608 = vld [vmem:[%s2606 + $0x8] sm:$0xff]
    %v2609 = vld [vmem:[%s2606 + $0x10] sm:$0xff]
    %v2610 = vld [vmem:[%s2606 + $0x18] sm:$0xff]
    %s2611 = scalar_lea.vmem [#allocation11], 1
    %v2612 = vld [vmem:[%s2611] sm:$0x1]
    %v2614 = vlaneseq
    %v2615 = vshrl.u32 %v2614, 7
    %v2616 = vsub.s32 0, %v2615
    %v2617 = vrot.slane %v2612, %v2616
    %v2620 = vsel %vm300, %v2604, 0
    %v2623 = vsel %vm300, %v2605, 0
    %2625 = vmatprep.subr.mxu0 0.0
    %2626 = vmatpush1.msra.mxu0 %v2607
    %2627 = vmatprep.subr.mxu0 0.0
    %2628 = vmatpush1.msra.mxu0 %v2608
    %2629 = vmatprep.subr.mxu0 0.0
    %2630 = vmatpush1.msra.mxu0 %v2609
    %2631 = vmatprep.subr.mxu0 0.0
    %2632 = vmatpush1.msra.mxu0 %v2610
    %2633 = vmatprep.subr.mxu0 0.0
    %2634 = vmatpush1.msra.mxu0 0.0
    %2635 = vmatprep.subr.mxu0 0.0
    %2636 = vmatpush1.msra.mxu0 0.0
    %2637 = vmatprep.subr.mxu0 0.0
    %2638 = vmatpush1.msra.mxu0 0.0
    %2639 = vmatprep.subr.mxu0 0.0
    %2640 = vmatpush1.msra.mxu0 0.0
    %2641 = vmatprep.subr.mxu0 0.0
    %2642 = vmatpush1.msra.mxu0 0.0
    %2643 = vmatprep.subr.mxu0 0.0
    %2644 = vmatpush1.msra.mxu0 0.0
    %2645 = vmatprep.subr.mxu0 0.0
    %2646 = vmatpush1.msra.mxu0 0.0
    %2647 = vmatprep.subr.mxu0 0.0
    %2648 = vmatpush1.msra.mxu0 0.0
    %2649 = vmatprep.subr.mxu0 0.0
    %2650 = vmatpush1.msra.mxu0 0.0
    %2651 = vmatprep.subr.mxu0 0.0
    %2652 = vmatpush1.msra.mxu0 0.0
    %2653 = vmatprep.subr.mxu0 0.0
    %2654 = vmatpush1.msra.mxu0 0.0
    %2655 = vmatprep.subr.mxu0 0.0
    %2656 = vmatpush1.msra.mxu0 0.0
    %2657 = vmatprep.subr.mxu0 0.0
    %2658 = vmatpush1.msra.mxu0 0.0
    %2659 = vmatprep.subr.mxu0 0.0
    %2660 = vmatpush1.msra.mxu0 0.0
    %2661 = vmatprep.subr.mxu0 0.0
    %2662 = vmatpush1.msra.mxu0 0.0
    %2663 = vmatprep.subr.mxu0 0.0
    %2664 = vmatpush1.msra.mxu0 0.0
    %2665 = vmatprep.subr.mxu0 0.0
    %2666 = vmatpush1.msra.mxu0 0.0
    %2667 = vmatprep.subr.mxu0 0.0
    %2668 = vmatpush1.msra.mxu0 0.0
    %2669 = vmatprep.subr.mxu0 0.0
    %2670 = vmatpush1.msra.mxu0 0.0
    %2671 = vmatprep.subr.mxu0 0.0
    %2672 = vmatpush1.msra.mxu0 0.0
    %2673 = vmatprep.subr.mxu0 0.0
    %2674 = vmatpush1.msra.mxu0 0.0
    %2675 = vmatprep.subr.mxu0 0.0
    %2676 = vmatpush1.msra.mxu0 0.0
    %2677 = vmatprep.subr.mxu0 0.0
    %2678 = vmatpush1.msra.mxu0 0.0
    %2679 = vmatprep.subr.mxu0 0.0
    %2680 = vmatpush1.msra.mxu0 0.0
    %2681 = vmatprep.subr.mxu0 0.0
    %2682 = vmatpush1.msra.mxu0 0.0
    %2683 = vmatprep.subr.mxu0 0.0
    %2684 = vmatpush1.msra.mxu0 0.0
    %2685 = vmatprep.subr.mxu0 0.0
    %2686 = vmatpush1.msra.mxu0 0.0
    %2687 = vmatprep.subr.mxu0 0.0
    %2688 = vmatpush1.msra.mxu0 0.0
    %2689 = vmatprep.mubr.f32.mxu0 0.0
    %2690 = vmatmul.mubr.f32.gmra.mrb[0].mxu0 %v2620
    %v2691 = vpop.f32.mrb[0].mxu0
    %v2692 = vadd.f32 %v2617, %v2691
    %v2693 = vpop.f32.mrb[0].mxu0
    %2694 = vmatprep.mubr.f32.mxu0 0.0
    %2695 = vmatmul.mubr.f32.gmra.mrb[0].mxu0 %v2623
    %v2696 = vpop.f32.mrb[0].mxu0
    %v2697 = vadd.f32 %v2617, %v2696
    %v2698 = vpop.f32.mrb[0].mxu0
    %2699 = vdwg.mxu0
    %s2700 = scalar_lea.vmem %s12, 32
    %v2701 = vld [vmem:[%s2700] sm:$0xff]
    %v2702 = vld [vmem:[%s2700 + $0x8] sm:$0xff]
    %v2703 = vld [vmem:[%s2700 + $0x10] sm:$0xff]
    %v2704 = vld [vmem:[%s2700 + $0x18] sm:$0xff]
    %s2705 = scalar_lea.vmem [#allocation13], 1
    %v2706 = vld [vmem:[%s2705] sm:$0x1]
    %v2708 = vlaneseq
    %v2709 = vshrl.u32 %v2708, 7
    %v2710 = vsub.s32 0, %v2709
    %v2711 = vrot.slane %v2706, %v2710
    %v2714 = vsel %vm300, %v2692, 0
    %v2717 = vsel %vm300, %v2697, 0
    %2719 = vmatprep.subr.mxu0 0.0
    %2720 = vmatpush1.msra.mxu0 %v2701
    %2721 = vmatprep.subr.mxu0 0.0
    %2722 = vmatpush1.msra.mxu0 %v2702
    %2723 = vmatprep.subr.mxu0 0.0
    %2724 = vmatpush1.msra.mxu0 %v2703
    %2725 = vmatprep.subr.mxu0 0.0
    %2726 = vmatpush1.msra.mxu0 %v2704
    %2727 = vmatprep.subr.mxu0 0.0
    %2728 = vmatpush1.msra.mxu0 0.0
    %2729 = vmatprep.subr.mxu0 0.0
    %2730 = vmatpush1.msra.mxu0 0.0
    %2731 = vmatprep.subr.mxu0 0.0
    %2732 = vmatpush1.msra.mxu0 0.0
    %2733 = vmatprep.subr.mxu0 0.0
    %2734 = vmatpush1.msra.mxu0 0.0
    %2735 = vmatprep.subr.mxu0 0.0
    %2736 = vmatpush1.msra.mxu0 0.0
    %2737 = vmatprep.subr.mxu0 0.0
    %2738 = vmatpush1.msra.mxu0 0.0
    %2739 = vmatprep.subr.mxu0 0.0
    %2740 = vmatpush1.msra.mxu0 0.0
    %2741 = vmatprep.subr.mxu0 0.0
    %2742 = vmatpush1.msra.mxu0 0.0
    %2743 = vmatprep.subr.mxu0 0.0
    %2744 = vmatpush1.msra.mxu0 0.0
    %2745 = vmatprep.subr.mxu0 0.0
    %2746 = vmatpush1.msra.mxu0 0.0
    %2747 = vmatprep.subr.mxu0 0.0
    %2748 = vmatpush1.msra.mxu0 0.0
    %2749 = vmatprep.subr.mxu0 0.0
    %2750 = vmatpush1.msra.mxu0 0.0
    %2751 = vmatprep.subr.mxu0 0.0
    %2752 = vmatpush1.msra.mxu0 0.0
    %2753 = vmatprep.subr.mxu0 0.0
    %2754 = vmatpush1.msra.mxu0 0.0
    %2755 = vmatprep.subr.mxu0 0.0
    %2756 = vmatpush1.msra.mxu0 0.0
    %2757 = vmatprep.subr.mxu0 0.0
    %2758 = vmatpush1.msra.mxu0 0.0
    %2759 = vmatprep.subr.mxu0 0.0
    %2760 = vmatpush1.msra.mxu0 0.0
    %2761 = vmatprep.subr.mxu0 0.0
    %2762 = vmatpush1.msra.mxu0 0.0
    %2763 = vmatprep.subr.mxu0 0.0
    %2764 = vmatpush1.msra.mxu0 0.0
    %2765 = vmatprep.subr.mxu0 0.0
    %2766 = vmatpush1.msra.mxu0 0.0
    %2767 = vmatprep.subr.mxu0 0.0
    %2768 = vmatpush1.msra.mxu0 0.0
    %2769 = vmatprep.subr.mxu0 0.0
    %2770 = vmatpush1.msra.mxu0 0.0
    %2771 = vmatprep.subr.mxu0 0.0
    %2772 = vmatpush1.msra.mxu0 0.0
    %2773 = vmatprep.subr.mxu0 0.0
    %2774 = vmatpush1.msra.mxu0 0.0
    %2775 = vmatprep.subr.mxu0 0.0
    %2776 = vmatpush1.msra.mxu0 0.0
    %2777 = vmatprep.subr.mxu0 0.0
    %2778 = vmatpush1.msra.mxu0 0.0
    %2779 = vmatprep.subr.mxu0 0.0
    %2780 = vmatpush1.msra.mxu0 0.0
    %2781 = vmatprep.subr.mxu0 0.0
    %2782 = vmatpush1.msra.mxu0 0.0
    %2783 = vmatprep.mubr.f32.mxu0 0.0
    %2784 = vmatmul.mubr.f32.gmra.mrb[0].mxu0 %v2714
    %v2785 = vpop.f32.mrb[0].mxu0
    %v2786 = vadd.f32 %v2711, %v2785
    %v2787 = vpop.f32.mrb[0].mxu0
    %2788 = vmatprep.mubr.f32.mxu0 0.0
    %2789 = vmatmul.mubr.f32.gmra.mrb[0].mxu0 %v2717
    %v2790 = vpop.f32.mrb[0].mxu0
    %v2791 = vadd.f32 %v2711, %v2790
    %v2792 = vpop.f32.mrb[0].mxu0
    %2793 = vdwg.mxu0
    %v2794 = vmax.f32 %v2786, 0.0
    %v2795 = vmax.f32 %v2791, 0.0
    %s2796 = scalar_lea.vmem %s14, 64
    %v2797 = vld [vmem:[%s2796] sm:$0xff]
    %v2798 = vld [vmem:[%s2796 + $0x8] sm:$0xff]
    %v2799 = vld [vmem:[%s2796 + $0x10] sm:$0xff]
    %v2800 = vld [vmem:[%s2796 + $0x18] sm:$0xff]
    %v2801 = vld [vmem:[%s2796 + $0x20] sm:$0xff]
    %v2802 = vld [vmem:[%s2796 + $0x28] sm:$0xff]
    %v2803 = vld [vmem:[%s2796 + $0x30] sm:$0xff]
    %v2804 = vld [vmem:[%s2796 + $0x38] sm:$0xff]
    %s2805 = scalar_lea.vmem [#allocation14], 1
    %v2806 = vld [vmem:[%s2805] sm:$0x1]
    %v2808 = vlaneseq
    %v2809 = vshrl.u32 %v2808, 7
    %v2810 = vsub.s32 0, %v2809
    %v2811 = vrot.slane %v2806, %v2810
    %v2814 = vsel %vm1596, %v2794, 0
    %v2817 = vsel %vm1596, %v2795, 0
    %2819 = vmatprep.subr.mxu0 0.0
    %2820 = vmatpush1.msra.mxu0 %v2797
    %2821 = vmatprep.subr.mxu0 0.0
    %2822 = vmatpush1.msra.mxu0 %v2798
    %2823 = vmatprep.subr.mxu0 0.0
    %2824 = vmatpush1.msra.mxu0 %v2799
    %2825 = vmatprep.subr.mxu0 0.0
    %2826 = vmatpush1.msra.mxu0 %v2800
    %2827 = vmatprep.subr.mxu0 0.0
    %2828 = vmatpush1.msra.mxu0 %v2801
    %2829 = vmatprep.subr.mxu0 0.0
    %2830 = vmatpush1.msra.mxu0 %v2802
    %2831 = vmatprep.subr.mxu0 0.0
    %2832 = vmatpush1.msra.mxu0 %v2803
    %2833 = vmatprep.subr.mxu0 0.0
    %2834 = vmatpush1.msra.mxu0 %v2804
    %2835 = vmatprep.subr.mxu0 0.0
    %2836 = vmatpush1.msra.mxu0 0.0
    %2837 = vmatprep.subr.mxu0 0.0
    %2838 = vmatpush1.msra.mxu0 0.0
    %2839 = vmatprep.subr.mxu0 0.0
    %2840 = vmatpush1.msra.mxu0 0.0
    %2841 = vmatprep.subr.mxu0 0.0
    %2842 = vmatpush1.msra.mxu0 0.0
    %2843 = vmatprep.subr.mxu0 0.0
    %2844 = vmatpush1.msra.mxu0 0.0
    %2845 = vmatprep.subr.mxu0 0.0
    %2846 = vmatpush1.msra.mxu0 0.0
    %2847 = vmatprep.subr.mxu0 0.0
    %2848 = vmatpush1.msra.mxu0 0.0
    %2849 = vmatprep.subr.mxu0 0.0
    %2850 = vmatpush1.msra.mxu0 0.0
    %2851 = vmatprep.subr.mxu0 0.0
    %2852 = vmatpush1.msra.mxu0 0.0
    %2853 = vmatprep.subr.mxu0 0.0
    %2854 = vmatpush1.msra.mxu0 0.0
    %2855 = vmatprep.subr.mxu0 0.0
    %2856 = vmatpush1.msra.mxu0 0.0
    %2857 = vmatprep.subr.mxu0 0.0
    %2858 = vmatpush1.msra.mxu0 0.0
    %2859 = vmatprep.subr.mxu0 0.0
    %2860 = vmatpush1.msra.mxu0 0.0
    %2861 = vmatprep.subr.mxu0 0.0
    %2862 = vmatpush1.msra.mxu0 0.0
    %2863 = vmatprep.subr.mxu0 0.0
    %2864 = vmatpush1.msra.mxu0 0.0
    %2865 = vmatprep.subr.mxu0 0.0
    %2866 = vmatpush1.msra.mxu0 0.0
    %2867 = vmatprep.subr.mxu0 0.0
    %2868 = vmatpush1.msra.mxu0 0.0
    %2869 = vmatprep.subr.mxu0 0.0
    %2870 = vmatpush1.msra.mxu0 0.0
    %2871 = vmatprep.subr.mxu0 0.0
    %2872 = vmatpush1.msra.mxu0 0.0
    %2873 = vmatprep.subr.mxu0 0.0
    %2874 = vmatpush1.msra.mxu0 0.0
    %2875 = vmatprep.subr.mxu0 0.0
    %2876 = vmatpush1.msra.mxu0 0.0
    %2877 = vmatprep.subr.mxu0 0.0
    %2878 = vmatpush1.msra.mxu0 0.0
    %2879 = vmatprep.subr.mxu0 0.0
    %2880 = vmatpush1.msra.mxu0 0.0
    %2881 = vmatprep.subr.mxu0 0.0
    %2882 = vmatpush1.msra.mxu0 0.0
    %2883 = vmatprep.mubr.f32.mxu0 0.0
    %2884 = vmatmul.mubr.f32.gmra.mrb[0].mxu0 %v2814
    %v2885 = vpop.f32.mrb[0].mxu0
    %v2886 = vadd.f32 %v2811, %v2885
    %v2887 = vpop.f32.mrb[0].mxu0
    %2888 = vmatprep.mubr.f32.mxu0 0.0
    %2889 = vmatmul.mubr.f32.gmra.mrb[0].mxu0 %v2817
    %v2890 = vpop.f32.mrb[0].mxu0
    %v2891 = vadd.f32 %v2811, %v2890
    %v2892 = vpop.f32.mrb[0].mxu0
    %2893 = vdwg.mxu0
    %v2894 = vadd.f32 %v2886, %v1678
    %v2895 = vadd.f32 %v2891, %v1679
    %v2896 = vld [vmem:[#allocation16] sm:$0xff]
    %v2897 = vld [vmem:[#allocation16 + $0x8] sm:$0xff]
    %v2898 = vld [vmem:[#allocation16 + $0x10] sm:$0xff]
    %v2899 = vld [vmem:[#allocation16 + $0x18] sm:$0xff]
    %v2900 = vld [vmem:[#allocation17] sm:$0x1]
    %v2902 = vlaneseq
    %v2903 = vshrl.u32 %v2902, 7
    %v2904 = vsub.s32 0, %v2903
    %v2905 = vrot.slane %v2900, %v2904
    %v2908 = vsel %vm300, %v2894, 0
    %v2911 = vsel %vm300, %v2895, 0
    %2913 = vmatprep.subr.mxu0 0.0
    %2914 = vmatpush1.msra.mxu0 %v2896
    %2915 = vmatprep.subr.mxu0 0.0
    %2916 = vmatpush1.msra.mxu0 %v2897
    %2917 = vmatprep.subr.mxu0 0.0
    %2918 = vmatpush1.msra.mxu0 %v2898
    %2919 = vmatprep.subr.mxu0 0.0
    %2920 = vmatpush1.msra.mxu0 %v2899
    %2921 = vmatprep.subr.mxu0 0.0
    %2922 = vmatpush1.msra.mxu0 0.0
    %2923 = vmatprep.subr.mxu0 0.0
    %2924 = vmatpush1.msra.mxu0 0.0
    %2925 = vmatprep.subr.mxu0 0.0
    %2926 = vmatpush1.msra.mxu0 0.0
    %2927 = vmatprep.subr.mxu0 0.0
    %2928 = vmatpush1.msra.mxu0 0.0
    %2929 = vmatprep.subr.mxu0 0.0
    %2930 = vmatpush1.msra.mxu0 0.0
    %2931 = vmatprep.subr.mxu0 0.0
    %2932 = vmatpush1.msra.mxu0 0.0
    %2933 = vmatprep.subr.mxu0 0.0
    %2934 = vmatpush1.msra.mxu0 0.0
    %2935 = vmatprep.subr.mxu0 0.0
    %2936 = vmatpush1.msra.mxu0 0.0
    %2937 = vmatprep.subr.mxu0 0.0
    %2938 = vmatpush1.msra.mxu0 0.0
    %2939 = vmatprep.subr.mxu0 0.0
    %2940 = vmatpush1.msra.mxu0 0.0
    %2941 = vmatprep.subr.mxu0 0.0
    %2942 = vmatpush1.msra.mxu0 0.0
    %2943 = vmatprep.subr.mxu0 0.0
    %2944 = vmatpush1.msra.mxu0 0.0
    %2945 = vmatprep.subr.mxu0 0.0
    %2946 = vmatpush1.msra.mxu0 0.0
    %2947 = vmatprep.subr.mxu0 0.0
    %2948 = vmatpush1.msra.mxu0 0.0
    %2949 = vmatprep.subr.mxu0 0.0
    %2950 = vmatpush1.msra.mxu0 0.0
    %2951 = vmatprep.subr.mxu0 0.0
    %2952 = vmatpush1.msra.mxu0 0.0
    %2953 = vmatprep.subr.mxu0 0.0
    %2954 = vmatpush1.msra.mxu0 0.0
    %2955 = vmatprep.subr.mxu0 0.0
    %2956 = vmatpush1.msra.mxu0 0.0
    %2957 = vmatprep.subr.mxu0 0.0
    %2958 = vmatpush1.msra.mxu0 0.0
    %2959 = vmatprep.subr.mxu0 0.0
    %2960 = vmatpush1.msra.mxu0 0.0
    %2961 = vmatprep.subr.mxu0 0.0
    %2962 = vmatpush1.msra.mxu0 0.0
    %2963 = vmatprep.subr.mxu0 0.0
    %2964 = vmatpush1.msra.mxu0 0.0
    %2965 = vmatprep.subr.mxu0 0.0
    %2966 = vmatpush1.msra.mxu0 0.0
    %2967 = vmatprep.subr.mxu0 0.0
    %2968 = vmatpush1.msra.mxu0 0.0
    %2969 = vmatprep.subr.mxu0 0.0
    %2970 = vmatpush1.msra.mxu0 0.0
    %2971 = vmatprep.subr.mxu0 0.0
    %2972 = vmatpush1.msra.mxu0 0.0
    %2973 = vmatprep.subr.mxu0 0.0
    %2974 = vmatpush1.msra.mxu0 0.0
    %2975 = vmatprep.subr.mxu0 0.0
    %2976 = vmatpush1.msra.mxu0 0.0
    %2977 = vmatprep.mubr.f32.mxu0 0.0
    %2978 = vmatmul.mubr.f32.gmra.mrb[0].mxu0 %v2908
    %v2979 = vpop.f32.mrb[0].mxu0
    %v2980 = vadd.f32 %v2905, %v2979
    %v2981 = vpop.f32.mrb[0].mxu0
    %2982 = vmatprep.mubr.f32.mxu0 0.0
    %2983 = vmatmul.mubr.f32.gmra.mrb[0].mxu0 %v2911
    %v2984 = vpop.f32.mrb[0].mxu0
    %v2985 = vadd.f32 %v2905, %v2984
    %v2986 = vpop.f32.mrb[0].mxu0
    %2987 = vdwg.mxu0
    %v2988 = vmax.f32 %v2980, 0.0
    %v2989 = vmax.f32 %v2985, 0.0
    %v2990 = vld [vmem:[%s18] sm:$0xff]
    %v2991 = vld [vmem:[%s18 + $0x8] sm:$0xff]
    %v2992 = vld [vmem:[%s18 + $0x10] sm:$0xff]
    %v2993 = vld [vmem:[%s18 + $0x18] sm:$0xff]
    %v2994 = vld [vmem:[#allocation2] sm:$0x1]
    %v2996 = vlaneseq
    %v2997 = vshrl.u32 %v2996, 7
    %v2998 = vsub.s32 0, %v2997
    %v2999 = vrot.slane %v2994, %v2998
    %v3002 = vsel %vm300, %v2988, 0
    %v3005 = vsel %vm300, %v2989, 0
    %3007 = vmatprep.subr.mxu0 0.0
    %3008 = vmatpush1.msra.mxu0 %v2990
    %3009 = vmatprep.subr.mxu0 0.0
    %3010 = vmatpush1.msra.mxu0 %v2991
    %3011 = vmatprep.subr.mxu0 0.0
    %3012 = vmatpush1.msra.mxu0 %v2992
    %3013 = vmatprep.subr.mxu0 0.0
    %3014 = vmatpush1.msra.mxu0 %v2993
    %3015 = vmatprep.subr.mxu0 0.0
    %3016 = vmatpush1.msra.mxu0 0.0
    %3017 = vmatprep.subr.mxu0 0.0
    %3018 = vmatpush1.msra.mxu0 0.0
    %3019 = vmatprep.subr.mxu0 0.0
    %3020 = vmatpush1.msra.mxu0 0.0
    %3021 = vmatprep.subr.mxu0 0.0
    %3022 = vmatpush1.msra.mxu0 0.0
    %3023 = vmatprep.subr.mxu0 0.0
    %3024 = vmatpush1.msra.mxu0 0.0
    %3025 = vmatprep.subr.mxu0 0.0
    %3026 = vmatpush1.msra.mxu0 0.0
    %3027 = vmatprep.subr.mxu0 0.0
    %3028 = vmatpush1.msra.mxu0 0.0
    %3029 = vmatprep.subr.mxu0 0.0
    %3030 = vmatpush1.msra.mxu0 0.0
    %3031 = vmatprep.subr.mxu0 0.0
    %3032 = vmatpush1.msra.mxu0 0.0
    %3033 = vmatprep.subr.mxu0 0.0
    %3034 = vmatpush1.msra.mxu0 0.0
    %3035 = vmatprep.subr.mxu0 0.0
    %3036 = vmatpush1.msra.mxu0 0.0
    %3037 = vmatprep.subr.mxu0 0.0
    %3038 = vmatpush1.msra.mxu0 0.0
    %3039 = vmatprep.subr.mxu0 0.0
    %3040 = vmatpush1.msra.mxu0 0.0
    %3041 = vmatprep.subr.mxu0 0.0
    %3042 = vmatpush1.msra.mxu0 0.0
    %3043 = vmatprep.subr.mxu0 0.0
    %3044 = vmatpush1.msra.mxu0 0.0
    %3045 = vmatprep.subr.mxu0 0.0
    %3046 = vmatpush1.msra.mxu0 0.0
    %3047 = vmatprep.subr.mxu0 0.0
    %3048 = vmatpush1.msra.mxu0 0.0
    %3049 = vmatprep.subr.mxu0 0.0
    %3050 = vmatpush1.msra.mxu0 0.0
    %3051 = vmatprep.subr.mxu0 0.0
    %3052 = vmatpush1.msra.mxu0 0.0
    %3053 = vmatprep.subr.mxu0 0.0
    %3054 = vmatpush1.msra.mxu0 0.0
    %3055 = vmatprep.subr.mxu0 0.0
    %3056 = vmatpush1.msra.mxu0 0.0
    %3057 = vmatprep.subr.mxu0 0.0
    %3058 = vmatpush1.msra.mxu0 0.0
    %3059 = vmatprep.subr.mxu0 0.0
    %3060 = vmatpush1.msra.mxu0 0.0
    %3061 = vmatprep.subr.mxu0 0.0
    %3062 = vmatpush1.msra.mxu0 0.0
    %3063 = vmatprep.subr.mxu0 0.0
    %3064 = vmatpush1.msra.mxu0 0.0
    %3065 = vmatprep.subr.mxu0 0.0
    %3066 = vmatpush1.msra.mxu0 0.0
    %3067 = vmatprep.subr.mxu0 0.0
    %3068 = vmatpush1.msra.mxu0 0.0
    %3069 = vmatprep.subr.mxu0 0.0
    %3070 = vmatpush1.msra.mxu0 0.0
    %3071 = vmatprep.mubr.f32.mxu0 0.0
    %3072 = vmatmul.mubr.f32.gmra.mrb[0].mxu0 %v3002
    %v3073 = vpop.f32.mrb[0].mxu0
    %v3074 = vadd.f32 %v2999, %v3073
    %v3075 = vpop.f32.mrb[0].mxu0
    %3076 = vmatprep.mubr.f32.mxu0 0.0
    %3077 = vmatmul.mubr.f32.gmra.mrb[0].mxu0 %v3005
    %v3078 = vpop.f32.mrb[0].mxu0
    %v3079 = vadd.f32 %v2999, %v3078
    %v3080 = vpop.f32.mrb[0].mxu0
    %3081 = vdwg.mxu0
    %vm3082 = vcmask 7168
    %3083 = vst.msk [vmem:[%s20] sm:$0xff] %vm3082, %v3074
    %3084 = vst.msk [vmem:[%s20 + $0x8] sm:$0xff] %vm3082, %v3079
    // Predicated region
    $region122: #{edge_property_prediction_model1.1} parent=1 // pred_check
      _
    $region123: #{edge_property_prediction_model1.1} parent=1 // pred_check_branch
      %3086 = sbr.rel (0) target = $region125
    $region124: #{edge_property_prediction_model1.1} parent=1 // pred_region
      _
    $region125: #{edge_property_prediction_model1.1} parent=1 // pred_fallthru
      _
    // Predicated region
    $region126: #{edge_property_prediction_model1.1} parent=1 // pred_check
      _
    $region127: #{edge_property_prediction_model1.1} parent=1 // pred_check_branch
      %3088 = sbr.rel (0) target = $region129
    $region128: #{edge_property_prediction_model1.1} parent=1 // pred_region
      _
    $region129: #{edge_property_prediction_model1.1} parent=1 // pred_fallthru
      _
    %3089 = vsyncpa [#allocation4], 1
    %3090 = vsyncpa [#allocation6], 1
    %3091 = vsyncpa [#allocation9], 1
    %3092 = vsyncpa [#allocation12], 1
    %3093 = vsyncpa [#allocation15], 1
    %3094 = vsyncpa [#allocation18], 1

</llo_original>
